<compile_context>
chip_gen: v6e
topology: v6e:2x2x1
jax: 0.10.0
libtpu: 0.0.40
codegen_flags: <defaults>
</compile_context>

<pallas_src>
import functools

import jax
import jax.numpy as jnp
import numpy as np
from jax.experimental import pallas as pl
from jax.experimental.pallas import tpu as pltpu

EPS = 1e-5


# ------------------------- in-kernel helper functions ------------------------
# All helpers operate on VALUES (not refs) laid out as (H, W*C): H on sublanes,
# the flattened (W, C) row on the 128-lane axis.

def _expand_c(v, W):
    """(1, C) -> (1, W*C): tile per-channel values across the W groups."""
    return jnp.concatenate([v] * W, axis=1)


def _sum_w(v, W, C):
    """(1, W*C) -> (1, C): sum over the W channel groups."""
    out = v[:, 0:C]
    for w in range(1, W):
        out = out + v[:, w * C:(w + 1) * C]
    return out


def _zero_pad1(x, H, W, C):
    """Zero-pad 1 pixel each spatial side: (H, W*C) -> (H+2, (W+2)*C)."""
    zc = jnp.zeros((H, C), x.dtype)
    x = jnp.concatenate([zc, x, zc], axis=1)
    zr = jnp.zeros((1, (W + 2) * C), x.dtype)
    return jnp.concatenate([zr, x, zr], axis=0)


def _refl_pad1(x, H, W, C):
    """Reflection-pad 1 pixel each spatial side: (H, W*C) -> (H+2, (W+2)*C)."""
    x = jnp.concatenate([x[:, C:2 * C], x, x[:, (W - 2) * C:(W - 1) * C]], axis=1)
    return jnp.concatenate([x[1:2, :], x, x[H - 2:H - 1, :]], axis=0)


def _conv_s1(xp, KH, Ho, m):
    """Stride-1 conv: xp (Hp, Wp*Cin), lowered weights m (KH*Wp*Cin, Wo*Cout).

    band[i] = concat_kh xp[i + kh]  ->  out = band @ m   (single MXU matmul).
    """
    band = jnp.concatenate([xp[kh:kh + Ho, :] for kh in range(KH)], axis=1)
    return jnp.dot(band, m, preferred_element_type=jnp.float32)


def _conv_s2(xp, Hp, Ho, m):
    """Stride-2 3x3 conv. Row subsampling (rows 2i+kh) is done with small 0/1
    selection matmuls instead of strided slicing (which Pallas rejected)."""
    i_idx = jax.lax.broadcasted_iota(jnp.int32, (Ho, Hp), 0)
    r_idx = jax.lax.broadcasted_iota(jnp.int32, (Ho, Hp), 1)
    parts = []
    for kh in range(3):
        sel = (r_idx == 2 * i_idx + kh).astype(xp.dtype)          # (Ho, Hp)
        parts.append(jnp.dot(sel, xp, preferred_element_type=jnp.float32))
    band = jnp.concatenate(parts, axis=1)                          # (Ho, 3*Wp*Cin)
    return jnp.dot(band, m, preferred_element_type=jnp.float32)


def _instance_norm(y, H, W, C):
    """InstanceNorm2d (biased variance, no affine) on one (H, W*C) sample."""
    n = float(H * W)
    m_c = _sum_w(jnp.sum(y, axis=0, keepdims=True), W, C) / n      # (1, C)
    yc = y - _expand_c(m_c, W)
    v_c = _sum_w(jnp.sum(yc * yc, axis=0, keepdims=True), W, C) / n
    return yc * _expand_c(jax.lax.rsqrt(v_c + EPS), W)


def _iln_relu(y, H, W, C, prm):
    """ILN (unbiased variance, affine) + ReLU.  prm rows = (rho, gamma, beta)."""
    n = float(H * W)
    m_c = _sum_w(jnp.sum(y, axis=0, keepdims=True), W, C) / n
    yc = y - _expand_c(m_c, W)
    v_c = _sum_w(jnp.sum(yc * yc, axis=0, keepdims=True), W, C) / (n - 1.0)
    out_in = yc * _expand_c(jax.lax.rsqrt(v_c + EPS), W)
    nc = float(H * W * C)
    lm = jnp.sum(y, keepdims=True) / nc                            # (1, 1)
    ylc = y - lm
    lv = jnp.sum(ylc * ylc, keepdims=True) / (nc - 1.0)
    out_ln = ylc * jax.lax.rsqrt(lv + EPS)
    rho = _expand_c(prm[0:1, :], W)
    gamma = _expand_c(prm[1:2, :], W)
    beta = _expand_c(prm[2:3, :], W)
    out = (rho * out_in + (1.0 - rho) * out_ln) * gamma + beta
    return jnp.maximum(out, 0.0)


# --------------------------------- the kernel --------------------------------

def _gen_encoder_kernel(*refs, n_block, hw, H, W):
    xp_ref, m_stem_ref, m_d0_ref, iln0_ref, m_d1_ref, iln1_ref = refs[:6]
    res_refs = refs[6:6 + 2 * n_block]
    o_ref = refs[6 + 2 * n_block]

    # stem: ReflectionPad2d(3) (done in wrapper) + Conv 7x7 stride 1, no norm/act
    xp = xp_ref[0].astype(jnp.float32)                     # (H+6, (W+6)*3)
    h = _conv_s1(xp, 7, H, m_stem_ref[...])                # (H, W*hw)

    # downsample block 0: zero-pad 1, Conv3x3 s2, ILN, ReLU
    c = hw
    h = _conv_s2(_zero_pad1(h, H, W, c), H + 2, H // 2, m_d0_ref[...])
    h = _iln_relu(h, H // 2, W // 2, 2 * c, iln0_ref[...])  # (H/2, (W/2)*2c)

    # downsample block 1
    c *= 2
    H1, W1 = H // 2, W // 2
    h = _conv_s2(_zero_pad1(h, H1, W1, c), H1 + 2, H1 // 2, m_d1_ref[...])
    h = _iln_relu(h, H1 // 2, W1 // 2, 2 * c, iln1_ref[...])  # (H/4, (W/4)*4c)

    # residual blocks
    c *= 2
    H2, W2 = H // 4, W // 4
    for j in range(n_block):
        m1 = res_refs[2 * j][...]
        m2 = res_refs[2 * j + 1][...]
        y = _conv_s1(_refl_pad1(h, H2, W2, c), 3, H2, m1)
        y = jnp.maximum(_instance_norm(y, H2, W2, c), 0.0)
        y = _conv_s1(_refl_pad1(y, H2, W2, c), 3, H2, m2)
        h = h + _instance_norm(y, H2, W2, c)

    o_ref[0] = h.astype(o_ref.dtype)                        # (H/4, (W/4)*4hw) = lane width 128


# ------------------------ host-side weight lowering ---------------------------

def lower_conv_weight(w, Wp, stride):
    """Lower HWIO conv weights to M (KH*Wp*Cin, Wo*Cout) so that, per output row,
    out_row = band_row @ M with band_row = concat_kh xpad[stride*i + kh, :] and
    each padded row flattened row-major as (w, c)."""
    KH, KW, Cin, Cout = w.shape
    Wo = (Wp - KW) // stride + 1
    wp = np.arange(Wp)[:, None]
    wo = np.arange(Wo)[None, :]
    kw = wp - stride * wo                                   # (Wp, Wo)
    valid = ((kw >= 0) & (kw < KW)).astype(np.float32)
    kw_c = np.clip(kw, 0, KW - 1)
    m = w[:, kw_c]                                          # (KH, Wp, Wo, Cin, Cout)
    m = m * jnp.asarray(valid)[None, :, :, None, None]
    m = jnp.transpose(m, (0, 1, 3, 2, 4))                   # (KH, Wp, Cin, Wo, Cout)
    return m.reshape(KH * Wp * Cin, Wo * Cout)


def lower_params(params, hw, n_block, H, W):
    low = {"m_stem": lower_conv_weight(params["w_stem"], W + 6, 1)}
    c, wc = hw, W
    for i in range(2):
        low[f"m_down{i}"] = lower_conv_weight(params[f"w_down{i}"], wc + 2, 2)
        c, wc = 2 * c, wc // 2
        low[f"iln{i}"] = jnp.stack([params[f"iln{i}_rho"],
                                    params[f"iln{i}_gamma"],
                                    params[f"iln{i}_beta"]]).astype(jnp.float32)
    for j in range(n_block):
        low[f"m_res{j}_1"] = lower_conv_weight(params[f"res{j}_w1"], wc + 2, 1)
        low[f"m_res{j}_2"] = lower_conv_weight(params[f"res{j}_w2"], wc + 2, 1)
    return low


# ------------------------------ forward wrapper --------------------------------

def gen_encoder_pallas(x_nchw, lowered, *, n_block, hw):
    N, Cin, H, W = x_nchw.shape
    x = jnp.transpose(x_nchw, (0, 2, 3, 1))                               # NCHW -> NHWC
    xp = jnp.pad(x, ((0, 0), (3, 3), (3, 3), (0, 0)), mode="reflect")     # stem reflect pad
    xp = xp.reshape(N, H + 6, (W + 6) * Cin)                              # lane-flattened rows

    weights = [lowered["m_stem"], lowered["m_down0"], lowered["iln0"],
               lowered["m_down1"], lowered["iln1"]]
    for j in range(n_block):
        weights += [lowered[f"m_res{j}_1"], lowered[f"m_res{j}_2"]]

    Ho, Wo, Co = H // 4, W // 4, 4 * hw
    kernel = functools.partial(_gen_encoder_kernel, n_block=n_block, hw=hw, H=H, W=W)

    in_specs = [pl.BlockSpec((1, H + 6, (W + 6) * Cin), lambda n: (n, 0, 0))]
    in_specs += [pl.BlockSpec(wgt.shape, lambda n: (0, 0)) for wgt in weights]

    out = pl.pallas_call(
        kernel,
        out_shape=jax.ShapeDtypeStruct((N, Ho, Wo * Co), jnp.float32),
        grid=(N,),
        in_specs=in_specs,
        out_specs=pl.BlockSpec((1, Ho, Wo * Co), lambda n: (n, 0, 0)),
        compiler_params=pltpu.CompilerParams(dimension_semantics=("parallel",)),
    )(xp, *weights)

    out = out.reshape(N, Ho, Wo, Co)
    return jnp.transpose(out, (0, 3, 1, 2))                               # NHWC -> NCHW


# ----------------------------- pure-JAX reference ------------------------------

def _reflect_pad_nhwc(x, p):
    return jnp.pad(x, ((0, 0), (p, p), (p, p), (0, 0)), mode="reflect")


def _zero_pad_nhwc(x, p):
    return jnp.pad(x, ((0, 0), (p, p), (p, p), (0, 0)))


def _conv_ref(x, w, stride):
    return jax.lax.conv_general_dilated(
        x, w, (stride, stride), "VALID",
        dimension_numbers=("NHWC", "HWIO", "NHWC"),
        precision=jax.lax.Precision.HIGHEST)


def gen_encoder_ref(x_nchw, params, n_block):
    x = jnp.transpose(x_nchw, (0, 2, 3, 1))
    h = _conv_ref(_reflect_pad_nhwc(x, 3), params["w_stem"], 1)
    for i in range(2):
        h = _conv_ref(_zero_pad_nhwc(h, 1), params[f"w_down{i}"], 2)
        in_mean = h.mean(axis=(1, 2), keepdims=True)
        in_var = h.var(axis=(1, 2), keepdims=True, ddof=1)
        out_in = (h - in_mean) / jnp.sqrt(in_var + EPS)
        ln_mean = h.mean(axis=(1, 2, 3), keepdims=True)
        ln_var = h.var(axis=(1, 2, 3), keepdims=True, ddof=1)
        out_ln = (h - ln_mean) / jnp.sqrt(ln_var + EPS)
        rho = params[f"iln{i}_rho"].reshape(1, 1, 1, -1)
        gamma = params[f"iln{i}_gamma"].reshape(1, 1, 1, -1)
        beta = params[f"iln{i}_beta"].reshape(1, 1, 1, -1)
        h = jnp.maximum((rho * out_in + (1.0 - rho) * out_ln) * gamma + beta, 0.0)

    def inorm(t):
        m = t.mean(axis=(1, 2), keepdims=True)
        v = t.var(axis=(1, 2), keepdims=True)     # biased
        return (t - m) / jnp.sqrt(v + EPS)

    for j in range(n_block):
        res = h
        y = _conv_ref(_reflect_pad_nhwc(h, 1), params[f"res{j}_w1"], 1)
        y = jnp.maximum(inorm(y), 0.0)
        y = _conv_ref(_reflect_pad_nhwc(y, 1), params[f"res{j}_w2"], 1)
        h = res + inorm(y)
    return jnp.transpose(h, (0, 3, 1, 2))


# --------------------------------- parameters ----------------------------------

def init_params(key, hw, n_block):
    keys = iter(jax.random.split(key, 16 + 4 * n_block))
    p = {}
    p["w_stem"] = 0.05 * jax.random.normal(next(keys), (7, 7, 3, hw), jnp.float32)
    c = hw
    for i in range(2):
        p[f"w_down{i}"] = 0.05 * jax.random.normal(next(keys), (3, 3, c, 2 * c), jnp.float32)
        c *= 2
        p[f"iln{i}_rho"] = jax.random.uniform(next(keys), (c,), jnp.float32, 0.1, 0.9)
        p[f"iln{i}_gamma"] = 1.0 + 0.1 * jax.random.normal(next(keys), (c,), jnp.float32)
        p[f"iln{i}_beta"] = 0.1 * jax.random.normal(next(keys), (c,), jnp.float32)
    for j in range(n_block):
        p[f"res{j}_w1"] = 0.05 * jax.random.normal(next(keys), (3, 3, c, c), jnp.float32)
        p[f"res{j}_w2"] = 0.05 * jax.random.normal(next(keys), (3, 3, c, c), jnp.float32)
    return p


# ------------------------------------ main --------------------------------------

if __name__ == "__main__":
    hw, n_block = 8, 2
    key = jax.random.PRNGKey(0)
    x = jax.random.normal(jax.random.fold_in(key, 99), (2, 3, 16, 16), jnp.float32)  # NCHW
    params = init_params(key, hw, n_block)

    # One-time host-side lowering of conv weights to dense per-row-band matrices.
    lowered = lower_params(params, hw, n_block, 16, 16)

    fwd = jax.jit(functools.partial(gen_encoder_pallas, n_block=n_block, hw=hw))
    out = jax.block_until_ready(fwd(x, lowered))
    ref = jax.block_until_ready(gen_encoder_ref(x, params, n_block))

    assert out.shape == (2, 4 * hw, 4, 4), out.shape
    np.testing.assert_allclose(np.asarray(out), np.asarray(ref), rtol=1e-2, atol=1e-2)
    print("KERNEL_OK")
</pallas_src>

<mosaic_0001>
module attributes {stable_mosaic.version = 11 : i64} {
  func.func @_gen_encoder_kernel(%arg0: i32, %arg1: memref<1x22x66xf32, #tpu.memory_space<vmem>>, %arg2: memref<462x128xf32, #tpu.memory_space<vmem>>, %arg3: memref<432x128xf32, #tpu.memory_space<vmem>>, %arg4: memref<3x16xf32, #tpu.memory_space<vmem>>, %arg5: memref<480x128xf32, #tpu.memory_space<vmem>>, %arg6: memref<3x32xf32, #tpu.memory_space<vmem>>, %arg7: memref<576x128xf32, #tpu.memory_space<vmem>>, %arg8: memref<576x128xf32, #tpu.memory_space<vmem>>, %arg9: memref<576x128xf32, #tpu.memory_space<vmem>>, %arg10: memref<576x128xf32, #tpu.memory_space<vmem>>, %arg11: memref<1x4x128xf32, #tpu.memory_space<vmem>>) attributes {dimension_semantics = [#tpu.dimension_semantics<parallel>], iteration_bounds = array<i64: 2>, scalar_prefetch = 0 : i64, scratch_operands = 0 : i64, tpu.core_type = #tpu.core_type<tc>, window_params = [{transform_indices = @transform_0, window_bounds = array<i64: 1, 22, 66>}, {pipeline_mode = #tpu.pipeline_mode<synchronous>, transform_indices = @transform_1, window_bounds = array<i64: 462, 128>}, {pipeline_mode = #tpu.pipeline_mode<synchronous>, transform_indices = @transform_2, window_bounds = array<i64: 432, 128>}, {pipeline_mode = #tpu.pipeline_mode<synchronous>, transform_indices = @transform_3, window_bounds = array<i64: 3, 16>}, {pipeline_mode = #tpu.pipeline_mode<synchronous>, transform_indices = @transform_4, window_bounds = array<i64: 480, 128>}, {pipeline_mode = #tpu.pipeline_mode<synchronous>, transform_indices = @transform_5, window_bounds = array<i64: 3, 32>}, {pipeline_mode = #tpu.pipeline_mode<synchronous>, transform_indices = @transform_6, window_bounds = array<i64: 576, 128>}, {pipeline_mode = #tpu.pipeline_mode<synchronous>, transform_indices = @transform_7, window_bounds = array<i64: 576, 128>}, {pipeline_mode = #tpu.pipeline_mode<synchronous>, transform_indices = @transform_8, window_bounds = array<i64: 576, 128>}, {pipeline_mode = #tpu.pipeline_mode<synchronous>, transform_indices = @transform_9, window_bounds = array<i64: 576, 128>}, {transform_indices = @transform_10, window_bounds = array<i64: 1, 4, 128>}]} {
    %c0 = arith.constant 0 : index
    %c0_0 = arith.constant 0 : index
    %c0_1 = arith.constant 0 : index
    %0 = vector.load %arg1[%c0, %c0_0, %c0_1] : memref<1x22x66xf32, #tpu.memory_space<vmem>>, vector<1x22x66xf32>
    %1 = vector.shape_cast %0 : vector<1x22x66xf32> to vector<22x66xf32>
    %c0_2 = arith.constant 0 : index
    %c0_3 = arith.constant 0 : index
    %2 = vector.load %arg2[%c0_2, %c0_3] : memref<462x128xf32, #tpu.memory_space<vmem>>, vector<462x128xf32>
    %3 = vector.extract_strided_slice %1 {offsets = [0, 0], sizes = [16, 66], strides = [1, 1]} : vector<22x66xf32> to vector<16x66xf32>
    %4 = vector.extract_strided_slice %1 {offsets = [1, 0], sizes = [16, 66], strides = [1, 1]} : vector<22x66xf32> to vector<16x66xf32>
    %5 = vector.extract_strided_slice %1 {offsets = [2, 0], sizes = [16, 66], strides = [1, 1]} : vector<22x66xf32> to vector<16x66xf32>
    %6 = vector.extract_strided_slice %1 {offsets = [3, 0], sizes = [16, 66], strides = [1, 1]} : vector<22x66xf32> to vector<16x66xf32>
    %7 = vector.extract_strided_slice %1 {offsets = [4, 0], sizes = [16, 66], strides = [1, 1]} : vector<22x66xf32> to vector<16x66xf32>
    %8 = vector.extract_strided_slice %1 {offsets = [5, 0], sizes = [16, 66], strides = [1, 1]} : vector<22x66xf32> to vector<16x66xf32>
    %9 = vector.extract_strided_slice %1 {offsets = [6, 0], sizes = [16, 66], strides = [1, 1]} : vector<22x66xf32> to vector<16x66xf32>
    %10 = tpu.concatenate %3, %4, %5, %6, %7, %8, %9 in 1 : vector<16x66xf32>, vector<16x66xf32>, vector<16x66xf32>, vector<16x66xf32>, vector<16x66xf32>, vector<16x66xf32>, vector<16x66xf32> -> vector<16x462xf32>
    %cst = arith.constant dense<0.000000e+00> : vector<16x128xf32>
    %11 = tpu.matmul %10, %2, %cst {dimension_numbers = #tpu.dot_dimension_numbers<[1], [0], [0], [1], [0, 0, 1, 1], [], []>} : vector<16x462xf32>, vector<462x128xf32>, vector<16x128xf32> -> vector<16x128xf32>
    %cst_4 = arith.constant 0.000000e+00 : f32
    %12 = vector.broadcast %cst_4 : f32 to vector<16x8xf32>
    %13 = tpu.concatenate %12, %11, %12 in 1 : vector<16x8xf32>, vector<16x128xf32>, vector<16x8xf32> -> vector<16x144xf32>
    %cst_5 = arith.constant 0.000000e+00 : f32
    %14 = vector.broadcast %cst_5 : f32 to vector<1x144xf32>
    %15 = tpu.concatenate %14, %13, %14 in 0 : vector<1x144xf32>, vector<16x144xf32>, vector<1x144xf32> -> vector<18x144xf32>
    %c0_6 = arith.constant 0 : index
    %c0_7 = arith.constant 0 : index
    %16 = vector.load %arg3[%c0_6, %c0_7] : memref<432x128xf32, #tpu.memory_space<vmem>>, vector<432x128xf32>
    %17 = tpu.iota {dimensions = array<i32: 0>} : vector<8x18xi32>
    %18 = tpu.iota {dimensions = array<i32: 1>} : vector<8x18xi32>
    %c2_i32 = arith.constant 2 : i32
    %19 = vector.broadcast %c2_i32 : i32 to vector<8x18xi32>
    %20 = arith.muli %19, %17 : vector<8x18xi32>
    %c0_i32 = arith.constant 0 : i32
    %21 = vector.broadcast %c0_i32 : i32 to vector<8x18xi32>
    %22 = arith.addi %20, %21 : vector<8x18xi32>
    %23 = arith.cmpi eq, %18, %22 : vector<8x18xi32>
    %24 = arith.extui %23 : vector<8x18xi1> to vector<8x18xi32>
    %25 = arith.sitofp %24 : vector<8x18xi32> to vector<8x18xf32>
    %cst_8 = arith.constant dense<0.000000e+00> : vector<8x144xf32>
    %26 = tpu.matmul %25, %15, %cst_8 {dimension_numbers = #tpu.dot_dimension_numbers<[1], [0], [0], [1], [0, 0, 1, 1], [], []>} : vector<8x18xf32>, vector<18x144xf32>, vector<8x144xf32> -> vector<8x144xf32>
    %c2_i32_9 = arith.constant 2 : i32
    %27 = vector.broadcast %c2_i32_9 : i32 to vector<8x18xi32>
    %28 = arith.muli %27, %17 : vector<8x18xi32>
    %c1_i32 = arith.constant 1 : i32
    %29 = vector.broadcast %c1_i32 : i32 to vector<8x18xi32>
    %30 = arith.addi %28, %29 : vector<8x18xi32>
    %31 = arith.cmpi eq, %18, %30 : vector<8x18xi32>
    %32 = arith.extui %31 : vector<8x18xi1> to vector<8x18xi32>
    %33 = arith.sitofp %32 : vector<8x18xi32> to vector<8x18xf32>
    %cst_10 = arith.constant dense<0.000000e+00> : vector<8x144xf32>
    %34 = tpu.matmul %33, %15, %cst_10 {dimension_numbers = #tpu.dot_dimension_numbers<[1], [0], [0], [1], [0, 0, 1, 1], [], []>} : vector<8x18xf32>, vector<18x144xf32>, vector<8x144xf32> -> vector<8x144xf32>
    %c2_i32_11 = arith.constant 2 : i32
    %35 = vector.broadcast %c2_i32_11 : i32 to vector<8x18xi32>
    %36 = arith.muli %35, %17 : vector<8x18xi32>
    %c2_i32_12 = arith.constant 2 : i32
    %37 = vector.broadcast %c2_i32_12 : i32 to vector<8x18xi32>
    %38 = arith.addi %36, %37 : vector<8x18xi32>
    %39 = arith.cmpi eq, %18, %38 : vector<8x18xi32>
    %40 = arith.extui %39 : vector<8x18xi1> to vector<8x18xi32>
    %41 = arith.sitofp %40 : vector<8x18xi32> to vector<8x18xf32>
    %cst_13 = arith.constant dense<0.000000e+00> : vector<8x144xf32>
    %42 = tpu.matmul %41, %15, %cst_13 {dimension_numbers = #tpu.dot_dimension_numbers<[1], [0], [0], [1], [0, 0, 1, 1], [], []>} : vector<8x18xf32>, vector<18x144xf32>, vector<8x144xf32> -> vector<8x144xf32>
    %43 = tpu.concatenate %26, %34, %42 in 1 : vector<8x144xf32>, vector<8x144xf32>, vector<8x144xf32> -> vector<8x432xf32>
    %cst_14 = arith.constant dense<0.000000e+00> : vector<8x128xf32>
    %44 = tpu.matmul %43, %16, %cst_14 {dimension_numbers = #tpu.dot_dimension_numbers<[1], [0], [0], [1], [0, 0, 1, 1], [], []>} : vector<8x432xf32>, vector<432x128xf32>, vector<8x128xf32> -> vector<8x128xf32>
    %c0_15 = arith.constant 0 : index
    %c0_16 = arith.constant 0 : index
    %45 = vector.load %arg4[%c0_15, %c0_16] : memref<3x16xf32, #tpu.memory_space<vmem>>, vector<3x16xf32>
    %cst_17 = arith.constant dense<0.000000e+00> : vector<128xf32>
    %46 = vector.multi_reduction <add>, %44, %cst_17 [0] : vector<8x128xf32> to vector<128xf32>
    %47 = vector.shape_cast %46 : vector<128xf32> to vector<1x128xf32>
    %48 = vector.extract_strided_slice %47 {offsets = [0, 0], sizes = [1, 16], strides = [1, 1]} : vector<1x128xf32> to vector<1x16xf32>
    %49 = vector.extract_strided_slice %47 {offsets = [0, 16], sizes = [1, 16], strides = [1, 1]} : vector<1x128xf32> to vector<1x16xf32>
    %50 = arith.addf %48, %49 : vector<1x16xf32>
    %51 = vector.extract_strided_slice %47 {offsets = [0, 32], sizes = [1, 16], strides = [1, 1]} : vector<1x128xf32> to vector<1x16xf32>
    %52 = arith.addf %50, %51 : vector<1x16xf32>
    %53 = vector.extract_strided_slice %47 {offsets = [0, 48], sizes = [1, 16], strides = [1, 1]} : vector<1x128xf32> to vector<1x16xf32>
    %54 = arith.addf %52, %53 : vector<1x16xf32>
    %55 = vector.extract_strided_slice %47 {offsets = [0, 64], sizes = [1, 16], strides = [1, 1]} : vector<1x128xf32> to vector<1x16xf32>
    %56 = arith.addf %54, %55 : vector<1x16xf32>
    %57 = vector.extract_strided_slice %47 {offsets = [0, 80], sizes = [1, 16], strides = [1, 1]} : vector<1x128xf32> to vector<1x16xf32>
    %58 = arith.addf %56, %57 : vector<1x16xf32>
    %59 = vector.extract_strided_slice %47 {offsets = [0, 96], sizes = [1, 16], strides = [1, 1]} : vector<1x128xf32> to vector<1x16xf32>
    %60 = arith.addf %58, %59 : vector<1x16xf32>
    %61 = vector.extract_strided_slice %47 {offsets = [0, 112], sizes = [1, 16], strides = [1, 1]} : vector<1x128xf32> to vector<1x16xf32>
    %62 = arith.addf %60, %61 : vector<1x16xf32>
    %cst_18 = arith.constant 6.400000e+01 : f32
    %63 = vector.broadcast %cst_18 : f32 to vector<1x16xf32>
    %64 = arith.divf %62, %63 : vector<1x16xf32>
    %65 = tpu.concatenate %64, %64, %64, %64, %64, %64, %64, %64 in 1 : vector<1x16xf32>, vector<1x16xf32>, vector<1x16xf32>, vector<1x16xf32>, vector<1x16xf32>, vector<1x16xf32>, vector<1x16xf32>, vector<1x16xf32> -> vector<1x128xf32>
    %66 = vector.broadcast %65 : vector<1x128xf32> to vector<8x128xf32>
    %67 = arith.subf %44, %66 : vector<8x128xf32>
    %68 = arith.mulf %67, %67 : vector<8x128xf32>
    %cst_19 = arith.constant dense<0.000000e+00> : vector<128xf32>
    %69 = vector.multi_reduction <add>, %68, %cst_19 [0] : vector<8x128xf32> to vector<128xf32>
    %70 = vector.shape_cast %69 : vector<128xf32> to vector<1x128xf32>
    %71 = vector.extract_strided_slice %70 {offsets = [0, 0], sizes = [1, 16], strides = [1, 1]} : vector<1x128xf32> to vector<1x16xf32>
    %72 = vector.extract_strided_slice %70 {offsets = [0, 16], sizes = [1, 16], strides = [1, 1]} : vector<1x128xf32> to vector<1x16xf32>
    %73 = arith.addf %71, %72 : vector<1x16xf32>
    %74 = vector.extract_strided_slice %70 {offsets = [0, 32], sizes = [1, 16], strides = [1, 1]} : vector<1x128xf32> to vector<1x16xf32>
    %75 = arith.addf %73, %74 : vector<1x16xf32>
    %76 = vector.extract_strided_slice %70 {offsets = [0, 48], sizes = [1, 16], strides = [1, 1]} : vector<1x128xf32> to vector<1x16xf32>
    %77 = arith.addf %75, %76 : vector<1x16xf32>
    %78 = vector.extract_strided_slice %70 {offsets = [0, 64], sizes = [1, 16], strides = [1, 1]} : vector<1x128xf32> to vector<1x16xf32>
    %79 = arith.addf %77, %78 : vector<1x16xf32>
    %80 = vector.extract_strided_slice %70 {offsets = [0, 80], sizes = [1, 16], strides = [1, 1]} : vector<1x128xf32> to vector<1x16xf32>
    %81 = arith.addf %79, %80 : vector<1x16xf32>
    %82 = vector.extract_strided_slice %70 {offsets = [0, 96], sizes = [1, 16], strides = [1, 1]} : vector<1x128xf32> to vector<1x16xf32>
    %83 = arith.addf %81, %82 : vector<1x16xf32>
    %84 = vector.extract_strided_slice %70 {offsets = [0, 112], sizes = [1, 16], strides = [1, 1]} : vector<1x128xf32> to vector<1x16xf32>
    %85 = arith.addf %83, %84 : vector<1x16xf32>
    %cst_20 = arith.constant 6.300000e+01 : f32
    %86 = vector.broadcast %cst_20 : f32 to vector<1x16xf32>
    %87 = arith.divf %85, %86 : vector<1x16xf32>
    %cst_21 = arith.constant 9.99999974E-6 : f32
    %88 = vector.broadcast %cst_21 : f32 to vector<1x16xf32>
    %89 = arith.addf %87, %88 : vector<1x16xf32>
    %90 = math.rsqrt %89 : vector<1x16xf32>
    %91 = tpu.concatenate %90, %90, %90, %90, %90, %90, %90, %90 in 1 : vector<1x16xf32>, vector<1x16xf32>, vector<1x16xf32>, vector<1x16xf32>, vector<1x16xf32>, vector<1x16xf32>, vector<1x16xf32>, vector<1x16xf32> -> vector<1x128xf32>
    %92 = vector.broadcast %91 : vector<1x128xf32> to vector<8x128xf32>
    %93 = arith.mulf %67, %92 : vector<8x128xf32>
    %94 = vector.shape_cast %44 : vector<8x128xf32> to vector<1x8x128xf32>
    %cst_22 = arith.constant dense<0.000000e+00> : vector<1xf32>
    %95 = vector.multi_reduction <add>, %94, %cst_22 [1, 2] : vector<1x8x128xf32> to vector<1xf32>
    %96 = vector.shape_cast %95 : vector<1xf32> to vector<1x1x1xf32>
    %97 = vector.extract %96[0, 0, 0] : f32 from vector<1x1x1xf32>
    %98 = vector.broadcast %97 : f32 to vector<1x1xf32>
    %cst_23 = arith.constant 1.024000e+03 : f32
    %99 = vector.broadcast %cst_23 : f32 to vector<1x1xf32>
    %100 = arith.divf %98, %99 : vector<1x1xf32>
    %101 = vector.broadcast %100 : vector<1x1xf32> to vector<8x128xf32>
    %102 = arith.subf %44, %101 : vector<8x128xf32>
    %103 = arith.mulf %102, %102 : vector<8x128xf32>
    %104 = vector.shape_cast %103 : vector<8x128xf32> to vector<1x8x128xf32>
    %cst_24 = arith.constant dense<0.000000e+00> : vector<1xf32>
    %105 = vector.multi_reduction <add>, %104, %cst_24 [1, 2] : vector<1x8x128xf32> to vector<1xf32>
    %106 = vector.shape_cast %105 : vector<1xf32> to vector<1x1x1xf32>
    %107 = vector.extract %106[0, 0, 0] : f32 from vector<1x1x1xf32>
    %108 = vector.broadcast %107 : f32 to vector<1x1xf32>
    %cst_25 = arith.constant 1.023000e+03 : f32
    %109 = vector.broadcast %cst_25 : f32 to vector<1x1xf32>
    %110 = arith.divf %108, %109 : vector<1x1xf32>
    %cst_26 = arith.constant 9.99999974E-6 : f32
    %111 = vector.broadcast %cst_26 : f32 to vector<1x1xf32>
    %112 = arith.addf %110, %111 : vector<1x1xf32>
    %113 = math.rsqrt %112 : vector<1x1xf32>
    %114 = vector.broadcast %113 : vector<1x1xf32> to vector<8x128xf32>
    %115 = arith.mulf %102, %114 : vector<8x128xf32>
    %116 = vector.extract_strided_slice %45 {offsets = [0, 0], sizes = [1, 16], strides = [1, 1]} : vector<3x16xf32> to vector<1x16xf32>
    %117 = tpu.concatenate %116, %116, %116, %116, %116, %116, %116, %116 in 1 : vector<1x16xf32>, vector<1x16xf32>, vector<1x16xf32>, vector<1x16xf32>, vector<1x16xf32>, vector<1x16xf32>, vector<1x16xf32>, vector<1x16xf32> -> vector<1x128xf32>
    %118 = vector.extract_strided_slice %45 {offsets = [1, 0], sizes = [1, 16], strides = [1, 1]} : vector<3x16xf32> to vector<1x16xf32>
    %119 = tpu.concatenate %118, %118, %118, %118, %118, %118, %118, %118 in 1 : vector<1x16xf32>, vector<1x16xf32>, vector<1x16xf32>, vector<1x16xf32>, vector<1x16xf32>, vector<1x16xf32>, vector<1x16xf32>, vector<1x16xf32> -> vector<1x128xf32>
    %120 = vector.extract_strided_slice %45 {offsets = [2, 0], sizes = [1, 16], strides = [1, 1]} : vector<3x16xf32> to vector<1x16xf32>
    %121 = tpu.concatenate %120, %120, %120, %120, %120, %120, %120, %120 in 1 : vector<1x16xf32>, vector<1x16xf32>, vector<1x16xf32>, vector<1x16xf32>, vector<1x16xf32>, vector<1x16xf32>, vector<1x16xf32>, vector<1x16xf32> -> vector<1x128xf32>
    %122 = vector.broadcast %117 : vector<1x128xf32> to vector<8x128xf32>
    %123 = arith.mulf %122, %93 : vector<8x128xf32>
    %cst_27 = arith.constant 1.000000e+00 : f32
    %124 = vector.broadcast %cst_27 : f32 to vector<1x128xf32>
    %125 = arith.subf %124, %117 : vector<1x128xf32>
    %126 = vector.broadcast %125 : vector<1x128xf32> to vector<8x128xf32>
    %127 = arith.mulf %126, %115 : vector<8x128xf32>
    %128 = arith.addf %123, %127 : vector<8x128xf32>
    %129 = vector.broadcast %119 : vector<1x128xf32> to vector<8x128xf32>
    %130 = arith.mulf %128, %129 : vector<8x128xf32>
    %131 = vector.broadcast %121 : vector<1x128xf32> to vector<8x128xf32>
    %132 = arith.addf %130, %131 : vector<8x128xf32>
    %cst_28 = arith.constant 0.000000e+00 : f32
    %133 = vector.broadcast %cst_28 : f32 to vector<8x128xf32>
    %134 = arith.maximumf %132, %133 : vector<8x128xf32>
    %cst_29 = arith.constant 0.000000e+00 : f32
    %135 = vector.broadcast %cst_29 : f32 to vector<8x16xf32>
    %136 = tpu.concatenate %135, %134, %135 in 1 : vector<8x16xf32>, vector<8x128xf32>, vector<8x16xf32> -> vector<8x160xf32>
    %cst_30 = arith.constant 0.000000e+00 : f32
    %137 = vector.broadcast %cst_30 : f32 to vector<1x160xf32>
    %138 = tpu.concatenate %137, %136, %137 in 0 : vector<1x160xf32>, vector<8x160xf32>, vector<1x160xf32> -> vector<10x160xf32>
    %c0_31 = arith.constant 0 : index
    %c0_32 = arith.constant 0 : index
    %139 = vector.load %arg5[%c0_31, %c0_32] : memref<480x128xf32, #tpu.memory_space<vmem>>, vector<480x128xf32>
    %140 = tpu.iota {dimensions = array<i32: 0>} : vector<4x10xi32>
    %141 = tpu.iota {dimensions = array<i32: 1>} : vector<4x10xi32>
    %c2_i32_33 = arith.constant 2 : i32
    %142 = vector.broadcast %c2_i32_33 : i32 to vector<4x10xi32>
    %143 = arith.muli %142, %140 : vector<4x10xi32>
    %c0_i32_34 = arith.constant 0 : i32
    %144 = vector.broadcast %c0_i32_34 : i32 to vector<4x10xi32>
    %145 = arith.addi %143, %144 : vector<4x10xi32>
    %146 = arith.cmpi eq, %141, %145 : vector<4x10xi32>
    %147 = arith.extui %146 : vector<4x10xi1> to vector<4x10xi32>
    %148 = arith.sitofp %147 : vector<4x10xi32> to vector<4x10xf32>
    %cst_35 = arith.constant dense<0.000000e+00> : vector<4x160xf32>
    %149 = tpu.matmul %148, %138, %cst_35 {dimension_numbers = #tpu.dot_dimension_numbers<[1], [0], [0], [1], [0, 0, 1, 1], [], []>} : vector<4x10xf32>, vector<10x160xf32>, vector<4x160xf32> -> vector<4x160xf32>
    %c2_i32_36 = arith.constant 2 : i32
    %150 = vector.broadcast %c2_i32_36 : i32 to vector<4x10xi32>
    %151 = arith.muli %150, %140 : vector<4x10xi32>
    %c1_i32_37 = arith.constant 1 : i32
    %152 = vector.broadcast %c1_i32_37 : i32 to vector<4x10xi32>
    %153 = arith.addi %151, %152 : vector<4x10xi32>
    %154 = arith.cmpi eq, %141, %153 : vector<4x10xi32>
    %155 = arith.extui %154 : vector<4x10xi1> to vector<4x10xi32>
    %156 = arith.sitofp %155 : vector<4x10xi32> to vector<4x10xf32>
    %cst_38 = arith.constant dense<0.000000e+00> : vector<4x160xf32>
    %157 = tpu.matmul %156, %138, %cst_38 {dimension_numbers = #tpu.dot_dimension_numbers<[1], [0], [0], [1], [0, 0, 1, 1], [], []>} : vector<4x10xf32>, vector<10x160xf32>, vector<4x160xf32> -> vector<4x160xf32>
    %c2_i32_39 = arith.constant 2 : i32
    %158 = vector.broadcast %c2_i32_39 : i32 to vector<4x10xi32>
    %159 = arith.muli %158, %140 : vector<4x10xi32>
    %c2_i32_40 = arith.constant 2 : i32
    %160 = vector.broadcast %c2_i32_40 : i32 to vector<4x10xi32>
    %161 = arith.addi %159, %160 : vector<4x10xi32>
    %162 = arith.cmpi eq, %141, %161 : vector<4x10xi32>
    %163 = arith.extui %162 : vector<4x10xi1> to vector<4x10xi32>
    %164 = arith.sitofp %163 : vector<4x10xi32> to vector<4x10xf32>
    %cst_41 = arith.constant dense<0.000000e+00> : vector<4x160xf32>
    %165 = tpu.matmul %164, %138, %cst_41 {dimension_numbers = #tpu.dot_dimension_numbers<[1], [0], [0], [1], [0, 0, 1, 1], [], []>} : vector<4x10xf32>, vector<10x160xf32>, vector<4x160xf32> -> vector<4x160xf32>
    %166 = tpu.concatenate %149, %157, %165 in 1 : vector<4x160xf32>, vector<4x160xf32>, vector<4x160xf32> -> vector<4x480xf32>
    %cst_42 = arith.constant dense<0.000000e+00> : vector<4x128xf32>
    %167 = tpu.matmul %166, %139, %cst_42 {dimension_numbers = #tpu.dot_dimension_numbers<[1], [0], [0], [1], [0, 0, 1, 1], [], []>} : vector<4x480xf32>, vector<480x128xf32>, vector<4x128xf32> -> vector<4x128xf32>
    %c0_43 = arith.constant 0 : index
    %c0_44 = arith.constant 0 : index
    %168 = vector.load %arg6[%c0_43, %c0_44] : memref<3x32xf32, #tpu.memory_space<vmem>>, vector<3x32xf32>
    %cst_45 = arith.constant dense<0.000000e+00> : vector<128xf32>
    %169 = vector.multi_reduction <add>, %167, %cst_45 [0] : vector<4x128xf32> to vector<128xf32>
    %170 = vector.shape_cast %169 : vector<128xf32> to vector<1x128xf32>
    %171 = vector.extract_strided_slice %170 {offsets = [0, 0], sizes = [1, 32], strides = [1, 1]} : vector<1x128xf32> to vector<1x32xf32>
    %172 = vector.extract_strided_slice %170 {offsets = [0, 32], sizes = [1, 32], strides = [1, 1]} : vector<1x128xf32> to vector<1x32xf32>
    %173 = arith.addf %171, %172 : vector<1x32xf32>
    %174 = vector.extract_strided_slice %170 {offsets = [0, 64], sizes = [1, 32], strides = [1, 1]} : vector<1x128xf32> to vector<1x32xf32>
    %175 = arith.addf %173, %174 : vector<1x32xf32>
    %176 = vector.extract_strided_slice %170 {offsets = [0, 96], sizes = [1, 32], strides = [1, 1]} : vector<1x128xf32> to vector<1x32xf32>
    %177 = arith.addf %175, %176 : vector<1x32xf32>
    %cst_46 = arith.constant 1.600000e+01 : f32
    %178 = vector.broadcast %cst_46 : f32 to vector<1x32xf32>
    %179 = arith.divf %177, %178 : vector<1x32xf32>
    %180 = tpu.concatenate %179, %179, %179, %179 in 1 : vector<1x32xf32>, vector<1x32xf32>, vector<1x32xf32>, vector<1x32xf32> -> vector<1x128xf32>
    %181 = vector.broadcast %180 : vector<1x128xf32> to vector<4x128xf32>
    %182 = arith.subf %167, %181 : vector<4x128xf32>
    %183 = arith.mulf %182, %182 : vector<4x128xf32>
    %cst_47 = arith.constant dense<0.000000e+00> : vector<128xf32>
    %184 = vector.multi_reduction <add>, %183, %cst_47 [0] : vector<4x128xf32> to vector<128xf32>
    %185 = vector.shape_cast %184 : vector<128xf32> to vector<1x128xf32>
    %186 = vector.extract_strided_slice %185 {offsets = [0, 0], sizes = [1, 32], strides = [1, 1]} : vector<1x128xf32> to vector<1x32xf32>
    %187 = vector.extract_strided_slice %185 {offsets = [0, 32], sizes = [1, 32], strides = [1, 1]} : vector<1x128xf32> to vector<1x32xf32>
    %188 = arith.addf %186, %187 : vector<1x32xf32>
    %189 = vector.extract_strided_slice %185 {offsets = [0, 64], sizes = [1, 32], strides = [1, 1]} : vector<1x128xf32> to vector<1x32xf32>
    %190 = arith.addf %188, %189 : vector<1x32xf32>
    %191 = vector.extract_strided_slice %185 {offsets = [0, 96], sizes = [1, 32], strides = [1, 1]} : vector<1x128xf32> to vector<1x32xf32>
    %192 = arith.addf %190, %191 : vector<1x32xf32>
    %cst_48 = arith.constant 1.500000e+01 : f32
    %193 = vector.broadcast %cst_48 : f32 to vector<1x32xf32>
    %194 = arith.divf %192, %193 : vector<1x32xf32>
    %cst_49 = arith.constant 9.99999974E-6 : f32
    %195 = vector.broadcast %cst_49 : f32 to vector<1x32xf32>
    %196 = arith.addf %194, %195 : vector<1x32xf32>
    %197 = math.rsqrt %196 : vector<1x32xf32>
    %198 = tpu.concatenate %197, %197, %197, %197 in 1 : vector<1x32xf32>, vector<1x32xf32>, vector<1x32xf32>, vector<1x32xf32> -> vector<1x128xf32>
    %199 = vector.broadcast %198 : vector<1x128xf32> to vector<4x128xf32>
    %200 = arith.mulf %182, %199 : vector<4x128xf32>
    %201 = vector.shape_cast %167 : vector<4x128xf32> to vector<1x4x128xf32>
    %cst_50 = arith.constant dense<0.000000e+00> : vector<1xf32>
    %202 = vector.multi_reduction <add>, %201, %cst_50 [1, 2] : vector<1x4x128xf32> to vector<1xf32>
    %203 = vector.shape_cast %202 : vector<1xf32> to vector<1x1x1xf32>
    %204 = vector.extract %203[0, 0, 0] : f32 from vector<1x1x1xf32>
    %205 = vector.broadcast %204 : f32 to vector<1x1xf32>
    %cst_51 = arith.constant 5.120000e+02 : f32
    %206 = vector.broadcast %cst_51 : f32 to vector<1x1xf32>
    %207 = arith.divf %205, %206 : vector<1x1xf32>
    %208 = vector.broadcast %207 : vector<1x1xf32> to vector<4x128xf32>
    %209 = arith.subf %167, %208 : vector<4x128xf32>
    %210 = arith.mulf %209, %209 : vector<4x128xf32>
    %211 = vector.shape_cast %210 : vector<4x128xf32> to vector<1x4x128xf32>
    %cst_52 = arith.constant dense<0.000000e+00> : vector<1xf32>
    %212 = vector.multi_reduction <add>, %211, %cst_52 [1, 2] : vector<1x4x128xf32> to vector<1xf32>
    %213 = vector.shape_cast %212 : vector<1xf32> to vector<1x1x1xf32>
    %214 = vector.extract %213[0, 0, 0] : f32 from vector<1x1x1xf32>
    %215 = vector.broadcast %214 : f32 to vector<1x1xf32>
    %cst_53 = arith.constant 5.110000e+02 : f32
    %216 = vector.broadcast %cst_53 : f32 to vector<1x1xf32>
    %217 = arith.divf %215, %216 : vector<1x1xf32>
    %cst_54 = arith.constant 9.99999974E-6 : f32
    %218 = vector.broadcast %cst_54 : f32 to vector<1x1xf32>
    %219 = arith.addf %217, %218 : vector<1x1xf32>
    %220 = math.rsqrt %219 : vector<1x1xf32>
    %221 = vector.broadcast %220 : vector<1x1xf32> to vector<4x128xf32>
    %222 = arith.mulf %209, %221 : vector<4x128xf32>
    %223 = vector.extract_strided_slice %168 {offsets = [0, 0], sizes = [1, 32], strides = [1, 1]} : vector<3x32xf32> to vector<1x32xf32>
    %224 = tpu.concatenate %223, %223, %223, %223 in 1 : vector<1x32xf32>, vector<1x32xf32>, vector<1x32xf32>, vector<1x32xf32> -> vector<1x128xf32>
    %225 = vector.extract_strided_slice %168 {offsets = [1, 0], sizes = [1, 32], strides = [1, 1]} : vector<3x32xf32> to vector<1x32xf32>
    %226 = tpu.concatenate %225, %225, %225, %225 in 1 : vector<1x32xf32>, vector<1x32xf32>, vector<1x32xf32>, vector<1x32xf32> -> vector<1x128xf32>
    %227 = vector.extract_strided_slice %168 {offsets = [2, 0], sizes = [1, 32], strides = [1, 1]} : vector<3x32xf32> to vector<1x32xf32>
    %228 = tpu.concatenate %227, %227, %227, %227 in 1 : vector<1x32xf32>, vector<1x32xf32>, vector<1x32xf32>, vector<1x32xf32> -> vector<1x128xf32>
    %229 = vector.broadcast %224 : vector<1x128xf32> to vector<4x128xf32>
    %230 = arith.mulf %229, %200 : vector<4x128xf32>
    %cst_55 = arith.constant 1.000000e+00 : f32
    %231 = vector.broadcast %cst_55 : f32 to vector<1x128xf32>
    %232 = arith.subf %231, %224 : vector<1x128xf32>
    %233 = vector.broadcast %232 : vector<1x128xf32> to vector<4x128xf32>
    %234 = arith.mulf %233, %222 : vector<4x128xf32>
    %235 = arith.addf %230, %234 : vector<4x128xf32>
    %236 = vector.broadcast %226 : vector<1x128xf32> to vector<4x128xf32>
    %237 = arith.mulf %235, %236 : vector<4x128xf32>
    %238 = vector.broadcast %228 : vector<1x128xf32> to vector<4x128xf32>
    %239 = arith.addf %237, %238 : vector<4x128xf32>
    %cst_56 = arith.constant 0.000000e+00 : f32
    %240 = vector.broadcast %cst_56 : f32 to vector<4x128xf32>
    %241 = arith.maximumf %239, %240 : vector<4x128xf32>
    %c0_57 = arith.constant 0 : index
    %c0_58 = arith.constant 0 : index
    %242 = vector.load %arg7[%c0_57, %c0_58] : memref<576x128xf32, #tpu.memory_space<vmem>>, vector<576x128xf32>
    %c0_59 = arith.constant 0 : index
    %c0_60 = arith.constant 0 : index
    %243 = vector.load %arg8[%c0_59, %c0_60] : memref<576x128xf32, #tpu.memory_space<vmem>>, vector<576x128xf32>
    %244 = vector.extract_strided_slice %241 {offsets = [0, 32], sizes = [4, 32], strides = [1, 1]} : vector<4x128xf32> to vector<4x32xf32>
    %245 = vector.extract_strided_slice %241 {offsets = [0, 64], sizes = [4, 32], strides = [1, 1]} : vector<4x128xf32> to vector<4x32xf32>
    %246 = tpu.concatenate %244, %241, %245 in 1 : vector<4x32xf32>, vector<4x128xf32>, vector<4x32xf32> -> vector<4x192xf32>
    %247 = vector.extract_strided_slice %246 {offsets = [1, 0], sizes = [1, 192], strides = [1, 1]} : vector<4x192xf32> to vector<1x192xf32>
    %248 = vector.extract_strided_slice %246 {offsets = [2, 0], sizes = [1, 192], strides = [1, 1]} : vector<4x192xf32> to vector<1x192xf32>
    %249 = tpu.concatenate %247, %246, %248 in 0 : vector<1x192xf32>, vector<4x192xf32>, vector<1x192xf32> -> vector<6x192xf32>
    %250 = vector.extract_strided_slice %249 {offsets = [0, 0], sizes = [4, 192], strides = [1, 1]} : vector<6x192xf32> to vector<4x192xf32>
    %251 = vector.extract_strided_slice %249 {offsets = [1, 0], sizes = [4, 192], strides = [1, 1]} : vector<6x192xf32> to vector<4x192xf32>
    %252 = vector.extract_strided_slice %249 {offsets = [2, 0], sizes = [4, 192], strides = [1, 1]} : vector<6x192xf32> to vector<4x192xf32>
    %253 = tpu.concatenate %250, %251, %252 in 1 : vector<4x192xf32>, vector<4x192xf32>, vector<4x192xf32> -> vector<4x576xf32>
    %cst_61 = arith.constant dense<0.000000e+00> : vector<4x128xf32>
    %254 = tpu.matmul %253, %242, %cst_61 {dimension_numbers = #tpu.dot_dimension_numbers<[1], [0], [0], [1], [0, 0, 1, 1], [], []>} : vector<4x576xf32>, vector<576x128xf32>, vector<4x128xf32> -> vector<4x128xf32>
    %cst_62 = arith.constant dense<0.000000e+00> : vector<128xf32>
    %255 = vector.multi_reduction <add>, %254, %cst_62 [0] : vector<4x128xf32> to vector<128xf32>
    %256 = vector.shape_cast %255 : vector<128xf32> to vector<1x128xf32>
    %257 = vector.extract_strided_slice %256 {offsets = [0, 0], sizes = [1, 32], strides = [1, 1]} : vector<1x128xf32> to vector<1x32xf32>
    %258 = vector.extract_strided_slice %256 {offsets = [0, 32], sizes = [1, 32], strides = [1, 1]} : vector<1x128xf32> to vector<1x32xf32>
    %259 = arith.addf %257, %258 : vector<1x32xf32>
    %260 = vector.extract_strided_slice %256 {offsets = [0, 64], sizes = [1, 32], strides = [1, 1]} : vector<1x128xf32> to vector<1x32xf32>
    %261 = arith.addf %259, %260 : vector<1x32xf32>
    %262 = vector.extract_strided_slice %256 {offsets = [0, 96], sizes = [1, 32], strides = [1, 1]} : vector<1x128xf32> to vector<1x32xf32>
    %263 = arith.addf %261, %262 : vector<1x32xf32>
    %cst_63 = arith.constant 1.600000e+01 : f32
    %264 = vector.broadcast %cst_63 : f32 to vector<1x32xf32>
    %265 = arith.divf %263, %264 : vector<1x32xf32>
    %266 = tpu.concatenate %265, %265, %265, %265 in 1 : vector<1x32xf32>, vector<1x32xf32>, vector<1x32xf32>, vector<1x32xf32> -> vector<1x128xf32>
    %267 = vector.broadcast %266 : vector<1x128xf32> to vector<4x128xf32>
    %268 = arith.subf %254, %267 : vector<4x128xf32>
    %269 = arith.mulf %268, %268 : vector<4x128xf32>
    %cst_64 = arith.constant dense<0.000000e+00> : vector<128xf32>
    %270 = vector.multi_reduction <add>, %269, %cst_64 [0] : vector<4x128xf32> to vector<128xf32>
    %271 = vector.shape_cast %270 : vector<128xf32> to vector<1x128xf32>
    %272 = vector.extract_strided_slice %271 {offsets = [0, 0], sizes = [1, 32], strides = [1, 1]} : vector<1x128xf32> to vector<1x32xf32>
    %273 = vector.extract_strided_slice %271 {offsets = [0, 32], sizes = [1, 32], strides = [1, 1]} : vector<1x128xf32> to vector<1x32xf32>
    %274 = arith.addf %272, %273 : vector<1x32xf32>
    %275 = vector.extract_strided_slice %271 {offsets = [0, 64], sizes = [1, 32], strides = [1, 1]} : vector<1x128xf32> to vector<1x32xf32>
    %276 = arith.addf %274, %275 : vector<1x32xf32>
    %277 = vector.extract_strided_slice %271 {offsets = [0, 96], sizes = [1, 32], strides = [1, 1]} : vector<1x128xf32> to vector<1x32xf32>
    %278 = arith.addf %276, %277 : vector<1x32xf32>
    %cst_65 = arith.constant 1.600000e+01 : f32
    %279 = vector.broadcast %cst_65 : f32 to vector<1x32xf32>
    %280 = arith.divf %278, %279 : vector<1x32xf32>
    %cst_66 = arith.constant 9.99999974E-6 : f32
    %281 = vector.broadcast %cst_66 : f32 to vector<1x32xf32>
    %282 = arith.addf %280, %281 : vector<1x32xf32>
    %283 = math.rsqrt %282 : vector<1x32xf32>
    %284 = tpu.concatenate %283, %283, %283, %283 in 1 : vector<1x32xf32>, vector<1x32xf32>, vector<1x32xf32>, vector<1x32xf32> -> vector<1x128xf32>
    %285 = vector.broadcast %284 : vector<1x128xf32> to vector<4x128xf32>
    %286 = arith.mulf %268, %285 : vector<4x128xf32>
    %cst_67 = arith.constant 0.000000e+00 : f32
    %287 = vector.broadcast %cst_67 : f32 to vector<4x128xf32>
    %288 = arith.maximumf %286, %287 : vector<4x128xf32>
    %289 = vector.extract_strided_slice %288 {offsets = [0, 32], sizes = [4, 32], strides = [1, 1]} : vector<4x128xf32> to vector<4x32xf32>
    %290 = vector.extract_strided_slice %288 {offsets = [0, 64], sizes = [4, 32], strides = [1, 1]} : vector<4x128xf32> to vector<4x32xf32>
    %291 = tpu.concatenate %289, %288, %290 in 1 : vector<4x32xf32>, vector<4x128xf32>, vector<4x32xf32> -> vector<4x192xf32>
    %292 = vector.extract_strided_slice %291 {offsets = [1, 0], sizes = [1, 192], strides = [1, 1]} : vector<4x192xf32> to vector<1x192xf32>
    %293 = vector.extract_strided_slice %291 {offsets = [2, 0], sizes = [1, 192], strides = [1, 1]} : vector<4x192xf32> to vector<1x192xf32>
    %294 = tpu.concatenate %292, %291, %293 in 0 : vector<1x192xf32>, vector<4x192xf32>, vector<1x192xf32> -> vector<6x192xf32>
    %295 = vector.extract_strided_slice %294 {offsets = [0, 0], sizes = [4, 192], strides = [1, 1]} : vector<6x192xf32> to vector<4x192xf32>
    %296 = vector.extract_strided_slice %294 {offsets = [1, 0], sizes = [4, 192], strides = [1, 1]} : vector<6x192xf32> to vector<4x192xf32>
    %297 = vector.extract_strided_slice %294 {offsets = [2, 0], sizes = [4, 192], strides = [1, 1]} : vector<6x192xf32> to vector<4x192xf32>
    %298 = tpu.concatenate %295, %296, %297 in 1 : vector<4x192xf32>, vector<4x192xf32>, vector<4x192xf32> -> vector<4x576xf32>
    %cst_68 = arith.constant dense<0.000000e+00> : vector<4x128xf32>
    %299 = tpu.matmul %298, %243, %cst_68 {dimension_numbers = #tpu.dot_dimension_numbers<[1], [0], [0], [1], [0, 0, 1, 1], [], []>} : vector<4x576xf32>, vector<576x128xf32>, vector<4x128xf32> -> vector<4x128xf32>
    %cst_69 = arith.constant dense<0.000000e+00> : vector<128xf32>
    %300 = vector.multi_reduction <add>, %299, %cst_69 [0] : vector<4x128xf32> to vector<128xf32>
    %301 = vector.shape_cast %300 : vector<128xf32> to vector<1x128xf32>
    %302 = vector.extract_strided_slice %301 {offsets = [0, 0], sizes = [1, 32], strides = [1, 1]} : vector<1x128xf32> to vector<1x32xf32>
    %303 = vector.extract_strided_slice %301 {offsets = [0, 32], sizes = [1, 32], strides = [1, 1]} : vector<1x128xf32> to vector<1x32xf32>
    %304 = arith.addf %302, %303 : vector<1x32xf32>
    %305 = vector.extract_strided_slice %301 {offsets = [0, 64], sizes = [1, 32], strides = [1, 1]} : vector<1x128xf32> to vector<1x32xf32>
    %306 = arith.addf %304, %305 : vector<1x32xf32>
    %307 = vector.extract_strided_slice %301 {offsets = [0, 96], sizes = [1, 32], strides = [1, 1]} : vector<1x128xf32> to vector<1x32xf32>
    %308 = arith.addf %306, %307 : vector<1x32xf32>
    %cst_70 = arith.constant 1.600000e+01 : f32
    %309 = vector.broadcast %cst_70 : f32 to vector<1x32xf32>
    %310 = arith.divf %308, %309 : vector<1x32xf32>
    %311 = tpu.concatenate %310, %310, %310, %310 in 1 : vector<1x32xf32>, vector<1x32xf32>, vector<1x32xf32>, vector<1x32xf32> -> vector<1x128xf32>
    %312 = vector.broadcast %311 : vector<1x128xf32> to vector<4x128xf32>
    %313 = arith.subf %299, %312 : vector<4x128xf32>
    %314 = arith.mulf %313, %313 : vector<4x128xf32>
    %cst_71 = arith.constant dense<0.000000e+00> : vector<128xf32>
    %315 = vector.multi_reduction <add>, %314, %cst_71 [0] : vector<4x128xf32> to vector<128xf32>
    %316 = vector.shape_cast %315 : vector<128xf32> to vector<1x128xf32>
    %317 = vector.extract_strided_slice %316 {offsets = [0, 0], sizes = [1, 32], strides = [1, 1]} : vector<1x128xf32> to vector<1x32xf32>
    %318 = vector.extract_strided_slice %316 {offsets = [0, 32], sizes = [1, 32], strides = [1, 1]} : vector<1x128xf32> to vector<1x32xf32>
    %319 = arith.addf %317, %318 : vector<1x32xf32>
    %320 = vector.extract_strided_slice %316 {offsets = [0, 64], sizes = [1, 32], strides = [1, 1]} : vector<1x128xf32> to vector<1x32xf32>
    %321 = arith.addf %319, %320 : vector<1x32xf32>
    %322 = vector.extract_strided_slice %316 {offsets = [0, 96], sizes = [1, 32], strides = [1, 1]} : vector<1x128xf32> to vector<1x32xf32>
    %323 = arith.addf %321, %322 : vector<1x32xf32>
    %cst_72 = arith.constant 1.600000e+01 : f32
    %324 = vector.broadcast %cst_72 : f32 to vector<1x32xf32>
    %325 = arith.divf %323, %324 : vector<1x32xf32>
    %cst_73 = arith.constant 9.99999974E-6 : f32
    %326 = vector.broadcast %cst_73 : f32 to vector<1x32xf32>
    %327 = arith.addf %325, %326 : vector<1x32xf32>
    %328 = math.rsqrt %327 : vector<1x32xf32>
    %329 = tpu.concatenate %328, %328, %328, %328 in 1 : vector<1x32xf32>, vector<1x32xf32>, vector<1x32xf32>, vector<1x32xf32> -> vector<1x128xf32>
    %330 = vector.broadcast %329 : vector<1x128xf32> to vector<4x128xf32>
    %331 = arith.mulf %313, %330 : vector<4x128xf32>
    %332 = arith.addf %241, %331 : vector<4x128xf32>
    %c0_74 = arith.constant 0 : index
    %c0_75 = arith.constant 0 : index
    %333 = vector.load %arg9[%c0_74, %c0_75] : memref<576x128xf32, #tpu.memory_space<vmem>>, vector<576x128xf32>
    %c0_76 = arith.constant 0 : index
    %c0_77 = arith.constant 0 : index
    %334 = vector.load %arg10[%c0_76, %c0_77] : memref<576x128xf32, #tpu.memory_space<vmem>>, vector<576x128xf32>
    %335 = vector.extract_strided_slice %332 {offsets = [0, 32], sizes = [4, 32], strides = [1, 1]} : vector<4x128xf32> to vector<4x32xf32>
    %336 = vector.extract_strided_slice %332 {offsets = [0, 64], sizes = [4, 32], strides = [1, 1]} : vector<4x128xf32> to vector<4x32xf32>
    %337 = tpu.concatenate %335, %332, %336 in 1 : vector<4x32xf32>, vector<4x128xf32>, vector<4x32xf32> -> vector<4x192xf32>
    %338 = vector.extract_strided_slice %337 {offsets = [1, 0], sizes = [1, 192], strides = [1, 1]} : vector<4x192xf32> to vector<1x192xf32>
    %339 = vector.extract_strided_slice %337 {offsets = [2, 0], sizes = [1, 192], strides = [1, 1]} : vector<4x192xf32> to vector<1x192xf32>
    %340 = tpu.concatenate %338, %337, %339 in 0 : vector<1x192xf32>, vector<4x192xf32>, vector<1x192xf32> -> vector<6x192xf32>
    %341 = vector.extract_strided_slice %340 {offsets = [0, 0], sizes = [4, 192], strides = [1, 1]} : vector<6x192xf32> to vector<4x192xf32>
    %342 = vector.extract_strided_slice %340 {offsets = [1, 0], sizes = [4, 192], strides = [1, 1]} : vector<6x192xf32> to vector<4x192xf32>
    %343 = vector.extract_strided_slice %340 {offsets = [2, 0], sizes = [4, 192], strides = [1, 1]} : vector<6x192xf32> to vector<4x192xf32>
    %344 = tpu.concatenate %341, %342, %343 in 1 : vector<4x192xf32>, vector<4x192xf32>, vector<4x192xf32> -> vector<4x576xf32>
    %cst_78 = arith.constant dense<0.000000e+00> : vector<4x128xf32>
    %345 = tpu.matmul %344, %333, %cst_78 {dimension_numbers = #tpu.dot_dimension_numbers<[1], [0], [0], [1], [0, 0, 1, 1], [], []>} : vector<4x576xf32>, vector<576x128xf32>, vector<4x128xf32> -> vector<4x128xf32>
    %cst_79 = arith.constant dense<0.000000e+00> : vector<128xf32>
    %346 = vector.multi_reduction <add>, %345, %cst_79 [0] : vector<4x128xf32> to vector<128xf32>
    %347 = vector.shape_cast %346 : vector<128xf32> to vector<1x128xf32>
    %348 = vector.extract_strided_slice %347 {offsets = [0, 0], sizes = [1, 32], strides = [1, 1]} : vector<1x128xf32> to vector<1x32xf32>
    %349 = vector.extract_strided_slice %347 {offsets = [0, 32], sizes = [1, 32], strides = [1, 1]} : vector<1x128xf32> to vector<1x32xf32>
    %350 = arith.addf %348, %349 : vector<1x32xf32>
    %351 = vector.extract_strided_slice %347 {offsets = [0, 64], sizes = [1, 32], strides = [1, 1]} : vector<1x128xf32> to vector<1x32xf32>
    %352 = arith.addf %350, %351 : vector<1x32xf32>
    %353 = vector.extract_strided_slice %347 {offsets = [0, 96], sizes = [1, 32], strides = [1, 1]} : vector<1x128xf32> to vector<1x32xf32>
    %354 = arith.addf %352, %353 : vector<1x32xf32>
    %cst_80 = arith.constant 1.600000e+01 : f32
    %355 = vector.broadcast %cst_80 : f32 to vector<1x32xf32>
    %356 = arith.divf %354, %355 : vector<1x32xf32>
    %357 = tpu.concatenate %356, %356, %356, %356 in 1 : vector<1x32xf32>, vector<1x32xf32>, vector<1x32xf32>, vector<1x32xf32> -> vector<1x128xf32>
    %358 = vector.broadcast %357 : vector<1x128xf32> to vector<4x128xf32>
    %359 = arith.subf %345, %358 : vector<4x128xf32>
    %360 = arith.mulf %359, %359 : vector<4x128xf32>
    %cst_81 = arith.constant dense<0.000000e+00> : vector<128xf32>
    %361 = vector.multi_reduction <add>, %360, %cst_81 [0] : vector<4x128xf32> to vector<128xf32>
    %362 = vector.shape_cast %361 : vector<128xf32> to vector<1x128xf32>
    %363 = vector.extract_strided_slice %362 {offsets = [0, 0], sizes = [1, 32], strides = [1, 1]} : vector<1x128xf32> to vector<1x32xf32>
    %364 = vector.extract_strided_slice %362 {offsets = [0, 32], sizes = [1, 32], strides = [1, 1]} : vector<1x128xf32> to vector<1x32xf32>
    %365 = arith.addf %363, %364 : vector<1x32xf32>
    %366 = vector.extract_strided_slice %362 {offsets = [0, 64], sizes = [1, 32], strides = [1, 1]} : vector<1x128xf32> to vector<1x32xf32>
    %367 = arith.addf %365, %366 : vector<1x32xf32>
    %368 = vector.extract_strided_slice %362 {offsets = [0, 96], sizes = [1, 32], strides = [1, 1]} : vector<1x128xf32> to vector<1x32xf32>
    %369 = arith.addf %367, %368 : vector<1x32xf32>
    %cst_82 = arith.constant 1.600000e+01 : f32
    %370 = vector.broadcast %cst_82 : f32 to vector<1x32xf32>
    %371 = arith.divf %369, %370 : vector<1x32xf32>
    %cst_83 = arith.constant 9.99999974E-6 : f32
    %372 = vector.broadcast %cst_83 : f32 to vector<1x32xf32>
    %373 = arith.addf %371, %372 : vector<1x32xf32>
    %374 = math.rsqrt %373 : vector<1x32xf32>
    %375 = tpu.concatenate %374, %374, %374, %374 in 1 : vector<1x32xf32>, vector<1x32xf32>, vector<1x32xf32>, vector<1x32xf32> -> vector<1x128xf32>
    %376 = vector.broadcast %375 : vector<1x128xf32> to vector<4x128xf32>
    %377 = arith.mulf %359, %376 : vector<4x128xf32>
    %cst_84 = arith.constant 0.000000e+00 : f32
    %378 = vector.broadcast %cst_84 : f32 to vector<4x128xf32>
    %379 = arith.maximumf %377, %378 : vector<4x128xf32>
    %380 = vector.extract_strided_slice %379 {offsets = [0, 32], sizes = [4, 32], strides = [1, 1]} : vector<4x128xf32> to vector<4x32xf32>
    %381 = vector.extract_strided_slice %379 {offsets = [0, 64], sizes = [4, 32], strides = [1, 1]} : vector<4x128xf32> to vector<4x32xf32>
    %382 = tpu.concatenate %380, %379, %381 in 1 : vector<4x32xf32>, vector<4x128xf32>, vector<4x32xf32> -> vector<4x192xf32>
    %383 = vector.extract_strided_slice %382 {offsets = [1, 0], sizes = [1, 192], strides = [1, 1]} : vector<4x192xf32> to vector<1x192xf32>
    %384 = vector.extract_strided_slice %382 {offsets = [2, 0], sizes = [1, 192], strides = [1, 1]} : vector<4x192xf32> to vector<1x192xf32>
    %385 = tpu.concatenate %383, %382, %384 in 0 : vector<1x192xf32>, vector<4x192xf32>, vector<1x192xf32> -> vector<6x192xf32>
    %386 = vector.extract_strided_slice %385 {offsets = [0, 0], sizes = [4, 192], strides = [1, 1]} : vector<6x192xf32> to vector<4x192xf32>
    %387 = vector.extract_strided_slice %385 {offsets = [1, 0], sizes = [4, 192], strides = [1, 1]} : vector<6x192xf32> to vector<4x192xf32>
    %388 = vector.extract_strided_slice %385 {offsets = [2, 0], sizes = [4, 192], strides = [1, 1]} : vector<6x192xf32> to vector<4x192xf32>
    %389 = tpu.concatenate %386, %387, %388 in 1 : vector<4x192xf32>, vector<4x192xf32>, vector<4x192xf32> -> vector<4x576xf32>
    %cst_85 = arith.constant dense<0.000000e+00> : vector<4x128xf32>
    %390 = tpu.matmul %389, %334, %cst_85 {dimension_numbers = #tpu.dot_dimension_numbers<[1], [0], [0], [1], [0, 0, 1, 1], [], []>} : vector<4x576xf32>, vector<576x128xf32>, vector<4x128xf32> -> vector<4x128xf32>
    %cst_86 = arith.constant dense<0.000000e+00> : vector<128xf32>
    %391 = vector.multi_reduction <add>, %390, %cst_86 [0] : vector<4x128xf32> to vector<128xf32>
    %392 = vector.shape_cast %391 : vector<128xf32> to vector<1x128xf32>
    %393 = vector.extract_strided_slice %392 {offsets = [0, 0], sizes = [1, 32], strides = [1, 1]} : vector<1x128xf32> to vector<1x32xf32>
    %394 = vector.extract_strided_slice %392 {offsets = [0, 32], sizes = [1, 32], strides = [1, 1]} : vector<1x128xf32> to vector<1x32xf32>
    %395 = arith.addf %393, %394 : vector<1x32xf32>
    %396 = vector.extract_strided_slice %392 {offsets = [0, 64], sizes = [1, 32], strides = [1, 1]} : vector<1x128xf32> to vector<1x32xf32>
    %397 = arith.addf %395, %396 : vector<1x32xf32>
    %398 = vector.extract_strided_slice %392 {offsets = [0, 96], sizes = [1, 32], strides = [1, 1]} : vector<1x128xf32> to vector<1x32xf32>
    %399 = arith.addf %397, %398 : vector<1x32xf32>
    %cst_87 = arith.constant 1.600000e+01 : f32
    %400 = vector.broadcast %cst_87 : f32 to vector<1x32xf32>
    %401 = arith.divf %399, %400 : vector<1x32xf32>
    %402 = tpu.concatenate %401, %401, %401, %401 in 1 : vector<1x32xf32>, vector<1x32xf32>, vector<1x32xf32>, vector<1x32xf32> -> vector<1x128xf32>
    %403 = vector.broadcast %402 : vector<1x128xf32> to vector<4x128xf32>
    %404 = arith.subf %390, %403 : vector<4x128xf32>
    %405 = arith.mulf %404, %404 : vector<4x128xf32>
    %cst_88 = arith.constant dense<0.000000e+00> : vector<128xf32>
    %406 = vector.multi_reduction <add>, %405, %cst_88 [0] : vector<4x128xf32> to vector<128xf32>
    %407 = vector.shape_cast %406 : vector<128xf32> to vector<1x128xf32>
    %408 = vector.extract_strided_slice %407 {offsets = [0, 0], sizes = [1, 32], strides = [1, 1]} : vector<1x128xf32> to vector<1x32xf32>
    %409 = vector.extract_strided_slice %407 {offsets = [0, 32], sizes = [1, 32], strides = [1, 1]} : vector<1x128xf32> to vector<1x32xf32>
    %410 = arith.addf %408, %409 : vector<1x32xf32>
    %411 = vector.extract_strided_slice %407 {offsets = [0, 64], sizes = [1, 32], strides = [1, 1]} : vector<1x128xf32> to vector<1x32xf32>
    %412 = arith.addf %410, %411 : vector<1x32xf32>
    %413 = vector.extract_strided_slice %407 {offsets = [0, 96], sizes = [1, 32], strides = [1, 1]} : vector<1x128xf32> to vector<1x32xf32>
    %414 = arith.addf %412, %413 : vector<1x32xf32>
    %cst_89 = arith.constant 1.600000e+01 : f32
    %415 = vector.broadcast %cst_89 : f32 to vector<1x32xf32>
    %416 = arith.divf %414, %415 : vector<1x32xf32>
    %cst_90 = arith.constant 9.99999974E-6 : f32
    %417 = vector.broadcast %cst_90 : f32 to vector<1x32xf32>
    %418 = arith.addf %416, %417 : vector<1x32xf32>
    %419 = math.rsqrt %418 : vector<1x32xf32>
    %420 = tpu.concatenate %419, %419, %419, %419 in 1 : vector<1x32xf32>, vector<1x32xf32>, vector<1x32xf32>, vector<1x32xf32> -> vector<1x128xf32>
    %421 = vector.broadcast %420 : vector<1x128xf32> to vector<4x128xf32>
    %422 = arith.mulf %404, %421 : vector<4x128xf32>
    %423 = arith.addf %332, %422 : vector<4x128xf32>
    %c0_91 = arith.constant 0 : index
    %c0_92 = arith.constant 0 : index
    %c0_93 = arith.constant 0 : index
    %424 = vector.load %arg11[%c0_91, %c0_92, %c0_93] : memref<1x4x128xf32, #tpu.memory_space<vmem>>, vector<1x4x128xf32>
    %425 = vector.shape_cast %424 : vector<1x4x128xf32> to vector<4x128xf32>
    %426 = vector.shape_cast %423 : vector<4x128xf32> to vector<1x4x128xf32>
    tpu.vector_store %arg11[%c0_91, %c0_92, %c0_93], %426 {strides = array<i32>} : memref<1x4x128xf32, #tpu.memory_space<vmem>>, vector<1x4x128xf32>,
    return
  }
  func.func @transform_0(%arg0: i32) -> (i32, i32, i32) {
    %c0_i32 = arith.constant 0 : i32
    %c0_i32_0 = arith.constant 0 : i32
    %c0_i32_1 = arith.constant 0 : i32
    return %arg0, %c0_i32, %c0_i32_0 : i32, i32, i32
  }
  func.func @transform_1(%arg0: i32) -> (i32, i32) {
    %c0_i32 = arith.constant 0 : i32
    %c0_i32_0 = arith.constant 0 : i32
    %c0_i32_1 = arith.constant 0 : i32
    return %c0_i32, %c0_i32_0 : i32, i32
  }
  func.func @transform_2(%arg0: i32) -> (i32, i32) {
    %c0_i32 = arith.constant 0 : i32
    %c0_i32_0 = arith.constant 0 : i32
    %c0_i32_1 = arith.constant 0 : i32
    return %c0_i32, %c0_i32_0 : i32, i32
  }
  func.func @transform_3(%arg0: i32) -> (i32, i32) {
    %c0_i32 = arith.constant 0 : i32
    %c0_i32_0 = arith.constant 0 : i32
    %c0_i32_1 = arith.constant 0 : i32
    return %c0_i32, %c0_i32_0 : i32, i32
  }
  func.func @transform_4(%arg0: i32) -> (i32, i32) {
    %c0_i32 = arith.constant 0 : i32
    %c0_i32_0 = arith.constant 0 : i32
    %c0_i32_1 = arith.constant 0 : i32
    return %c0_i32, %c0_i32_0 : i32, i32
  }
  func.func @transform_5(%arg0: i32) -> (i32, i32) {
    %c0_i32 = arith.constant 0 : i32
    %c0_i32_0 = arith.constant 0 : i32
    %c0_i32_1 = arith.constant 0 : i32
    return %c0_i32, %c0_i32_0 : i32, i32
  }
  func.func @transform_6(%arg0: i32) -> (i32, i32) {
    %c0_i32 = arith.constant 0 : i32
    %c0_i32_0 = arith.constant 0 : i32
    %c0_i32_1 = arith.constant 0 : i32
    return %c0_i32, %c0_i32_0 : i32, i32
  }
  func.func @transform_7(%arg0: i32) -> (i32, i32) {
    %c0_i32 = arith.constant 0 : i32
    %c0_i32_0 = arith.constant 0 : i32
    %c0_i32_1 = arith.constant 0 : i32
    return %c0_i32, %c0_i32_0 : i32, i32
  }
  func.func @transform_8(%arg0: i32) -> (i32, i32) {
    %c0_i32 = arith.constant 0 : i32
    %c0_i32_0 = arith.constant 0 : i32
    %c0_i32_1 = arith.constant 0 : i32
    return %c0_i32, %c0_i32_0 : i32, i32
  }
  func.func @transform_9(%arg0: i32) -> (i32, i32) {
    %c0_i32 = arith.constant 0 : i32
    %c0_i32_0 = arith.constant 0 : i32
    %c0_i32_1 = arith.constant 0 : i32
    return %c0_i32, %c0_i32_0 : i32, i32
  }
  func.func @transform_10(%arg0: i32) -> (i32, i32, i32) {
    %c0_i32 = arith.constant 0 : i32
    %c0_i32_0 = arith.constant 0 : i32
    %c0_i32_1 = arith.constant 0 : i32
    return %arg0, %c0_i32, %c0_i32_0 : i32, i32, i32
  }
}

</mosaic_0001>

<llo_original>
// kernel: gen_encoder_pallas.1
$region0: #{gen_encoder_pallas.1}
  #allocation0 [shape = 'u32[]', space=smem, size = 0x4, offset = 0x4, fixed_abs, tag = 'smem constant byte address 0x4 - core index']
  #allocation1 [shape = 'u32[144,128]{1,0:T(1,128)}', space=vmem, size = 0x12000, scoped, tag = 'internal scratch']
  %s0 = inlined_call_operand.vmem [shape: f32[2,22,66], index: 0, kind: input, shape index: {}]
  %s1 = inlined_call_operand.hbm [shape: f32[462,128], index: 1, kind: input, shape index: {}]
  %s2 = inlined_call_operand.hbm [shape: f32[432,128], index: 2, kind: input, shape index: {}]
  %s3 = inlined_call_operand.vmem [shape: f32[3,16], index: 3, kind: input, shape index: {}]
  %s4 = inlined_call_operand.hbm [shape: f32[480,128], index: 4, kind: input, shape index: {}]
  %s5 = inlined_call_operand.vmem [shape: f32[3,32], index: 5, kind: input, shape index: {}]
  %s6 = inlined_call_operand.vmem [shape: f32[576,128], index: 6, kind: input, shape index: {}]
  %s7 = inlined_call_operand.vmem [shape: f32[576,128], index: 7, kind: input, shape index: {}]
  %s8 = inlined_call_operand.vmem [shape: f32[576,128], index: 8, kind: input, shape index: {}]
  %s9 = inlined_call_operand.vmem [shape: f32[576,128], index: 9, kind: input, shape index: {}]
  %s10 = inlined_call_operand.vmem [shape: f32[2,4,128], index: 10, kind: output, shape index: {}]
  %s11 = sld [smem:[#allocation0]]
  $region85: #{gen_encoder_pallas.1} parent=0
    _
  %s13 = ssub.s32 1, %s11
  %s14 = scalar_select 0, %s13, %s11
  $region1: #{gen_encoder_pallas.1} parent=0
    #allocation2 [shape = 'u8[237568]{0}', space=vmem, size = 0x3a000, scoped, tag = 'input window, operand 1, single buffered']
    #allocation3 [shape = 's32[2]{0}', space=sflag, size = 0x8, scoped, tag = 'scoped memory for gen_encoder_pallas.1']
    #allocation4 [shape = 'u8[221184]{0}', space=vmem, size = 0x36000, scoped, tag = 'input window, operand 2, single buffered']
    #allocation5 [shape = 's32[1]{0}', space=sflag, size = 0x4, scoped, tag = 'scoped memory for gen_encoder_pallas.1']
    #allocation6 [shape = 'u8[245760]{0}', space=vmem, size = 0x3c000, scoped, tag = 'input window, operand 4, single buffered']
    %15 = vsyncpa [#allocation3], 0
    %16 = vsyncpa [#allocation5], 0
    loop: start=0, step=1, limit=4
    $region2: #{gen_encoder_pallas.1} parent=1 // loop_pre_header
      _
    $region3: #{gen_encoder_pallas.1} parent=1 // loop_header
      %s18 = sphi 0, %s22
      %p19 = scmp.ge.s32.totalorder %s18, 4
      %s28 = sphi 0, %s30
      %s31 = sphi 0, %s28
      %s32 = sphi 0, %s31
      %s48 = sphi 0, %s32
      %s52 = sphi 0, %s52
      %s54 = sphi 0, %s52
      %s55 = sphi 0, %s54
      %s69 = sphi 0, %s55
      %s73 = sphi 0, %s73
      %s75 = sphi 0, %s73
      %s76 = sphi 0, %s75
      %s90 = sphi 0, %s76
      %s94 = sphi 0, %s94
      %s96 = sphi 0, %s94
      %s97 = sphi 0, %s96
      %s111 = sphi 0, %s97
      %s115 = sphi 0, %s115
      %s117 = sphi 0, %s115
      %s118 = sphi 0, %s117
      %s132 = sphi 0, %s118
      %s136 = sphi 0, %s136
      %s138 = sphi 0, %s136
      %s139 = sphi 0, %s138
      %s153 = sphi 0, %s139
      %s157 = sphi 0, %s157
      %s159 = sphi 0, %s157
      %s160 = sphi 0, %s159
      %s174 = sphi 0, %s160
      %s178 = sphi 0, %s178
      %s180 = sphi 0, %s178
      %s181 = sphi 0, %s180
      %s195 = sphi 0, %s181
      %s199 = sphi 0, %s199
      %s201 = sphi 0, %s199
      %s202 = sphi 0, %s201
      %s216 = sphi 0, %s202
      %s220 = sphi 0, %s220
      %s222 = sphi 0, %s220
      %s223 = sphi 0, %s222
      %s237 = sphi 0, %s223
      %s243 = sphi 0, %s245
      %s246 = sphi 0, %s243
      %s247 = sphi 0, %s246
      %s263 = sphi 0, %s247
    $region4: #{gen_encoder_pallas.1} parent=1 // loop_header_branch
      %21 = sbr.rel (%p19) target = $region8
    $region5: #{gen_encoder_pallas.1} parent=1 // loop_body
      %s23 = ssub.s32 %s18, 1
      %s24 = ssub.s32 %s18, 2
      %s25 = sadd.s32 %s18, 1
      %s26 = ssub.s32 %s18, %s25
      %p27 = scmp.eq.s32.totalorder %s26, 0
      %s29 = sadd.s32 %s28, 1
      %s30 = scalar_select %p27, %s28, %s29
      %p33 = pneg %p27
      %p34 = scmp.eq.s32.totalorder %s18, 1
      %p35 = por %p33, %p34
      %p36 = scmp.ne.s32.totalorder %s28, %s31
      %p37 = scmp.eq.s32.totalorder %s18, 0
      %p38 = por %p36, %p37
      %p39 = scmp.ne.s32.totalorder %s28, %s31
      %p40 = scmp.eq.s32.totalorder %s23, 1
      %p41 = por %p39, %p40
      %p42 = scmp.ne.s32.totalorder %s31, %s32
      %p43 = scmp.eq.s32.totalorder %s23, 0
      %p44 = por %p42, %p43
      %p45 = scmp.ne.s32.totalorder %s31, %s32
      %p46 = scmp.eq.s32.totalorder %s24, 1
      %p47 = por %p45, %p46
      %p49 = scmp.ne.s32.totalorder %s32, %s48
      %p50 = scmp.eq.s32.totalorder %s24, 0
      %p51 = por %p49, %p50
      %s53 = sadd.s32 %s52, 1
      %p56 = scmp.eq.s32.totalorder %s18, 1
      %p57 = scmp.ne.s32.totalorder %s52, %s54
      %p58 = scmp.eq.s32.totalorder %s18, 0
      %p59 = por %p57, %p58
      %p60 = scmp.ne.s32.totalorder %s52, %s54
      %p61 = scmp.eq.s32.totalorder %s23, 1
      %p62 = por %p60, %p61
      %p63 = scmp.ne.s32.totalorder %s54, %s55
      %p64 = scmp.eq.s32.totalorder %s23, 0
      %p65 = por %p63, %p64
      %p66 = scmp.ne.s32.totalorder %s54, %s55
      %p67 = scmp.eq.s32.totalorder %s24, 1
      %p68 = por %p66, %p67
      %p70 = scmp.ne.s32.totalorder %s55, %s69
      %p71 = scmp.eq.s32.totalorder %s24, 0
      %p72 = por %p70, %p71
      %s74 = sadd.s32 %s73, 1
      %p77 = scmp.eq.s32.totalorder %s18, 1
      %p78 = scmp.ne.s32.totalorder %s73, %s75
      %p79 = scmp.eq.s32.totalorder %s18, 0
      %p80 = por %p78, %p79
      %p81 = scmp.ne.s32.totalorder %s73, %s75
      %p82 = scmp.eq.s32.totalorder %s23, 1
      %p83 = por %p81, %p82
      %p84 = scmp.ne.s32.totalorder %s75, %s76
      %p85 = scmp.eq.s32.totalorder %s23, 0
      %p86 = por %p84, %p85
      %p87 = scmp.ne.s32.totalorder %s75, %s76
      %p88 = scmp.eq.s32.totalorder %s24, 1
      %p89 = por %p87, %p88
      %p91 = scmp.ne.s32.totalorder %s76, %s90
      %p92 = scmp.eq.s32.totalorder %s24, 0
      %p93 = por %p91, %p92
      %s95 = sadd.s32 %s94, 1
      %p98 = scmp.eq.s32.totalorder %s18, 1
      %p99 = scmp.ne.s32.totalorder %s94, %s96
      %p100 = scmp.eq.s32.totalorder %s18, 0
      %p101 = por %p99, %p100
      %p102 = scmp.ne.s32.totalorder %s94, %s96
      %p103 = scmp.eq.s32.totalorder %s23, 1
      %p104 = por %p102, %p103
      %p105 = scmp.ne.s32.totalorder %s96, %s97
      %p106 = scmp.eq.s32.totalorder %s23, 0
      %p107 = por %p105, %p106
      %p108 = scmp.ne.s32.totalorder %s96, %s97
      %p109 = scmp.eq.s32.totalorder %s24, 1
      %p110 = por %p108, %p109
      %p112 = scmp.ne.s32.totalorder %s97, %s111
      %p113 = scmp.eq.s32.totalorder %s24, 0
      %p114 = por %p112, %p113
      %s116 = sadd.s32 %s115, 1
      %p119 = scmp.eq.s32.totalorder %s18, 1
      %p120 = scmp.ne.s32.totalorder %s115, %s117
      %p121 = scmp.eq.s32.totalorder %s18, 0
      %p122 = por %p120, %p121
      %p123 = scmp.ne.s32.totalorder %s115, %s117
      %p124 = scmp.eq.s32.totalorder %s23, 1
      %p125 = por %p123, %p124
      %p126 = scmp.ne.s32.totalorder %s117, %s118
      %p127 = scmp.eq.s32.totalorder %s23, 0
      %p128 = por %p126, %p127
      %p129 = scmp.ne.s32.totalorder %s117, %s118
      %p130 = scmp.eq.s32.totalorder %s24, 1
      %p131 = por %p129, %p130
      %p133 = scmp.ne.s32.totalorder %s118, %s132
      %p134 = scmp.eq.s32.totalorder %s24, 0
      %p135 = por %p133, %p134
      %s137 = sadd.s32 %s136, 1
      %p140 = scmp.eq.s32.totalorder %s18, 1
      %p141 = scmp.ne.s32.totalorder %s136, %s138
      %p142 = scmp.eq.s32.totalorder %s18, 0
      %p143 = por %p141, %p142
      %p144 = scmp.ne.s32.totalorder %s136, %s138
      %p145 = scmp.eq.s32.totalorder %s23, 1
      %p146 = por %p144, %p145
      %p147 = scmp.ne.s32.totalorder %s138, %s139
      %p148 = scmp.eq.s32.totalorder %s23, 0
      %p149 = por %p147, %p148
      %p150 = scmp.ne.s32.totalorder %s138, %s139
      %p151 = scmp.eq.s32.totalorder %s24, 1
      %p152 = por %p150, %p151
      %p154 = scmp.ne.s32.totalorder %s139, %s153
      %p155 = scmp.eq.s32.totalorder %s24, 0
      %p156 = por %p154, %p155
      %s158 = sadd.s32 %s157, 1
      %p161 = scmp.eq.s32.totalorder %s18, 1
      %p162 = scmp.ne.s32.totalorder %s157, %s159
      %p163 = scmp.eq.s32.totalorder %s18, 0
      %p164 = por %p162, %p163
      %p165 = scmp.ne.s32.totalorder %s157, %s159
      %p166 = scmp.eq.s32.totalorder %s23, 1
      %p167 = por %p165, %p166
      %p168 = scmp.ne.s32.totalorder %s159, %s160
      %p169 = scmp.eq.s32.totalorder %s23, 0
      %p170 = por %p168, %p169
      %p171 = scmp.ne.s32.totalorder %s159, %s160
      %p172 = scmp.eq.s32.totalorder %s24, 1
      %p173 = por %p171, %p172
      %p175 = scmp.ne.s32.totalorder %s160, %s174
      %p176 = scmp.eq.s32.totalorder %s24, 0
      %p177 = por %p175, %p176
      %s179 = sadd.s32 %s178, 1
      %p182 = scmp.eq.s32.totalorder %s18, 1
      %p183 = scmp.ne.s32.totalorder %s178, %s180
      %p184 = scmp.eq.s32.totalorder %s18, 0
      %p185 = por %p183, %p184
      %p186 = scmp.ne.s32.totalorder %s178, %s180
      %p187 = scmp.eq.s32.totalorder %s23, 1
      %p188 = por %p186, %p187
      %p189 = scmp.ne.s32.totalorder %s180, %s181
      %p190 = scmp.eq.s32.totalorder %s23, 0
      %p191 = por %p189, %p190
      %p192 = scmp.ne.s32.totalorder %s180, %s181
      %p193 = scmp.eq.s32.totalorder %s24, 1
      %p194 = por %p192, %p193
      %p196 = scmp.ne.s32.totalorder %s181, %s195
      %p197 = scmp.eq.s32.totalorder %s24, 0
      %p198 = por %p196, %p197
      %s200 = sadd.s32 %s199, 1
      %p203 = scmp.eq.s32.totalorder %s18, 1
      %p204 = scmp.ne.s32.totalorder %s199, %s201
      %p205 = scmp.eq.s32.totalorder %s18, 0
      %p206 = por %p204, %p205
      %p207 = scmp.ne.s32.totalorder %s199, %s201
      %p208 = scmp.eq.s32.totalorder %s23, 1
      %p209 = por %p207, %p208
      %p210 = scmp.ne.s32.totalorder %s201, %s202
      %p211 = scmp.eq.s32.totalorder %s23, 0
      %p212 = por %p210, %p211
      %p213 = scmp.ne.s32.totalorder %s201, %s202
      %p214 = scmp.eq.s32.totalorder %s24, 1
      %p215 = por %p213, %p214
      %p217 = scmp.ne.s32.totalorder %s202, %s216
      %p218 = scmp.eq.s32.totalorder %s24, 0
      %p219 = por %p217, %p218
      %s221 = sadd.s32 %s220, 1
      %p224 = scmp.eq.s32.totalorder %s18, 1
      %p225 = scmp.ne.s32.totalorder %s220, %s222
      %p226 = scmp.eq.s32.totalorder %s18, 0
      %p227 = por %p225, %p226
      %p228 = scmp.ne.s32.totalorder %s220, %s222
      %p229 = scmp.eq.s32.totalorder %s23, 1
      %p230 = por %p228, %p229
      %p231 = scmp.ne.s32.totalorder %s222, %s223
      %p232 = scmp.eq.s32.totalorder %s23, 0
      %p233 = por %p231, %p232
      %p234 = scmp.ne.s32.totalorder %s222, %s223
      %p235 = scmp.eq.s32.totalorder %s24, 1
      %p236 = por %p234, %p235
      %p238 = scmp.ne.s32.totalorder %s223, %s237
      %p239 = scmp.eq.s32.totalorder %s24, 0
      %p240 = por %p238, %p239
      %s241 = ssub.s32 %s18, %s25
      %p242 = scmp.eq.s32.totalorder %s241, 0
      %s244 = sadd.s32 %s243, 1
      %s245 = scalar_select %p242, %s243, %s244
      %p248 = pneg %p242
      %p249 = scmp.eq.s32.totalorder %s18, 1
      %p250 = por %p248, %p249
      %p251 = scmp.ne.s32.totalorder %s243, %s246
      %p252 = scmp.eq.s32.totalorder %s18, 0
      %p253 = por %p251, %p252
      %p254 = scmp.ne.s32.totalorder %s243, %s246
      %p255 = scmp.eq.s32.totalorder %s23, 1
      %p256 = por %p254, %p255
      %p257 = scmp.ne.s32.totalorder %s246, %s247
      %p258 = scmp.eq.s32.totalorder %s23, 0
      %p259 = por %p257, %p258
      %p260 = scmp.ne.s32.totalorder %s246, %s247
      %p261 = scmp.eq.s32.totalorder %s24, 1
      %p262 = por %p260, %p261
      %p264 = scmp.ne.s32.totalorder %s247, %s263
      %p265 = scmp.eq.s32.totalorder %s24, 0
      %p266 = por %p264, %p265
      %p267 = scmp.le.s32.totalorder 1, %s18
      %p268 = scmp.lt.s32.totalorder %s18, 3
      %p269 = pnand %p267, %p268
      %p270 = pneg %p269
      // Predicated region
      $region9: #{gen_encoder_pallas.1} parent=5 // pred_check
        _
      $region10: #{gen_encoder_pallas.1} parent=5 // pred_check_branch
        %272 = sbr.rel (%p269) target = $region12
      $region11: #{gen_encoder_pallas.1} parent=5 // pred_region
        %s273 = ssub.s32 %s18, 1
        // Predicated region
        $region13: #{gen_encoder_pallas.1} parent=11 // pred_check
          %p274 = pneg %p65
        $region14: #{gen_encoder_pallas.1} parent=11 // pred_check_branch
          %276 = sbr.rel (%p274) target = $region16
        $region15: #{gen_encoder_pallas.1} parent=11 // pred_region
          %s278 = ssub.s32 7424, 7424
          %279 = vsyncadd [#allocation3], %s278
          %s280 = sshll.u32 [#allocation2], 4
          %s281 = int_to_ptr.vmem [resolvable:$true] %s280
          %286 = dma.hbm_to_vmem [thread:$0]  %s1, 7424, %s281, [#allocation3], 128, 128, 8
        $region16: #{gen_encoder_pallas.1} parent=11 // pred_fallthru
          _
        // Predicated region
        $region17: #{gen_encoder_pallas.1} parent=11 // pred_check
          %p287 = pneg %p86
        $region18: #{gen_encoder_pallas.1} parent=11 // pred_check_branch
          %289 = sbr.rel (%p287) target = $region20
        $region19: #{gen_encoder_pallas.1} parent=11 // pred_region
          %s291 = ssub.s32 6912, 6912
          %292 = vsyncadd [#allocation5], %s291
          %s293 = sshll.u32 [#allocation4], 4
          %s294 = int_to_ptr.vmem [resolvable:$true] %s293
          %299 = dma.hbm_to_vmem [thread:$0]  %s2, 6912, %s294, [#allocation5], 128, 128, 8
        $region20: #{gen_encoder_pallas.1} parent=11 // pred_fallthru
          _
        // Predicated region
        $region21: #{gen_encoder_pallas.1} parent=11 // pred_check
          %p300 = pneg %p107
        $region22: #{gen_encoder_pallas.1} parent=11 // pred_check_branch
          %302 = sbr.rel (%p300) target = $region24
        $region23: #{gen_encoder_pallas.1} parent=11 // pred_region
          _
        $region24: #{gen_encoder_pallas.1} parent=11 // pred_fallthru
          _
        // Predicated region
        $region25: #{gen_encoder_pallas.1} parent=11 // pred_check
          %p303 = pneg %p128
        $region26: #{gen_encoder_pallas.1} parent=11 // pred_check_branch
          %305 = sbr.rel (%p303) target = $region28
        $region27: #{gen_encoder_pallas.1} parent=11 // pred_region
          %s307 = ssub.s32 7680, 7680
          %308 = vsyncadd [#allocation5], %s307
          %s309 = sshll.u32 [#allocation6], 4
          %s310 = int_to_ptr.vmem [resolvable:$true] %s309
          %315 = dma.hbm_to_vmem [thread:$0]  %s4, 7680, %s310, [#allocation5], 128, 128, 8
        $region28: #{gen_encoder_pallas.1} parent=11 // pred_fallthru
          _
        // Predicated region
        $region29: #{gen_encoder_pallas.1} parent=11 // pred_check
          %p316 = pneg %p149
        $region30: #{gen_encoder_pallas.1} parent=11 // pred_check_branch
          %318 = sbr.rel (%p316) target = $region32
        $region31: #{gen_encoder_pallas.1} parent=11 // pred_region
          _
        $region32: #{gen_encoder_pallas.1} parent=11 // pred_fallthru
          _
        // Predicated region
        $region33: #{gen_encoder_pallas.1} parent=11 // pred_check
          %p319 = pneg %p170
        $region34: #{gen_encoder_pallas.1} parent=11 // pred_check_branch
          %321 = sbr.rel (%p319) target = $region36
        $region35: #{gen_encoder_pallas.1} parent=11 // pred_region
          _
        $region36: #{gen_encoder_pallas.1} parent=11 // pred_fallthru
          _
        // Predicated region
        $region37: #{gen_encoder_pallas.1} parent=11 // pred_check
          %p322 = pneg %p191
        $region38: #{gen_encoder_pallas.1} parent=11 // pred_check_branch
          %324 = sbr.rel (%p322) target = $region40
        $region39: #{gen_encoder_pallas.1} parent=11 // pred_region
          _
        $region40: #{gen_encoder_pallas.1} parent=11 // pred_fallthru
          _
        // Predicated region
        $region41: #{gen_encoder_pallas.1} parent=11 // pred_check
          %p325 = pneg %p212
        $region42: #{gen_encoder_pallas.1} parent=11 // pred_check_branch
          %327 = sbr.rel (%p325) target = $region44
        $region43: #{gen_encoder_pallas.1} parent=11 // pred_region
          _
        $region44: #{gen_encoder_pallas.1} parent=11 // pred_fallthru
          _
        // Predicated region
        $region45: #{gen_encoder_pallas.1} parent=11 // pred_check
          %p328 = pneg %p233
        $region46: #{gen_encoder_pallas.1} parent=11 // pred_check_branch
          %330 = sbr.rel (%p328) target = $region48
        $region47: #{gen_encoder_pallas.1} parent=11 // pred_region
          _
        $region48: #{gen_encoder_pallas.1} parent=11 // pred_fallthru
          _
      $region12: #{gen_encoder_pallas.1} parent=5 // pred_fallthru
        _
      %p331 = scmp.lt.s32.totalorder %s18, 2
      // Predicated region
      $region49: #{gen_encoder_pallas.1} parent=5 // pred_check
        %p332 = pneg %p331
      $region50: #{gen_encoder_pallas.1} parent=5 // pred_check_branch
        %334 = sbr.rel (%p332) target = $region52
      $region51: #{gen_encoder_pallas.1} parent=5 // pred_region
        // Predicated region
        $region53: #{gen_encoder_pallas.1} parent=51 // pred_check
          %p335 = pneg %p38
        $region54: #{gen_encoder_pallas.1} parent=51 // pred_check_branch
          %337 = sbr.rel (%p335) target = $region56
        $region55: #{gen_encoder_pallas.1} parent=51 // pred_region
          %p338 = scmp.lt.s32.totalorder %s18, 1
          %s339 = scalar_select %p338, %s18, 1
          %s340 = smul.addr %s339, 3
          %s341 = smul.addr %s340, 8
          %s342 = scalar_lea.vmem %s0, %s341
        $region56: #{gen_encoder_pallas.1} parent=51 // pred_fallthru
          _
      $region52: #{gen_encoder_pallas.1} parent=5 // pred_fallthru
        _
      %p343 = scmp.le.s32.totalorder 1, %s18
      %p344 = scmp.lt.s32.totalorder %s18, 3
      %p345 = pnand %p343, %p344
      %p346 = pneg %p345
      // Predicated region
      $region57: #{gen_encoder_pallas.1} parent=5 // pred_check
        _
      $region58: #{gen_encoder_pallas.1} parent=5 // pred_check_branch
        %348 = sbr.rel (%p345) target = $region60
      $region59: #{gen_encoder_pallas.1} parent=5 // pred_region
        %s349 = ssub.s32 %s18, 1
        // Predicated region
        $region61: #{gen_encoder_pallas.1} parent=59 // pred_check
          %p350 = pneg %p65
        $region62: #{gen_encoder_pallas.1} parent=59 // pred_check_branch
          %352 = sbr.rel (%p350) target = $region64
        $region63: #{gen_encoder_pallas.1} parent=59 // pred_region
          %353 = dma.done [#allocation3], 7424
        $region64: #{gen_encoder_pallas.1} parent=59 // pred_fallthru
          _
        // Predicated region
        $region65: #{gen_encoder_pallas.1} parent=59 // pred_check
          %p354 = pneg %p86
        $region66: #{gen_encoder_pallas.1} parent=59 // pred_check_branch
          %356 = sbr.rel (%p354) target = $region68
        $region67: #{gen_encoder_pallas.1} parent=59 // pred_region
          %357 = dma.done [#allocation5], 6912
        $region68: #{gen_encoder_pallas.1} parent=59 // pred_fallthru
          _
        // Predicated region
        $region69: #{gen_encoder_pallas.1} parent=59 // pred_check
          %p358 = pneg %p128
        $region70: #{gen_encoder_pallas.1} parent=59 // pred_check_branch
          %360 = sbr.rel (%p358) target = $region72
        $region71: #{gen_encoder_pallas.1} parent=59 // pred_region
          %361 = dma.done [#allocation5], 7680
        $region72: #{gen_encoder_pallas.1} parent=59 // pred_fallthru
          _
        %p362 = scmp.lt.s32.totalorder %s23, 1
        %s363 = scalar_select %p362, %s23, 1
        %s364 = smul.addr %s363, 3
        %s365 = smul.addr %s364, 8
        %s366 = scalar_lea.vmem %s0, %s365
        %p367 = pneg %p44
        %p368 = pneg %p41
        %p369 = pneg %p65
        %p370 = pneg %p62
        %p371 = pneg %p86
        %p372 = pneg %p83
        %p373 = pneg %p107
        %p374 = pneg %p104
        %p375 = pneg %p128
        %p376 = pneg %p125
        %p377 = pneg %p149
        %p378 = pneg %p146
        %p379 = pneg %p170
        %p380 = pneg %p167
        %p381 = pneg %p191
        %p382 = pneg %p188
        %p383 = pneg %p212
        %p384 = pneg %p209
        %p385 = pneg %p233
        %p386 = pneg %p230
        %p387 = pneg %p259
        %p388 = pneg %p256
        %p389 = scmp.lt.s32.totalorder %s23, 1
        %s390 = scalar_select %p389, %s23, 1
        %s391 = smul.addr %s390, 4
        %s392 = scalar_lea.vmem %s10, %s391
        %p393 = scmp.lt.s32.totalorder %s23, 1
        %s394 = scalar_select %p393, %s23, 1
        %s395 = smul.addr %s394, 3
        %s396 = smul.addr %s395, 8
        %s397 = scalar_lea.vmem %s0, %s396
        %p398 = scmp.lt.s32.totalorder %s23, 1
        %s399 = scalar_select %p398, %s23, 1
        %s400 = smul.addr %s399, 4
        %s401 = scalar_lea.vmem %s10, %s400
        %v402 = vld [vmem:[%s397] sm:$0xff]
        %v403 = vld [vmem:[%s397 + $0x8] sm:$0xff]
        %v404 = vld [vmem:[%s397 + $0x10] sm:$0x3f]
        %v405 = vld [vmem:[#allocation2] sm:$0xff]
        %v406 = vld [vmem:[#allocation2 + $0x8] sm:$0xff]
        %v407 = vld [vmem:[#allocation2 + $0x10] sm:$0xff]
        %v408 = vld [vmem:[#allocation2 + $0x18] sm:$0xff]
        %v409 = vld [vmem:[#allocation2 + $0x20] sm:$0xff]
        %v410 = vld [vmem:[#allocation2 + $0x28] sm:$0xff]
        %v411 = vld [vmem:[#allocation2 + $0x30] sm:$0xff]
        %v412 = vld [vmem:[#allocation2 + $0x38] sm:$0xff]
        %v413 = vld [vmem:[#allocation2 + $0x40] sm:$0xff]
        %v414 = vld [vmem:[#allocation2 + $0x48] sm:$0xff]
        %v415 = vld [vmem:[#allocation2 + $0x50] sm:$0xff]
        %v416 = vld [vmem:[#allocation2 + $0x58] sm:$0xff]
        %v417 = vld [vmem:[#allocation2 + $0x60] sm:$0xff]
        %v418 = vld [vmem:[#allocation2 + $0x68] sm:$0xff]
        %v419 = vld [vmem:[#allocation2 + $0x70] sm:$0xff]
        %v420 = vld [vmem:[#allocation2 + $0x78] sm:$0xff]
        %v421 = vld [vmem:[#allocation2 + $0x80] sm:$0xff]
        %v422 = vld [vmem:[#allocation2 + $0x88] sm:$0xff]
        %v423 = vld [vmem:[#allocation2 + $0x90] sm:$0xff]
        %v424 = vld [vmem:[#allocation2 + $0x98] sm:$0xff]
        %v425 = vld [vmem:[#allocation2 + $0xa0] sm:$0xff]
        %v426 = vld [vmem:[#allocation2 + $0xa8] sm:$0xff]
        %v427 = vld [vmem:[#allocation2 + $0xb0] sm:$0xff]
        %v428 = vld [vmem:[#allocation2 + $0xb8] sm:$0xff]
        %v429 = vld [vmem:[#allocation2 + $0xc0] sm:$0xff]
        %v430 = vld [vmem:[#allocation2 + $0xc8] sm:$0xff]
        %v431 = vld [vmem:[#allocation2 + $0xd0] sm:$0xff]
        %v432 = vld [vmem:[#allocation2 + $0xd8] sm:$0xff]
        %v433 = vld [vmem:[#allocation2 + $0xe0] sm:$0xff]
        %v434 = vld [vmem:[#allocation2 + $0xe8] sm:$0xff]
        %v435 = vld [vmem:[#allocation2 + $0xf0] sm:$0xff]
        %v436 = vld [vmem:[#allocation2 + $0xf8] sm:$0xff]
        %v437 = vld [vmem:[#allocation2 + $0x100] sm:$0xff]
        %v438 = vld [vmem:[#allocation2 + $0x108] sm:$0xff]
        %v439 = vld [vmem:[#allocation2 + $0x110] sm:$0xff]
        %v440 = vld [vmem:[#allocation2 + $0x118] sm:$0xff]
        %v441 = vld [vmem:[#allocation2 + $0x120] sm:$0xff]
        %v442 = vld [vmem:[#allocation2 + $0x128] sm:$0xff]
        %v443 = vld [vmem:[#allocation2 + $0x130] sm:$0xff]
        %v444 = vld [vmem:[#allocation2 + $0x138] sm:$0xff]
        %v445 = vld [vmem:[#allocation2 + $0x140] sm:$0xff]
        %v446 = vld [vmem:[#allocation2 + $0x148] sm:$0xff]
        %v447 = vld [vmem:[#allocation2 + $0x150] sm:$0xff]
        %v448 = vld [vmem:[#allocation2 + $0x158] sm:$0xff]
        %v449 = vld [vmem:[#allocation2 + $0x160] sm:$0xff]
        %v450 = vld [vmem:[#allocation2 + $0x168] sm:$0xff]
        %v451 = vld [vmem:[#allocation2 + $0x170] sm:$0xff]
        %v452 = vld [vmem:[#allocation2 + $0x178] sm:$0xff]
        %v453 = vld [vmem:[#allocation2 + $0x180] sm:$0xff]
        %v454 = vld [vmem:[#allocation2 + $0x188] sm:$0xff]
        %v455 = vld [vmem:[#allocation2 + $0x190] sm:$0xff]
        %v456 = vld [vmem:[#allocation2 + $0x198] sm:$0xff]
        %v457 = vld [vmem:[#allocation2 + $0x1a0] sm:$0xff]
        %v458 = vld [vmem:[#allocation2 + $0x1a8] sm:$0xff]
        %v459 = vld [vmem:[#allocation2 + $0x1b0] sm:$0xff]
        %v460 = vld [vmem:[#allocation2 + $0x1b8] sm:$0xff]
        %v461 = vld [vmem:[#allocation2 + $0x1c0] sm:$0xff]
        %v462 = vld [vmem:[#allocation2 + $0x1c8] sm:$0x3f]
        %vm466 = vcmask 1046528
        %v467 = vrot.slane %v402, 1
        %v468 = vrot.slane %v403, 1
        %v469 = vsel %vm466, %v467, %v468
        %v470 = vrot.slane %v404, 1
        %v471 = vsel %vm466, %v468, %v470
        %472 = vrot.lane.b32.xlu0 %v469, 66
        %v473 = vpop.permute.xlu0 %472
        %474 = vrot.lane.b32.xlu0 %v471, 66
        %v475 = vpop.permute.xlu0 %474
        %vm478 = vcmask 1045504
        %v479 = vrot.slane %v402, 2
        %v480 = vrot.slane %v403, 2
        %v481 = vsel %vm478, %v479, %v480
        %v482 = vrot.slane %v404, 2
        %v483 = vsel %vm478, %v480, %v482
        %484 = vrot.lane.b32.xlu0 %v481, 4
        %v485 = vpop.permute.xlu0 %484
        %486 = vrot.lane.b32.xlu0 %v483, 4
        %v487 = vpop.permute.xlu0 %486
        %vm490 = vcmask 1044480
        %v491 = vrot.slane %v402, 3
        %v492 = vrot.slane %v403, 3
        %v493 = vsel %vm490, %v491, %v492
        %v494 = vrot.slane %v404, 3
        %v495 = vsel %vm490, %v492, %v494
        %496 = vrot.lane.b32.xlu0 %v493, 70
        %v497 = vpop.permute.xlu0 %496
        %498 = vrot.lane.b32.xlu0 %v495, 70
        %v499 = vpop.permute.xlu0 %498
        %vm502 = vcmask 1043456
        %v503 = vrot.slane %v402, 4
        %v504 = vrot.slane %v403, 4
        %v505 = vsel %vm502, %v503, %v504
        %v506 = vrot.slane %v404, 4
        %v507 = vsel %vm502, %v504, %v506
        %508 = vrot.lane.b32.xlu0 %v505, 8
        %v509 = vpop.permute.xlu0 %508
        %510 = vrot.lane.b32.xlu0 %v507, 8
        %v511 = vpop.permute.xlu0 %510
        %vm514 = vcmask 1042432
        %v515 = vrot.slane %v402, 5
        %v516 = vrot.slane %v403, 5
        %v517 = vsel %vm514, %v515, %v516
        %v518 = vrot.slane %v404, 5
        %v519 = vsel %vm514, %v516, %v518
        %520 = vrot.lane.b32.xlu0 %v517, 74
        %v521 = vpop.permute.xlu0 %520
        %522 = vrot.lane.b32.xlu0 %v519, 74
        %v523 = vpop.permute.xlu0 %522
        %vm526 = vcmask 1041408
        %v527 = vrot.slane %v402, 6
        %v528 = vrot.slane %v403, 6
        %v529 = vsel %vm526, %v527, %v528
        %v530 = vrot.slane %v404, 6
        %v531 = vsel %vm526, %v528, %v530
        %532 = vrot.lane.b32.xlu0 %v529, 12
        %v533 = vpop.permute.xlu0 %532
        %534 = vrot.lane.b32.xlu0 %v531, 12
        %v535 = vpop.permute.xlu0 %534
        %vm538 = vcmask 539648
        %v539 = vsel %vm538, %v402, %v473
        %v540 = vsel %vm538, %v403, %v475
        %vm541 = vcmask 31744
        %v542 = vsel %vm541, %v473, %v485
        %v543 = vsel %vm541, %v475, %v487
        %vm544 = vcmask 572416
        %v545 = vsel %vm544, %v542, %v497
        %v546 = vsel %vm544, %v543, %v499
        %vm547 = vcmask 64512
        %v548 = vsel %vm547, %v497, %v509
        %v549 = vsel %vm547, %v499, %v511
        %vm550 = vcmask 605184
        %v551 = vsel %vm550, %v548, %v521
        %v552 = vsel %vm550, %v549, %v523
        %vm553 = vcmask 97280
        %v554 = vsel %vm553, %v521, %v533
        %v555 = vsel %vm553, %v523, %v535
        %vm556 = vcmask 637952
        %v558 = vsel %vm556, %v554, 0
        %v561 = vsel %vm556, %v555, 0
        %v564 = vsel %vm478, %v462, 0
        %566 = vmatprep.subr.mxu0 0.0
        %567 = vmatpush1.msra.mxu0 %v420
        %568 = vmatprep.subr.mxu0 0.0
        %569 = vmatpush1.msra.mxu0 %v419
        %570 = vmatprep.subr.mxu0 0.0
        %571 = vmatpush1.msra.mxu0 %v418
        %572 = vmatprep.subr.mxu0 0.0
        %573 = vmatpush1.msra.mxu0 %v417
        %574 = vmatprep.subr.mxu0 0.0
        %575 = vmatpush1.msra.mxu0 %v416
        %576 = vmatprep.subr.mxu0 0.0
        %577 = vmatpush1.msra.mxu0 %v415
        %578 = vmatprep.subr.mxu0 0.0
        %579 = vmatpush1.msra.mxu0 %v414
        %580 = vmatprep.subr.mxu0 0.0
        %581 = vmatpush1.msra.mxu0 %v413
        %582 = vmatprep.subr.mxu0 0.0
        %583 = vmatpush1.msra.mxu0 %v412
        %584 = vmatprep.subr.mxu0 0.0
        %585 = vmatpush1.msra.mxu0 %v411
        %586 = vmatprep.subr.mxu0 0.0
        %587 = vmatpush1.msra.mxu0 %v410
        %588 = vmatprep.subr.mxu0 0.0
        %589 = vmatpush1.msra.mxu0 %v409
        %590 = vmatprep.subr.mxu0 0.0
        %591 = vmatpush1.msra.mxu0 %v408
        %592 = vmatprep.subr.mxu0 0.0
        %593 = vmatpush1.msra.mxu0 %v407
        %594 = vmatprep.subr.mxu0 0.0
        %595 = vmatpush1.msra.mxu0 %v406
        %596 = vmatprep.subr.mxu0 0.0
        %597 = vmatpush1.msra.mxu0 %v405
        %598 = vmatprep.subr.mxu0 0.0
        %599 = vmatpush2.msra.mxu0 %v436
        %600 = vmatprep.subr.mxu0 0.0
        %601 = vmatpush2.msra.mxu0 %v435
        %602 = vmatprep.subr.mxu0 0.0
        %603 = vmatpush2.msra.mxu0 %v434
        %604 = vmatprep.subr.mxu0 0.0
        %605 = vmatpush2.msra.mxu0 %v433
        %606 = vmatprep.subr.mxu0 0.0
        %607 = vmatpush2.msra.mxu0 %v432
        %608 = vmatprep.subr.mxu0 0.0
        %609 = vmatpush2.msra.mxu0 %v431
        %610 = vmatprep.subr.mxu0 0.0
        %611 = vmatpush2.msra.mxu0 %v430
        %612 = vmatprep.subr.mxu0 0.0
        %613 = vmatpush2.msra.mxu0 %v429
        %614 = vmatprep.subr.mxu0 0.0
        %615 = vmatpush2.msra.mxu0 %v428
        %616 = vmatprep.subr.mxu0 0.0
        %617 = vmatpush2.msra.mxu0 %v427
        %618 = vmatprep.subr.mxu0 0.0
        %619 = vmatpush2.msra.mxu0 %v426
        %620 = vmatprep.subr.mxu0 0.0
        %621 = vmatpush2.msra.mxu0 %v425
        %622 = vmatprep.subr.mxu0 0.0
        %623 = vmatpush2.msra.mxu0 %v424
        %624 = vmatprep.subr.mxu0 0.0
        %625 = vmatpush2.msra.mxu0 %v423
        %626 = vmatprep.subr.mxu0 0.0
        %627 = vmatpush2.msra.mxu0 %v422
        %628 = vmatprep.subr.mxu0 0.0
        %629 = vmatpush2.msra.mxu0 %v421
        %630 = vmatprep.mubr.f32.mxu0 %v545
        %631 = vmatmul.mubr.f32.gmra.mxu0 %v539
        %v632 = vpop.f32.mrf.mxu0
        %v633 = vadd.f32 0.0, %v632
        %v634 = vpop.f32.mrf.mxu0
        %635 = vmatprep.mubr.f32.mxu0 %v546
        %636 = vmatmul.mubr.f32.gmra.mxu0 %v540
        %v637 = vpop.f32.mrf.mxu0
        %v638 = vadd.f32 0.0, %v637
        %v639 = vpop.f32.mrf.mxu0
        %640 = vdwg.mxu0
        %641 = vmatprep.subr.mxu0 0.0
        %642 = vmatpush1.msra.mxu0 %v452
        %643 = vmatprep.subr.mxu0 0.0
        %644 = vmatpush1.msra.mxu0 %v451
        %645 = vmatprep.subr.mxu0 0.0
        %646 = vmatpush1.msra.mxu0 %v450
        %647 = vmatprep.subr.mxu0 0.0
        %648 = vmatpush1.msra.mxu0 %v449
        %649 = vmatprep.subr.mxu0 0.0
        %650 = vmatpush1.msra.mxu0 %v448
        %651 = vmatprep.subr.mxu0 0.0
        %652 = vmatpush1.msra.mxu0 %v447
        %653 = vmatprep.subr.mxu0 0.0
        %654 = vmatpush1.msra.mxu0 %v446
        %655 = vmatprep.subr.mxu0 0.0
        %656 = vmatpush1.msra.mxu0 %v445
        %657 = vmatprep.subr.mxu0 0.0
        %658 = vmatpush1.msra.mxu0 %v444
        %659 = vmatprep.subr.mxu0 0.0
        %660 = vmatpush1.msra.mxu0 %v443
        %661 = vmatprep.subr.mxu0 0.0
        %662 = vmatpush1.msra.mxu0 %v442
        %663 = vmatprep.subr.mxu0 0.0
        %664 = vmatpush1.msra.mxu0 %v441
        %665 = vmatprep.subr.mxu0 0.0
        %666 = vmatpush1.msra.mxu0 %v440
        %667 = vmatprep.subr.mxu0 0.0
        %668 = vmatpush1.msra.mxu0 %v439
        %669 = vmatprep.subr.mxu0 0.0
        %670 = vmatpush1.msra.mxu0 %v438
        %671 = vmatprep.subr.mxu0 0.0
        %672 = vmatpush1.msra.mxu0 %v437
        %673 = vmatprep.subr.mxu0 0.0
        %674 = vmatpush2.msra.mxu0 0.0
        %675 = vmatprep.subr.mxu0 0.0
        %676 = vmatpush2.msra.mxu0 0.0
        %677 = vmatprep.subr.mxu0 0.0
        %678 = vmatpush2.msra.mxu0 0.0
        %679 = vmatprep.subr.mxu0 0.0
        %680 = vmatpush2.msra.mxu0 0.0
        %681 = vmatprep.subr.mxu0 0.0
        %682 = vmatpush2.msra.mxu0 0.0
        %683 = vmatprep.subr.mxu0 0.0
        %684 = vmatpush2.msra.mxu0 0.0
        %685 = vmatprep.subr.mxu0 0.0
        %686 = vmatpush2.msra.mxu0 %v564
        %687 = vmatprep.subr.mxu0 0.0
        %688 = vmatpush2.msra.mxu0 %v461
        %689 = vmatprep.subr.mxu0 0.0
        %690 = vmatpush2.msra.mxu0 %v460
        %691 = vmatprep.subr.mxu0 0.0
        %692 = vmatpush2.msra.mxu0 %v459
        %693 = vmatprep.subr.mxu0 0.0
        %694 = vmatpush2.msra.mxu0 %v458
        %695 = vmatprep.subr.mxu0 0.0
        %696 = vmatpush2.msra.mxu0 %v457
        %697 = vmatprep.subr.mxu0 0.0
        %698 = vmatpush2.msra.mxu0 %v456
        %699 = vmatprep.subr.mxu0 0.0
        %700 = vmatpush2.msra.mxu0 %v455
        %701 = vmatprep.subr.mxu0 0.0
        %702 = vmatpush2.msra.mxu0 %v454
        %703 = vmatprep.subr.mxu0 0.0
        %704 = vmatpush2.msra.mxu0 %v453
        %705 = vmatprep.mubr.f32.mxu0 %v558
        %706 = vmatmul.mubr.f32.gmra.mxu0 %v551
        %v707 = vpop.f32.mrf.mxu0
        %v708 = vadd.f32 %v633, %v707
        %v709 = vpop.f32.mrf.mxu0
        %710 = vmatprep.mubr.f32.mxu0 %v561
        %711 = vmatmul.mubr.f32.gmra.mxu0 %v552
        %v712 = vpop.f32.mrf.mxu0
        %v713 = vadd.f32 %v638, %v712
        %v714 = vpop.f32.mrf.mxu0
        %715 = vdwg.mxu0
        %718 = vrot.lane.b32.xlu0 %v708, 8
        %v719 = vpop.permute.xlu0 %718
        %720 = vrot.lane.b32.xlu0 %v713, 8
        %v721 = vpop.permute.xlu0 %720
        %v724 = vsel %vm547, 0.0, %v719
        %v725 = vsel %vm547, 0.0, %v721
        %v726 = vsel %vm547, %v719, 0.0
        %v727 = vsel %vm547, %v721, 0.0
        %vm732 = vcmask 1040384
        %v733 = vrot.slane %v724, 7
        %v734 = vrot.slane %v726, 7
        %v735 = vrot.slane %v725, 7
        %v736 = vsel %vm732, %v733, %v735
        %v737 = vrot.slane %v727, 7
        %v738 = vsel %vm732, %v734, %v737
        %v745 = vsel %vm732, 0.0, %v733
        %v746 = vsel %vm732, 0.0, %v734
        %v747 = vsel %vm732, %v735, 0.0
        %v748 = vsel %vm732, %v737, 0.0
        %v749 = vld [vmem:[#allocation4] sm:$0xff]
        %v750 = vld [vmem:[#allocation4 + $0x8] sm:$0xff]
        %v751 = vld [vmem:[#allocation4 + $0x10] sm:$0xff]
        %v752 = vld [vmem:[#allocation4 + $0x18] sm:$0xff]
        %v753 = vld [vmem:[#allocation4 + $0x20] sm:$0xff]
        %v754 = vld [vmem:[#allocation4 + $0x28] sm:$0xff]
        %v755 = vld [vmem:[#allocation4 + $0x30] sm:$0xff]
        %v756 = vld [vmem:[#allocation4 + $0x38] sm:$0xff]
        %v757 = vld [vmem:[#allocation4 + $0x40] sm:$0xff]
        %v758 = vld [vmem:[#allocation4 + $0x48] sm:$0xff]
        %v759 = vld [vmem:[#allocation4 + $0x50] sm:$0xff]
        %v760 = vld [vmem:[#allocation4 + $0x58] sm:$0xff]
        %v761 = vld [vmem:[#allocation4 + $0x60] sm:$0xff]
        %v762 = vld [vmem:[#allocation4 + $0x68] sm:$0xff]
        %v763 = vld [vmem:[#allocation4 + $0x70] sm:$0xff]
        %v764 = vld [vmem:[#allocation4 + $0x78] sm:$0xff]
        %v765 = vld [vmem:[#allocation4 + $0x80] sm:$0xff]
        %v766 = vld [vmem:[#allocation4 + $0x88] sm:$0xff]
        %v767 = vld [vmem:[#allocation4 + $0x90] sm:$0xff]
        %v768 = vld [vmem:[#allocation4 + $0x98] sm:$0xff]
        %v769 = vld [vmem:[#allocation4 + $0xa0] sm:$0xff]
        %v770 = vld [vmem:[#allocation4 + $0xa8] sm:$0xff]
        %v771 = vld [vmem:[#allocation4 + $0xb0] sm:$0xff]
        %v772 = vld [vmem:[#allocation4 + $0xb8] sm:$0xff]
        %v773 = vld [vmem:[#allocation4 + $0xc0] sm:$0xff]
        %v774 = vld [vmem:[#allocation4 + $0xc8] sm:$0xff]
        %v775 = vld [vmem:[#allocation4 + $0xd0] sm:$0xff]
        %v776 = vld [vmem:[#allocation4 + $0xd8] sm:$0xff]
        %v777 = vld [vmem:[#allocation4 + $0xe0] sm:$0xff]
        %v778 = vld [vmem:[#allocation4 + $0xe8] sm:$0xff]
        %v779 = vld [vmem:[#allocation4 + $0xf0] sm:$0xff]
        %v780 = vld [vmem:[#allocation4 + $0xf8] sm:$0xff]
        %v781 = vld [vmem:[#allocation4 + $0x100] sm:$0xff]
        %v782 = vld [vmem:[#allocation4 + $0x108] sm:$0xff]
        %v783 = vld [vmem:[#allocation4 + $0x110] sm:$0xff]
        %v784 = vld [vmem:[#allocation4 + $0x118] sm:$0xff]
        %v785 = vld [vmem:[#allocation4 + $0x120] sm:$0xff]
        %v786 = vld [vmem:[#allocation4 + $0x128] sm:$0xff]
        %v787 = vld [vmem:[#allocation4 + $0x130] sm:$0xff]
        %v788 = vld [vmem:[#allocation4 + $0x138] sm:$0xff]
        %v789 = vld [vmem:[#allocation4 + $0x140] sm:$0xff]
        %v790 = vld [vmem:[#allocation4 + $0x148] sm:$0xff]
        %v791 = vld [vmem:[#allocation4 + $0x150] sm:$0xff]
        %v792 = vld [vmem:[#allocation4 + $0x158] sm:$0xff]
        %v793 = vld [vmem:[#allocation4 + $0x160] sm:$0xff]
        %v794 = vld [vmem:[#allocation4 + $0x168] sm:$0xff]
        %v795 = vld [vmem:[#allocation4 + $0x170] sm:$0xff]
        %v796 = vld [vmem:[#allocation4 + $0x178] sm:$0xff]
        %v797 = vld [vmem:[#allocation4 + $0x180] sm:$0xff]
        %v798 = vld [vmem:[#allocation4 + $0x188] sm:$0xff]
        %v799 = vld [vmem:[#allocation4 + $0x190] sm:$0xff]
        %v800 = vld [vmem:[#allocation4 + $0x198] sm:$0xff]
        %v801 = vld [vmem:[#allocation4 + $0x1a0] sm:$0xff]
        %v802 = vld [vmem:[#allocation4 + $0x1a8] sm:$0xff]
        %v803 = vlaneseq
        %v804 = vshrl.u32 %v803, 7
        %v805 = vlaneseq
        %v806 = vand.u32 %v805, 127
        %v807 = vmul.u32 %v804, 2
        %vm808 = vcmp.eq.s32.totalorder %v806, %v807
        %v809 = vsel %vm808, 1, 0
        %v810 = vcvt.s32.f32 %v809
        %vm811 = vcmask 146432
        %v813 = vsel %vm811, %v810, 0
        %v816 = vsel %vm526, %v747, 0
        %v819 = vsel %vm526, %v748, 0
        %821 = vmatprep.subr.mxu0 0.0
        %822 = vmatpush1.msra.mxu0 0.0
        %823 = vmatprep.subr.mxu0 0.0
        %824 = vmatpush1.msra.mxu0 0.0
        %825 = vmatprep.subr.mxu0 0.0
        %826 = vmatpush1.msra.mxu0 0.0
        %827 = vmatprep.subr.mxu0 0.0
        %828 = vmatpush1.msra.mxu0 0.0
        %829 = vmatprep.subr.mxu0 0.0
        %830 = vmatpush1.msra.mxu0 0.0
        %831 = vmatprep.subr.mxu0 0.0
        %832 = vmatpush1.msra.mxu0 0.0
        %833 = vmatprep.subr.mxu0 0.0
        %834 = vmatpush1.msra.mxu0 0.0
        %835 = vmatprep.subr.mxu0 0.0
        %836 = vmatpush1.msra.mxu0 0.0
        %837 = vmatprep.subr.mxu0 0.0
        %838 = vmatpush1.msra.mxu0 0.0
        %839 = vmatprep.subr.mxu0 0.0
        %840 = vmatpush1.msra.mxu0 0.0
        %841 = vmatprep.subr.mxu0 0.0
        %842 = vmatpush1.msra.mxu0 0.0
        %843 = vmatprep.subr.mxu0 0.0
        %844 = vmatpush1.msra.mxu0 0.0
        %845 = vmatprep.subr.mxu0 0.0
        %846 = vmatpush1.msra.mxu0 0.0
        %847 = vmatprep.subr.mxu0 %v819
        %848 = vmatpush1.msra.mxu0 %v816
        %849 = vmatprep.subr.mxu0 %v738
        %850 = vmatpush1.msra.mxu0 %v736
        %851 = vmatprep.subr.mxu0 %v746
        %852 = vmatpush1.msra.mxu0 %v745
        %853 = vmatprep.subr.mxu0 0.0
        %854 = vmatpush2.msra.mxu0 0.0
        %855 = vmatprep.subr.mxu0 0.0
        %856 = vmatpush2.msra.mxu0 0.0
        %857 = vmatprep.subr.mxu0 0.0
        %858 = vmatpush2.msra.mxu0 0.0
        %859 = vmatprep.subr.mxu0 0.0
        %860 = vmatpush2.msra.mxu0 0.0
        %861 = vmatprep.subr.mxu0 0.0
        %862 = vmatpush2.msra.mxu0 0.0
        %863 = vmatprep.subr.mxu0 0.0
        %864 = vmatpush2.msra.mxu0 0.0
        %865 = vmatprep.subr.mxu0 0.0
        %866 = vmatpush2.msra.mxu0 0.0
        %867 = vmatprep.subr.mxu0 0.0
        %868 = vmatpush2.msra.mxu0 0.0
        %869 = vmatprep.subr.mxu0 0.0
        %870 = vmatpush2.msra.mxu0 0.0
        %871 = vmatprep.subr.mxu0 0.0
        %872 = vmatpush2.msra.mxu0 0.0
        %873 = vmatprep.subr.mxu0 0.0
        %874 = vmatpush2.msra.mxu0 0.0
        %875 = vmatprep.subr.mxu0 0.0
        %876 = vmatpush2.msra.mxu0 0.0
        %877 = vmatprep.subr.mxu0 0.0
        %878 = vmatpush2.msra.mxu0 0.0
        %879 = vmatprep.subr.mxu0 0.0
        %880 = vmatpush2.msra.mxu0 0.0
        %881 = vmatprep.subr.mxu0 0.0
        %882 = vmatpush2.msra.mxu0 0.0
        %883 = vmatprep.subr.mxu0 0.0
        %884 = vmatpush2.msra.mxu0 0.0
        %885 = vmatprep.mubr.f32.mxu0 0.0
        %886 = vmatmul.mubr.f32.gmra.mxu0 %v813
        %v887 = vpop.f32.mrf.mxu0
        %v888 = vadd.f32 0.0, %v887
        %v889 = vpop.f32.mrf.mxu0
        %v890 = vadd.f32 0.0, %v889
        %891 = vdwg.mxu0
        %v892 = vadd.s32 %v807, 1
        %vm893 = vcmp.eq.s32.totalorder %v806, %v892
        %v894 = vsel %vm893, 1, 0
        %v895 = vcvt.s32.f32 %v894
        %v897 = vsel %vm811, %v895, 0
        %899 = vmatprep.subr.mxu0 0.0
        %900 = vmatpush1.msra.mxu0 0.0
        %901 = vmatprep.subr.mxu0 0.0
        %902 = vmatpush1.msra.mxu0 0.0
        %903 = vmatprep.subr.mxu0 0.0
        %904 = vmatpush1.msra.mxu0 0.0
        %905 = vmatprep.subr.mxu0 0.0
        %906 = vmatpush1.msra.mxu0 0.0
        %907 = vmatprep.subr.mxu0 0.0
        %908 = vmatpush1.msra.mxu0 0.0
        %909 = vmatprep.subr.mxu0 0.0
        %910 = vmatpush1.msra.mxu0 0.0
        %911 = vmatprep.subr.mxu0 0.0
        %912 = vmatpush1.msra.mxu0 0.0
        %913 = vmatprep.subr.mxu0 0.0
        %914 = vmatpush1.msra.mxu0 0.0
        %915 = vmatprep.subr.mxu0 0.0
        %916 = vmatpush1.msra.mxu0 0.0
        %917 = vmatprep.subr.mxu0 0.0
        %918 = vmatpush1.msra.mxu0 0.0
        %919 = vmatprep.subr.mxu0 0.0
        %920 = vmatpush1.msra.mxu0 0.0
        %921 = vmatprep.subr.mxu0 0.0
        %922 = vmatpush1.msra.mxu0 0.0
        %923 = vmatprep.subr.mxu0 0.0
        %924 = vmatpush1.msra.mxu0 0.0
        %925 = vmatprep.subr.mxu0 %v819
        %926 = vmatpush1.msra.mxu0 %v816
        %927 = vmatprep.subr.mxu0 %v738
        %928 = vmatpush1.msra.mxu0 %v736
        %929 = vmatprep.subr.mxu0 %v746
        %930 = vmatpush1.msra.mxu0 %v745
        %931 = vmatprep.subr.mxu0 0.0
        %932 = vmatpush2.msra.mxu0 0.0
        %933 = vmatprep.subr.mxu0 0.0
        %934 = vmatpush2.msra.mxu0 0.0
        %935 = vmatprep.subr.mxu0 0.0
        %936 = vmatpush2.msra.mxu0 0.0
        %937 = vmatprep.subr.mxu0 0.0
        %938 = vmatpush2.msra.mxu0 0.0
        %939 = vmatprep.subr.mxu0 0.0
        %940 = vmatpush2.msra.mxu0 0.0
        %941 = vmatprep.subr.mxu0 0.0
        %942 = vmatpush2.msra.mxu0 0.0
        %943 = vmatprep.subr.mxu0 0.0
        %944 = vmatpush2.msra.mxu0 0.0
        %945 = vmatprep.subr.mxu0 0.0
        %946 = vmatpush2.msra.mxu0 0.0
        %947 = vmatprep.subr.mxu0 0.0
        %948 = vmatpush2.msra.mxu0 0.0
        %949 = vmatprep.subr.mxu0 0.0
        %950 = vmatpush2.msra.mxu0 0.0
        %951 = vmatprep.subr.mxu0 0.0
        %952 = vmatpush2.msra.mxu0 0.0
        %953 = vmatprep.subr.mxu0 0.0
        %954 = vmatpush2.msra.mxu0 0.0
        %955 = vmatprep.subr.mxu0 0.0
        %956 = vmatpush2.msra.mxu0 0.0
        %957 = vmatprep.subr.mxu0 0.0
        %958 = vmatpush2.msra.mxu0 0.0
        %959 = vmatprep.subr.mxu0 0.0
        %960 = vmatpush2.msra.mxu0 0.0
        %961 = vmatprep.subr.mxu0 0.0
        %962 = vmatpush2.msra.mxu0 0.0
        %963 = vmatprep.mubr.f32.mxu0 0.0
        %964 = vmatmul.mubr.f32.gmra.mxu0 %v897
        %v965 = vpop.f32.mrf.mxu0
        %v966 = vadd.f32 0.0, %v965
        %v967 = vpop.f32.mrf.mxu0
        %v968 = vadd.f32 0.0, %v967
        %969 = vdwg.mxu0
        %v970 = vadd.s32 %v807, 2
        %vm971 = vcmp.eq.s32.totalorder %v806, %v970
        %v972 = vsel %vm971, 1, 0
        %v973 = vcvt.s32.f32 %v972
        %v975 = vsel %vm811, %v973, 0
        %977 = vmatprep.subr.mxu0 0.0
        %978 = vmatpush1.msra.mxu0 0.0
        %979 = vmatprep.subr.mxu0 0.0
        %980 = vmatpush1.msra.mxu0 0.0
        %981 = vmatprep.subr.mxu0 0.0
        %982 = vmatpush1.msra.mxu0 0.0
        %983 = vmatprep.subr.mxu0 0.0
        %984 = vmatpush1.msra.mxu0 0.0
        %985 = vmatprep.subr.mxu0 0.0
        %986 = vmatpush1.msra.mxu0 0.0
        %987 = vmatprep.subr.mxu0 0.0
        %988 = vmatpush1.msra.mxu0 0.0
        %989 = vmatprep.subr.mxu0 0.0
        %990 = vmatpush1.msra.mxu0 0.0
        %991 = vmatprep.subr.mxu0 0.0
        %992 = vmatpush1.msra.mxu0 0.0
        %993 = vmatprep.subr.mxu0 0.0
        %994 = vmatpush1.msra.mxu0 0.0
        %995 = vmatprep.subr.mxu0 0.0
        %996 = vmatpush1.msra.mxu0 0.0
        %997 = vmatprep.subr.mxu0 0.0
        %998 = vmatpush1.msra.mxu0 0.0
        %999 = vmatprep.subr.mxu0 0.0
        %1000 = vmatpush1.msra.mxu0 0.0
        %1001 = vmatprep.subr.mxu0 0.0
        %1002 = vmatpush1.msra.mxu0 0.0
        %1003 = vmatprep.subr.mxu0 %v819
        %1004 = vmatpush1.msra.mxu0 %v816
        %1005 = vmatprep.subr.mxu0 %v738
        %1006 = vmatpush1.msra.mxu0 %v736
        %1007 = vmatprep.subr.mxu0 %v746
        %1008 = vmatpush1.msra.mxu0 %v745
        %1009 = vmatprep.subr.mxu0 0.0
        %1010 = vmatpush2.msra.mxu0 0.0
        %1011 = vmatprep.subr.mxu0 0.0
        %1012 = vmatpush2.msra.mxu0 0.0
        %1013 = vmatprep.subr.mxu0 0.0
        %1014 = vmatpush2.msra.mxu0 0.0
        %1015 = vmatprep.subr.mxu0 0.0
        %1016 = vmatpush2.msra.mxu0 0.0
        %1017 = vmatprep.subr.mxu0 0.0
        %1018 = vmatpush2.msra.mxu0 0.0
        %1019 = vmatprep.subr.mxu0 0.0
        %1020 = vmatpush2.msra.mxu0 0.0
        %1021 = vmatprep.subr.mxu0 0.0
        %1022 = vmatpush2.msra.mxu0 0.0
        %1023 = vmatprep.subr.mxu0 0.0
        %1024 = vmatpush2.msra.mxu0 0.0
        %1025 = vmatprep.subr.mxu0 0.0
        %1026 = vmatpush2.msra.mxu0 0.0
        %1027 = vmatprep.subr.mxu0 0.0
        %1028 = vmatpush2.msra.mxu0 0.0
        %1029 = vmatprep.subr.mxu0 0.0
        %1030 = vmatpush2.msra.mxu0 0.0
        %1031 = vmatprep.subr.mxu0 0.0
        %1032 = vmatpush2.msra.mxu0 0.0
        %1033 = vmatprep.subr.mxu0 0.0
        %1034 = vmatpush2.msra.mxu0 0.0
        %1035 = vmatprep.subr.mxu0 0.0
        %1036 = vmatpush2.msra.mxu0 0.0
        %1037 = vmatprep.subr.mxu0 0.0
        %1038 = vmatpush2.msra.mxu0 0.0
        %1039 = vmatprep.subr.mxu0 0.0
        %1040 = vmatpush2.msra.mxu0 0.0
        %1041 = vmatprep.mubr.f32.mxu0 0.0
        %1042 = vmatmul.mubr.f32.gmra.mxu0 %v975
        %v1043 = vpop.f32.mrf.mxu0
        %v1044 = vadd.f32 0.0, %v1043
        %v1045 = vpop.f32.mrf.mxu0
        %v1046 = vadd.f32 0.0, %v1045
        %1047 = vdwg.mxu0
        %1050 = vrot.lane.b32.xlu0 %v966, 16
        %v1051 = vpop.permute.xlu0 %1050
        %1052 = vrot.lane.b32.xlu0 %v968, 16
        %v1053 = vpop.permute.xlu0 %1052
        %vm1054 = vcmask 130048
        %v1055 = vsel %vm1054, %v1051, %v1053
        %1060 = vrot.lane.b32.xlu0 %v1044, 32
        %v1061 = vpop.permute.xlu0 %1060
        %1062 = vrot.lane.b32.xlu0 %v1046, 32
        %v1063 = vpop.permute.xlu0 %1062
        %vm1064 = vcmask 261120
        %v1065 = vsel %vm1064, %v1061, %v1063
        %v1067 = vsel %vm1054, %v890, %v1051
        %v1068 = vsel %vm1064, %v1055, %v1061
        %vm1069 = vcmask 392192
        %v1070 = vsel %vm1069, %v1065, 0
        %1072 = vmatprep.subr.mxu0 0.0
        %1073 = vmatpush1.msra.mxu0 %v764
        %1074 = vmatprep.subr.mxu0 0.0
        %1075 = vmatpush1.msra.mxu0 %v763
        %1076 = vmatprep.subr.mxu0 0.0
        %1077 = vmatpush1.msra.mxu0 %v762
        %1078 = vmatprep.subr.mxu0 0.0
        %1079 = vmatpush1.msra.mxu0 %v761
        %1080 = vmatprep.subr.mxu0 0.0
        %1081 = vmatpush1.msra.mxu0 %v760
        %1082 = vmatprep.subr.mxu0 0.0
        %1083 = vmatpush1.msra.mxu0 %v759
        %1084 = vmatprep.subr.mxu0 0.0
        %1085 = vmatpush1.msra.mxu0 %v758
        %1086 = vmatprep.subr.mxu0 0.0
        %1087 = vmatpush1.msra.mxu0 %v757
        %1088 = vmatprep.subr.mxu0 0.0
        %1089 = vmatpush1.msra.mxu0 %v756
        %1090 = vmatprep.subr.mxu0 0.0
        %1091 = vmatpush1.msra.mxu0 %v755
        %1092 = vmatprep.subr.mxu0 0.0
        %1093 = vmatpush1.msra.mxu0 %v754
        %1094 = vmatprep.subr.mxu0 0.0
        %1095 = vmatpush1.msra.mxu0 %v753
        %1096 = vmatprep.subr.mxu0 0.0
        %1097 = vmatpush1.msra.mxu0 %v752
        %1098 = vmatprep.subr.mxu0 0.0
        %1099 = vmatpush1.msra.mxu0 %v751
        %1100 = vmatprep.subr.mxu0 0.0
        %1101 = vmatpush1.msra.mxu0 %v750
        %1102 = vmatprep.subr.mxu0 0.0
        %1103 = vmatpush1.msra.mxu0 %v749
        %1104 = vmatprep.subr.mxu0 0.0
        %1105 = vmatpush2.msra.mxu0 %v780
        %1106 = vmatprep.subr.mxu0 0.0
        %1107 = vmatpush2.msra.mxu0 %v779
        %1108 = vmatprep.subr.mxu0 0.0
        %1109 = vmatpush2.msra.mxu0 %v778
        %1110 = vmatprep.subr.mxu0 0.0
        %1111 = vmatpush2.msra.mxu0 %v777
        %1112 = vmatprep.subr.mxu0 0.0
        %1113 = vmatpush2.msra.mxu0 %v776
        %1114 = vmatprep.subr.mxu0 0.0
        %1115 = vmatpush2.msra.mxu0 %v775
        %1116 = vmatprep.subr.mxu0 0.0
        %1117 = vmatpush2.msra.mxu0 %v774
        %1118 = vmatprep.subr.mxu0 0.0
        %1119 = vmatpush2.msra.mxu0 %v773
        %1120 = vmatprep.subr.mxu0 0.0
        %1121 = vmatpush2.msra.mxu0 %v772
        %1122 = vmatprep.subr.mxu0 0.0
        %1123 = vmatpush2.msra.mxu0 %v771
        %1124 = vmatprep.subr.mxu0 0.0
        %1125 = vmatpush2.msra.mxu0 %v770
        %1126 = vmatprep.subr.mxu0 0.0
        %1127 = vmatpush2.msra.mxu0 %v769
        %1128 = vmatprep.subr.mxu0 0.0
        %1129 = vmatpush2.msra.mxu0 %v768
        %1130 = vmatprep.subr.mxu0 0.0
        %1131 = vmatpush2.msra.mxu0 %v767
        %1132 = vmatprep.subr.mxu0 0.0
        %1133 = vmatpush2.msra.mxu0 %v766
        %1134 = vmatprep.subr.mxu0 0.0
        %1135 = vmatpush2.msra.mxu0 %v765
        %1136 = vmatprep.mubr.f32.mxu0 %v1067
        %1137 = vmatmul.mubr.f32.gmra.mxu0 %v888
        %v1138 = vpop.f32.mrf.mxu0
        %v1139 = vadd.f32 0.0, %v1138
        %v1140 = vpop.f32.mrf.mxu0
        %1141 = vdwg.mxu0
        %1142 = vmatprep.subr.mxu0 0.0
        %1143 = vmatpush1.msra.mxu0 %v796
        %1144 = vmatprep.subr.mxu0 0.0
        %1145 = vmatpush1.msra.mxu0 %v795
        %1146 = vmatprep.subr.mxu0 0.0
        %1147 = vmatpush1.msra.mxu0 %v794
        %1148 = vmatprep.subr.mxu0 0.0
        %1149 = vmatpush1.msra.mxu0 %v793
        %1150 = vmatprep.subr.mxu0 0.0
        %1151 = vmatpush1.msra.mxu0 %v792
        %1152 = vmatprep.subr.mxu0 0.0
        %1153 = vmatpush1.msra.mxu0 %v791
        %1154 = vmatprep.subr.mxu0 0.0
        %1155 = vmatpush1.msra.mxu0 %v790
        %1156 = vmatprep.subr.mxu0 0.0
        %1157 = vmatpush1.msra.mxu0 %v789
        %1158 = vmatprep.subr.mxu0 0.0
        %1159 = vmatpush1.msra.mxu0 %v788
        %1160 = vmatprep.subr.mxu0 0.0
        %1161 = vmatpush1.msra.mxu0 %v787
        %1162 = vmatprep.subr.mxu0 0.0
        %1163 = vmatpush1.msra.mxu0 %v786
        %1164 = vmatprep.subr.mxu0 0.0
        %1165 = vmatpush1.msra.mxu0 %v785
        %1166 = vmatprep.subr.mxu0 0.0
        %1167 = vmatpush1.msra.mxu0 %v784
        %1168 = vmatprep.subr.mxu0 0.0
        %1169 = vmatpush1.msra.mxu0 %v783
        %1170 = vmatprep.subr.mxu0 0.0
        %1171 = vmatpush1.msra.mxu0 %v782
        %1172 = vmatprep.subr.mxu0 0.0
        %1173 = vmatpush1.msra.mxu0 %v781
        %1174 = vmatprep.subr.mxu0 0.0
        %1175 = vmatpush2.msra.mxu0 0.0
        %1176 = vmatprep.subr.mxu0 0.0
        %1177 = vmatpush2.msra.mxu0 0.0
        %1178 = vmatprep.subr.mxu0 0.0
        %1179 = vmatpush2.msra.mxu0 0.0
        %1180 = vmatprep.subr.mxu0 0.0
        %1181 = vmatpush2.msra.mxu0 0.0
        %1182 = vmatprep.subr.mxu0 0.0
        %1183 = vmatpush2.msra.mxu0 0.0
        %1184 = vmatprep.subr.mxu0 0.0
        %1185 = vmatpush2.msra.mxu0 0.0
        %1186 = vmatprep.subr.mxu0 0.0
        %1187 = vmatpush2.msra.mxu0 0.0
        %1188 = vmatprep.subr.mxu0 0.0
        %1189 = vmatpush2.msra.mxu0 0.0
        %1190 = vmatprep.subr.mxu0 0.0
        %1191 = vmatpush2.msra.mxu0 0.0
        %1192 = vmatprep.subr.mxu0 0.0
        %1193 = vmatpush2.msra.mxu0 0.0
        %1194 = vmatprep.subr.mxu0 0.0
        %1195 = vmatpush2.msra.mxu0 %v802
        %1196 = vmatprep.subr.mxu0 0.0
        %1197 = vmatpush2.msra.mxu0 %v801
        %1198 = vmatprep.subr.mxu0 0.0
        %1199 = vmatpush2.msra.mxu0 %v800
        %1200 = vmatprep.subr.mxu0 0.0
        %1201 = vmatpush2.msra.mxu0 %v799
        %1202 = vmatprep.subr.mxu0 0.0
        %1203 = vmatpush2.msra.mxu0 %v798
        %1204 = vmatprep.subr.mxu0 0.0
        %1205 = vmatpush2.msra.mxu0 %v797
        %1206 = vmatprep.mubr.f32.mxu0 %v1070
        %1207 = vmatmul.mubr.f32.gmra.mxu0 %v1068
        %v1208 = vpop.f32.mrf.mxu0
        %v1209 = vadd.f32 %v1139, %v1208
        %v1210 = vpop.f32.mrf.mxu0
        %1211 = vdwg.mxu0
        %v1212 = vld [vmem:[%s3] sm:$0x7]
        %v1213 = vrot.slane %v1209, 4
        %v1214 = vadd.f32 %v1209, %v1213
        %v1215 = vrot.slane %v1214, 2
        %v1216 = vadd.f32 %v1214, %v1215
        %v1217 = vrot.slane %v1216, 1
        %v1218 = vadd.f32 %v1216, %v1217
        %1220 = vrot.lane.b32.xlu0 %v1218, 112
        %v1221 = vpop.permute.xlu0 %1220
        %v1223 = vadd.f32 %v1218, %v1221
        %1224 = vrot.lane.b32.xlu0 %v1218, 96
        %v1225 = vpop.permute.xlu0 %1224
        %v1227 = vadd.f32 %v1223, %v1225
        %1228 = vrot.lane.b32.xlu0 %v1218, 80
        %v1229 = vpop.permute.xlu0 %1228
        %v1231 = vadd.f32 %v1227, %v1229
        %1232 = vrot.lane.b32.xlu0 %v1218, 64
        %v1233 = vpop.permute.xlu0 %1232
        %v1235 = vadd.f32 %v1231, %v1233
        %1236 = vrot.lane.b32.xlu0 %v1218, 48
        %v1237 = vpop.permute.xlu0 %1236
        %v1239 = vadd.f32 %v1235, %v1237
        %1240 = vrot.lane.b32.xlu0 %v1218, 32
        %v1241 = vpop.permute.xlu0 %1240
        %v1243 = vadd.f32 %v1239, %v1241
        %1244 = vrot.lane.b32.xlu0 %v1218, 16
        %v1245 = vpop.permute.xlu0 %1244
        %v1247 = vadd.f32 %v1243, %v1245
        %v1248 = vrcp.pop 64.0
        %v1249 = vmul.f32 %v1247, %v1248
        %1251 = vrot.lane.b32.xlu0 %v1249, 16
        %v1252 = vpop.permute.xlu0 %1251
        %1254 = vrot.lane.b32.xlu0 %v1249, 32
        %v1255 = vpop.permute.xlu0 %1254
        %1257 = vrot.lane.b32.xlu0 %v1249, 48
        %v1258 = vpop.permute.xlu0 %1257
        %1260 = vrot.lane.b32.xlu0 %v1249, 64
        %v1261 = vpop.permute.xlu0 %1260
        %1263 = vrot.lane.b32.xlu0 %v1249, 80
        %v1264 = vpop.permute.xlu0 %1263
        %1266 = vrot.lane.b32.xlu0 %v1249, 96
        %v1267 = vpop.permute.xlu0 %1266
        %1269 = vrot.lane.b32.xlu0 %v1249, 112
        %v1270 = vpop.permute.xlu0 %1269
        %v1272 = vsel %vm1054, %v1249, %v1252
        %v1273 = vsel %vm1064, %v1272, %v1255
        %v1274 = vsel %vm1069, %v1273, %v1258
        %vm1275 = vcmask 523264
        %v1276 = vsel %vm1275, %v1274, %v1261
        %vm1277 = vcmask 654336
        %v1278 = vsel %vm1277, %v1276, %v1264
        %vm1279 = vcmask 785408
        %v1280 = vsel %vm1279, %v1278, %v1267
        %vm1281 = vcmask 916480
        %v1282 = vsel %vm1281, %v1280, %v1270
        %v1283 = vlaneseq
        %v1284 = vshrl.u32 %v1283, 7
        %v1285 = vsub.s32 0, %v1284
        %v1286 = vrot.slane %v1282, %v1285
        %v1287 = vsub.f32 %v1209, %v1286
        %v1288 = vmul.f32 %v1287, %v1287
        %v1289 = vrot.slane %v1288, 4
        %v1290 = vadd.f32 %v1288, %v1289
        %v1291 = vrot.slane %v1290, 2
        %v1292 = vadd.f32 %v1290, %v1291
        %v1293 = vrot.slane %v1292, 1
        %v1294 = vadd.f32 %v1292, %v1293
        %1296 = vrot.lane.b32.xlu0 %v1294, 112
        %v1297 = vpop.permute.xlu0 %1296
        %v1299 = vadd.f32 %v1294, %v1297
        %1300 = vrot.lane.b32.xlu0 %v1294, 96
        %v1301 = vpop.permute.xlu0 %1300
        %v1303 = vadd.f32 %v1299, %v1301
        %1304 = vrot.lane.b32.xlu0 %v1294, 80
        %v1305 = vpop.permute.xlu0 %1304
        %v1307 = vadd.f32 %v1303, %v1305
        %1308 = vrot.lane.b32.xlu0 %v1294, 64
        %v1309 = vpop.permute.xlu0 %1308
        %v1311 = vadd.f32 %v1307, %v1309
        %1312 = vrot.lane.b32.xlu0 %v1294, 48
        %v1313 = vpop.permute.xlu0 %1312
        %v1315 = vadd.f32 %v1311, %v1313
        %1316 = vrot.lane.b32.xlu0 %v1294, 32
        %v1317 = vpop.permute.xlu0 %1316
        %v1319 = vadd.f32 %v1315, %v1317
        %1320 = vrot.lane.b32.xlu0 %v1294, 16
        %v1321 = vpop.permute.xlu0 %1320
        %v1323 = vadd.f32 %v1319, %v1321
        %v1324 = vrcp.pop 63.0
        %v1325 = vmul.f32 %v1323, %v1324
        %v1326 = vadd.f32 %v1325, 1e-05
        %v1327 = vrsqrt.pop %v1326
        %1329 = vrot.lane.b32.xlu0 %v1327, 16
        %v1330 = vpop.permute.xlu0 %1329
        %1332 = vrot.lane.b32.xlu0 %v1327, 32
        %v1333 = vpop.permute.xlu0 %1332
        %1335 = vrot.lane.b32.xlu0 %v1327, 48
        %v1336 = vpop.permute.xlu0 %1335
        %1338 = vrot.lane.b32.xlu0 %v1327, 64
        %v1339 = vpop.permute.xlu0 %1338
        %1341 = vrot.lane.b32.xlu0 %v1327, 80
        %v1342 = vpop.permute.xlu0 %1341
        %1344 = vrot.lane.b32.xlu0 %v1327, 96
        %v1345 = vpop.permute.xlu0 %1344
        %1347 = vrot.lane.b32.xlu0 %v1327, 112
        %v1348 = vpop.permute.xlu0 %1347
        %v1350 = vsel %vm1054, %v1327, %v1330
        %v1351 = vsel %vm1064, %v1350, %v1333
        %v1352 = vsel %vm1069, %v1351, %v1336
        %v1353 = vsel %vm1275, %v1352, %v1339
        %v1354 = vsel %vm1277, %v1353, %v1342
        %v1355 = vsel %vm1279, %v1354, %v1345
        %v1356 = vsel %vm1281, %v1355, %v1348
        %v1357 = vlaneseq
        %v1358 = vshrl.u32 %v1357, 7
        %v1359 = vsub.s32 0, %v1358
        %v1360 = vrot.slane %v1356, %v1359
        %v1361 = vmul.f32 %v1287, %v1360
        %1362 = vadd.xlane.f32.xlu0 %v1209
        %v1363 = vpop.xlane.xlu0 %1362
        %v1364 = vrot.slane %v1363, 4
        %v1365 = vadd.f32 %v1363, %v1364
        %v1366 = vrot.slane %v1365, 2
        %v1367 = vadd.f32 %v1365, %v1366
        %v1368 = vrot.slane %v1367, 1
        %v1369 = vadd.f32 %v1367, %v1368
        %s1370 = vtos %v1369
        %v1371 = vstv %s1370
        %v1372 = vrcp.pop 1024.0
        %v1373 = vmul.f32 %v1371, %v1372
        %v1374 = vsub.f32 %v1209, %v1373
        %v1375 = vmul.f32 %v1374, %v1374
        %1376 = vadd.xlane.f32.xlu0 %v1375
        %v1377 = vpop.xlane.xlu0 %1376
        %v1378 = vrot.slane %v1377, 4
        %v1379 = vadd.f32 %v1377, %v1378
        %v1380 = vrot.slane %v1379, 2
        %v1381 = vadd.f32 %v1379, %v1380
        %v1382 = vrot.slane %v1381, 1
        %v1383 = vadd.f32 %v1381, %v1382
        %s1384 = vtos %v1383
        %v1385 = vstv %s1384
        %v1386 = vrcp.pop 1023.0
        %v1387 = vmul.f32 %v1385, %v1386
        %v1388 = vadd.f32 %v1387, 1e-05
        %v1389 = vrsqrt.pop %v1388
        %v1390 = vmul.f32 %v1374, %v1389
        %1392 = vrot.lane.b32.xlu0 %v1212, 16
        %v1393 = vpop.permute.xlu0 %1392
        %1395 = vrot.lane.b32.xlu0 %v1212, 32
        %v1396 = vpop.permute.xlu0 %1395
        %1398 = vrot.lane.b32.xlu0 %v1212, 48
        %v1399 = vpop.permute.xlu0 %1398
        %1401 = vrot.lane.b32.xlu0 %v1212, 64
        %v1402 = vpop.permute.xlu0 %1401
        %1404 = vrot.lane.b32.xlu0 %v1212, 80
        %v1405 = vpop.permute.xlu0 %1404
        %1407 = vrot.lane.b32.xlu0 %v1212, 96
        %v1408 = vpop.permute.xlu0 %1407
        %1410 = vrot.lane.b32.xlu0 %v1212, 112
        %v1411 = vpop.permute.xlu0 %1410
        %v1413 = vsel %vm1054, %v1212, %v1393
        %v1414 = vsel %vm1064, %v1413, %v1396
        %v1415 = vsel %vm1069, %v1414, %v1399
        %v1416 = vsel %vm1275, %v1415, %v1402
        %v1417 = vsel %vm1277, %v1416, %v1405
        %v1418 = vsel %vm1279, %v1417, %v1408
        %v1419 = vsel %vm1281, %v1418, %v1411
        %v1420 = vlaneseq
        %v1421 = vshrl.u32 %v1420, 7
        %v1422 = vsub.s32 0, %v1421
        %v1423 = vrot.slane %v1419, %v1422
        %v1424 = vmul.f32 %v1423, %v1361
        %v1425 = vsub.f32 1.0, %v1419
        %v1426 = vlaneseq
        %v1427 = vshrl.u32 %v1426, 7
        %v1428 = vsub.s32 0, %v1427
        %v1429 = vrot.slane %v1425, %v1428
        %v1430 = vmul.f32 %v1429, %v1390
        %v1431 = vadd.f32 %v1424, %v1430
        %v1432 = vlaneseq
        %v1433 = vshrl.u32 %v1432, 7
        %v1434 = vsub.s32 1, %v1433
        %v1435 = vrot.slane %v1419, %v1434
        %v1436 = vmul.f32 %v1431, %v1435
        %v1437 = vlaneseq
        %v1438 = vshrl.u32 %v1437, 7
        %v1439 = vsub.s32 2, %v1438
        %v1440 = vrot.slane %v1419, %v1439
        %v1441 = vadd.f32 %v1436, %v1440
        %v1442 = vmax.f32 %v1441, 0.0
        %1444 = vrot.lane.b32.xlu0 %v1442, 16
        %v1445 = vpop.permute.xlu0 %1444
        %v1447 = vsel %vm1054, 0.0, %v1445
        %v1448 = vsel %vm1054, %v1445, 0.0
        %v1451 = vrot.slane %v1447, 7
        %v1452 = vrot.slane %v1448, 7
        %v1455 = vsel %vm732, 0.0, %v1451
        %v1456 = vsel %vm732, 0.0, %v1452
        %v1457 = vsel %vm732, %v1451, 0.0
        %v1458 = vsel %vm732, %v1452, 0.0
        %v1459 = vld [vmem:[#allocation6] sm:$0xff]
        %v1460 = vld [vmem:[#allocation6 + $0x8] sm:$0xff]
        %v1461 = vld [vmem:[#allocation6 + $0x10] sm:$0xff]
        %v1462 = vld [vmem:[#allocation6 + $0x18] sm:$0xff]
        %v1463 = vld [vmem:[#allocation6 + $0x20] sm:$0xff]
        %v1464 = vld [vmem:[#allocation6 + $0x28] sm:$0xff]
        %v1465 = vld [vmem:[#allocation6 + $0x30] sm:$0xff]
        %v1466 = vld [vmem:[#allocation6 + $0x38] sm:$0xff]
        %v1467 = vld [vmem:[#allocation6 + $0x40] sm:$0xff]
        %v1468 = vld [vmem:[#allocation6 + $0x48] sm:$0xff]
        %v1469 = vld [vmem:[#allocation6 + $0x50] sm:$0xff]
        %v1470 = vld [vmem:[#allocation6 + $0x58] sm:$0xff]
        %v1471 = vld [vmem:[#allocation6 + $0x60] sm:$0xff]
        %v1472 = vld [vmem:[#allocation6 + $0x68] sm:$0xff]
        %v1473 = vld [vmem:[#allocation6 + $0x70] sm:$0xff]
        %v1474 = vld [vmem:[#allocation6 + $0x78] sm:$0xff]
        %v1475 = vld [vmem:[#allocation6 + $0x80] sm:$0xff]
        %v1476 = vld [vmem:[#allocation6 + $0x88] sm:$0xff]
        %v1477 = vld [vmem:[#allocation6 + $0x90] sm:$0xff]
        %v1478 = vld [vmem:[#allocation6 + $0x98] sm:$0xff]
        %v1479 = vld [vmem:[#allocation6 + $0xa0] sm:$0xff]
        %v1480 = vld [vmem:[#allocation6 + $0xa8] sm:$0xff]
        %v1481 = vld [vmem:[#allocation6 + $0xb0] sm:$0xff]
        %v1482 = vld [vmem:[#allocation6 + $0xb8] sm:$0xff]
        %v1483 = vld [vmem:[#allocation6 + $0xc0] sm:$0xff]
        %v1484 = vld [vmem:[#allocation6 + $0xc8] sm:$0xff]
        %v1485 = vld [vmem:[#allocation6 + $0xd0] sm:$0xff]
        %v1486 = vld [vmem:[#allocation6 + $0xd8] sm:$0xff]
        %v1487 = vld [vmem:[#allocation6 + $0xe0] sm:$0xff]
        %v1488 = vld [vmem:[#allocation6 + $0xe8] sm:$0xff]
        %v1489 = vld [vmem:[#allocation6 + $0xf0] sm:$0xff]
        %v1490 = vld [vmem:[#allocation6 + $0xf8] sm:$0xff]
        %v1491 = vld [vmem:[#allocation6 + $0x100] sm:$0xff]
        %v1492 = vld [vmem:[#allocation6 + $0x108] sm:$0xff]
        %v1493 = vld [vmem:[#allocation6 + $0x110] sm:$0xff]
        %v1494 = vld [vmem:[#allocation6 + $0x118] sm:$0xff]
        %v1495 = vld [vmem:[#allocation6 + $0x120] sm:$0xff]
        %v1496 = vld [vmem:[#allocation6 + $0x128] sm:$0xff]
        %v1497 = vld [vmem:[#allocation6 + $0x130] sm:$0xff]
        %v1498 = vld [vmem:[#allocation6 + $0x138] sm:$0xff]
        %v1499 = vld [vmem:[#allocation6 + $0x140] sm:$0xff]
        %v1500 = vld [vmem:[#allocation6 + $0x148] sm:$0xff]
        %v1501 = vld [vmem:[#allocation6 + $0x150] sm:$0xff]
        %v1502 = vld [vmem:[#allocation6 + $0x158] sm:$0xff]
        %v1503 = vld [vmem:[#allocation6 + $0x160] sm:$0xff]
        %v1504 = vld [vmem:[#allocation6 + $0x168] sm:$0xff]
        %v1505 = vld [vmem:[#allocation6 + $0x170] sm:$0xff]
        %v1506 = vld [vmem:[#allocation6 + $0x178] sm:$0xff]
        %v1507 = vld [vmem:[#allocation6 + $0x180] sm:$0xff]
        %v1508 = vld [vmem:[#allocation6 + $0x188] sm:$0xff]
        %v1509 = vld [vmem:[#allocation6 + $0x190] sm:$0xff]
        %v1510 = vld [vmem:[#allocation6 + $0x198] sm:$0xff]
        %v1511 = vld [vmem:[#allocation6 + $0x1a0] sm:$0xff]
        %v1512 = vld [vmem:[#allocation6 + $0x1a8] sm:$0xff]
        %v1513 = vld [vmem:[#allocation6 + $0x1b0] sm:$0xff]
        %v1514 = vld [vmem:[#allocation6 + $0x1b8] sm:$0xff]
        %v1515 = vld [vmem:[#allocation6 + $0x1c0] sm:$0xff]
        %v1516 = vld [vmem:[#allocation6 + $0x1c8] sm:$0xff]
        %v1517 = vld [vmem:[#allocation6 + $0x1d0] sm:$0xff]
        %v1518 = vld [vmem:[#allocation6 + $0x1d8] sm:$0xff]
        %vm1519 = vcmask 80896
        %v1520 = vsel %vm1519, %v810, 0
        %v1523 = vsel %vm526, %v1457, 0
        %v1526 = vsel %vm526, %v1458, 0
        %1528 = vmatprep.subr.mxu0 0.0
        %1529 = vmatpush1.msra.mxu0 0.0
        %1530 = vmatprep.subr.mxu0 0.0
        %1531 = vmatpush1.msra.mxu0 0.0
        %1532 = vmatprep.subr.mxu0 0.0
        %1533 = vmatpush1.msra.mxu0 0.0
        %1534 = vmatprep.subr.mxu0 0.0
        %1535 = vmatpush1.msra.mxu0 0.0
        %1536 = vmatprep.subr.mxu0 0.0
        %1537 = vmatpush1.msra.mxu0 0.0
        %1538 = vmatprep.subr.mxu0 0.0
        %1539 = vmatpush1.msra.mxu0 0.0
        %1540 = vmatprep.subr.mxu0 0.0
        %1541 = vmatpush1.msra.mxu0 0.0
        %1542 = vmatprep.subr.mxu0 0.0
        %1543 = vmatpush1.msra.mxu0 0.0
        %1544 = vmatprep.subr.mxu0 0.0
        %1545 = vmatpush1.msra.mxu0 0.0
        %1546 = vmatprep.subr.mxu0 0.0
        %1547 = vmatpush1.msra.mxu0 0.0
        %1548 = vmatprep.subr.mxu0 0.0
        %1549 = vmatpush1.msra.mxu0 0.0
        %1550 = vmatprep.subr.mxu0 0.0
        %1551 = vmatpush1.msra.mxu0 0.0
        %1552 = vmatprep.subr.mxu0 0.0
        %1553 = vmatpush1.msra.mxu0 0.0
        %1554 = vmatprep.subr.mxu0 0.0
        %1555 = vmatpush1.msra.mxu0 0.0
        %1556 = vmatprep.subr.mxu0 %v1526
        %1557 = vmatpush1.msra.mxu0 %v1523
        %1558 = vmatprep.subr.mxu0 %v1456
        %1559 = vmatpush1.msra.mxu0 %v1455
        %1560 = vmatprep.subr.mxu0 0.0
        %1561 = vmatpush2.msra.mxu0 0.0
        %1562 = vmatprep.subr.mxu0 0.0
        %1563 = vmatpush2.msra.mxu0 0.0
        %1564 = vmatprep.subr.mxu0 0.0
        %1565 = vmatpush2.msra.mxu0 0.0
        %1566 = vmatprep.subr.mxu0 0.0
        %1567 = vmatpush2.msra.mxu0 0.0
        %1568 = vmatprep.subr.mxu0 0.0
        %1569 = vmatpush2.msra.mxu0 0.0
        %1570 = vmatprep.subr.mxu0 0.0
        %1571 = vmatpush2.msra.mxu0 0.0
        %1572 = vmatprep.subr.mxu0 0.0
        %1573 = vmatpush2.msra.mxu0 0.0
        %1574 = vmatprep.subr.mxu0 0.0
        %1575 = vmatpush2.msra.mxu0 0.0
        %1576 = vmatprep.subr.mxu0 0.0
        %1577 = vmatpush2.msra.mxu0 0.0
        %1578 = vmatprep.subr.mxu0 0.0
        %1579 = vmatpush2.msra.mxu0 0.0
        %1580 = vmatprep.subr.mxu0 0.0
        %1581 = vmatpush2.msra.mxu0 0.0
        %1582 = vmatprep.subr.mxu0 0.0
        %1583 = vmatpush2.msra.mxu0 0.0
        %1584 = vmatprep.subr.mxu0 0.0
        %1585 = vmatpush2.msra.mxu0 0.0
        %1586 = vmatprep.subr.mxu0 0.0
        %1587 = vmatpush2.msra.mxu0 0.0
        %1588 = vmatprep.subr.mxu0 0.0
        %1589 = vmatpush2.msra.mxu0 0.0
        %1590 = vmatprep.subr.mxu0 0.0
        %1591 = vmatpush2.msra.mxu0 0.0
        %1592 = vmatprep.mubr.f32.mxu0 0.0
        %1593 = vmatmul.mubr.f32.gmra.mxu0 %v1520
        %v1594 = vpop.f32.mrf.mxu0
        %v1595 = vadd.f32 0.0, %v1594
        %v1596 = vpop.f32.mrf.mxu0
        %v1597 = vadd.f32 0.0, %v1596
        %1598 = vdwg.mxu0
        %v1599 = vsel %vm1519, %v895, 0
        %1601 = vmatprep.subr.mxu0 0.0
        %1602 = vmatpush1.msra.mxu0 0.0
        %1603 = vmatprep.subr.mxu0 0.0
        %1604 = vmatpush1.msra.mxu0 0.0
        %1605 = vmatprep.subr.mxu0 0.0
        %1606 = vmatpush1.msra.mxu0 0.0
        %1607 = vmatprep.subr.mxu0 0.0
        %1608 = vmatpush1.msra.mxu0 0.0
        %1609 = vmatprep.subr.mxu0 0.0
        %1610 = vmatpush1.msra.mxu0 0.0
        %1611 = vmatprep.subr.mxu0 0.0
        %1612 = vmatpush1.msra.mxu0 0.0
        %1613 = vmatprep.subr.mxu0 0.0
        %1614 = vmatpush1.msra.mxu0 0.0
        %1615 = vmatprep.subr.mxu0 0.0
        %1616 = vmatpush1.msra.mxu0 0.0
        %1617 = vmatprep.subr.mxu0 0.0
        %1618 = vmatpush1.msra.mxu0 0.0
        %1619 = vmatprep.subr.mxu0 0.0
        %1620 = vmatpush1.msra.mxu0 0.0
        %1621 = vmatprep.subr.mxu0 0.0
        %1622 = vmatpush1.msra.mxu0 0.0
        %1623 = vmatprep.subr.mxu0 0.0
        %1624 = vmatpush1.msra.mxu0 0.0
        %1625 = vmatprep.subr.mxu0 0.0
        %1626 = vmatpush1.msra.mxu0 0.0
        %1627 = vmatprep.subr.mxu0 0.0
        %1628 = vmatpush1.msra.mxu0 0.0
        %1629 = vmatprep.subr.mxu0 %v1526
        %1630 = vmatpush1.msra.mxu0 %v1523
        %1631 = vmatprep.subr.mxu0 %v1456
        %1632 = vmatpush1.msra.mxu0 %v1455
        %1633 = vmatprep.subr.mxu0 0.0
        %1634 = vmatpush2.msra.mxu0 0.0
        %1635 = vmatprep.subr.mxu0 0.0
        %1636 = vmatpush2.msra.mxu0 0.0
        %1637 = vmatprep.subr.mxu0 0.0
        %1638 = vmatpush2.msra.mxu0 0.0
        %1639 = vmatprep.subr.mxu0 0.0
        %1640 = vmatpush2.msra.mxu0 0.0
        %1641 = vmatprep.subr.mxu0 0.0
        %1642 = vmatpush2.msra.mxu0 0.0
        %1643 = vmatprep.subr.mxu0 0.0
        %1644 = vmatpush2.msra.mxu0 0.0
        %1645 = vmatprep.subr.mxu0 0.0
        %1646 = vmatpush2.msra.mxu0 0.0
        %1647 = vmatprep.subr.mxu0 0.0
        %1648 = vmatpush2.msra.mxu0 0.0
        %1649 = vmatprep.subr.mxu0 0.0
        %1650 = vmatpush2.msra.mxu0 0.0
        %1651 = vmatprep.subr.mxu0 0.0
        %1652 = vmatpush2.msra.mxu0 0.0
        %1653 = vmatprep.subr.mxu0 0.0
        %1654 = vmatpush2.msra.mxu0 0.0
        %1655 = vmatprep.subr.mxu0 0.0
        %1656 = vmatpush2.msra.mxu0 0.0
        %1657 = vmatprep.subr.mxu0 0.0
        %1658 = vmatpush2.msra.mxu0 0.0
        %1659 = vmatprep.subr.mxu0 0.0
        %1660 = vmatpush2.msra.mxu0 0.0
        %1661 = vmatprep.subr.mxu0 0.0
        %1662 = vmatpush2.msra.mxu0 0.0
        %1663 = vmatprep.subr.mxu0 0.0
        %1664 = vmatpush2.msra.mxu0 0.0
        %1665 = vmatprep.mubr.f32.mxu0 0.0
        %1666 = vmatmul.mubr.f32.gmra.mxu0 %v1599
        %v1667 = vpop.f32.mrf.mxu0
        %v1668 = vadd.f32 0.0, %v1667
        %v1669 = vpop.f32.mrf.mxu0
        %v1670 = vadd.f32 0.0, %v1669
        %1671 = vdwg.mxu0
        %v1672 = vsel %vm1519, %v973, 0
        %1674 = vmatprep.subr.mxu0 0.0
        %1675 = vmatpush1.msra.mxu0 0.0
        %1676 = vmatprep.subr.mxu0 0.0
        %1677 = vmatpush1.msra.mxu0 0.0
        %1678 = vmatprep.subr.mxu0 0.0
        %1679 = vmatpush1.msra.mxu0 0.0
        %1680 = vmatprep.subr.mxu0 0.0
        %1681 = vmatpush1.msra.mxu0 0.0
        %1682 = vmatprep.subr.mxu0 0.0
        %1683 = vmatpush1.msra.mxu0 0.0
        %1684 = vmatprep.subr.mxu0 0.0
        %1685 = vmatpush1.msra.mxu0 0.0
        %1686 = vmatprep.subr.mxu0 0.0
        %1687 = vmatpush1.msra.mxu0 0.0
        %1688 = vmatprep.subr.mxu0 0.0
        %1689 = vmatpush1.msra.mxu0 0.0
        %1690 = vmatprep.subr.mxu0 0.0
        %1691 = vmatpush1.msra.mxu0 0.0
        %1692 = vmatprep.subr.mxu0 0.0
        %1693 = vmatpush1.msra.mxu0 0.0
        %1694 = vmatprep.subr.mxu0 0.0
        %1695 = vmatpush1.msra.mxu0 0.0
        %1696 = vmatprep.subr.mxu0 0.0
        %1697 = vmatpush1.msra.mxu0 0.0
        %1698 = vmatprep.subr.mxu0 0.0
        %1699 = vmatpush1.msra.mxu0 0.0
        %1700 = vmatprep.subr.mxu0 0.0
        %1701 = vmatpush1.msra.mxu0 0.0
        %1702 = vmatprep.subr.mxu0 %v1526
        %1703 = vmatpush1.msra.mxu0 %v1523
        %1704 = vmatprep.subr.mxu0 %v1456
        %1705 = vmatpush1.msra.mxu0 %v1455
        %1706 = vmatprep.subr.mxu0 0.0
        %1707 = vmatpush2.msra.mxu0 0.0
        %1708 = vmatprep.subr.mxu0 0.0
        %1709 = vmatpush2.msra.mxu0 0.0
        %1710 = vmatprep.subr.mxu0 0.0
        %1711 = vmatpush2.msra.mxu0 0.0
        %1712 = vmatprep.subr.mxu0 0.0
        %1713 = vmatpush2.msra.mxu0 0.0
        %1714 = vmatprep.subr.mxu0 0.0
        %1715 = vmatpush2.msra.mxu0 0.0
        %1716 = vmatprep.subr.mxu0 0.0
        %1717 = vmatpush2.msra.mxu0 0.0
        %1718 = vmatprep.subr.mxu0 0.0
        %1719 = vmatpush2.msra.mxu0 0.0
        %1720 = vmatprep.subr.mxu0 0.0
        %1721 = vmatpush2.msra.mxu0 0.0
        %1722 = vmatprep.subr.mxu0 0.0
        %1723 = vmatpush2.msra.mxu0 0.0
        %1724 = vmatprep.subr.mxu0 0.0
        %1725 = vmatpush2.msra.mxu0 0.0
        %1726 = vmatprep.subr.mxu0 0.0
        %1727 = vmatpush2.msra.mxu0 0.0
        %1728 = vmatprep.subr.mxu0 0.0
        %1729 = vmatpush2.msra.mxu0 0.0
        %1730 = vmatprep.subr.mxu0 0.0
        %1731 = vmatpush2.msra.mxu0 0.0
        %1732 = vmatprep.subr.mxu0 0.0
        %1733 = vmatpush2.msra.mxu0 0.0
        %1734 = vmatprep.subr.mxu0 0.0
        %1735 = vmatpush2.msra.mxu0 0.0
        %1736 = vmatprep.subr.mxu0 0.0
        %1737 = vmatpush2.msra.mxu0 0.0
        %1738 = vmatprep.mubr.f32.mxu0 0.0
        %1739 = vmatmul.mubr.f32.gmra.mxu0 %v1672
        %v1740 = vpop.f32.mrf.mxu0
        %v1741 = vadd.f32 0.0, %v1740
        %v1742 = vpop.f32.mrf.mxu0
        %v1743 = vadd.f32 0.0, %v1742
        %1744 = vdwg.mxu0
        %1747 = vrot.lane.b32.xlu0 %v1668, 32
        %v1748 = vpop.permute.xlu0 %1747
        %1749 = vrot.lane.b32.xlu0 %v1670, 32
        %v1750 = vpop.permute.xlu0 %1749
        %v1751 = vsel %vm1064, %v1748, %v1750
        %1756 = vrot.lane.b32.xlu0 %v1741, 64
        %v1757 = vpop.permute.xlu0 %1756
        %1758 = vrot.lane.b32.xlu0 %v1743, 64
        %v1759 = vpop.permute.xlu0 %1758
        %v1760 = vsel %vm1275, %v1757, %v1759
        %v1762 = vsel %vm1064, %v1597, %v1748
        %v1763 = vsel %vm1275, %v1751, %v1757
        %v1764 = vsel %vm1279, %v1760, 0
        %1766 = vmatprep.subr.mxu0 0.0
        %1767 = vmatpush1.msra.mxu0 %v1474
        %1768 = vmatprep.subr.mxu0 0.0
        %1769 = vmatpush1.msra.mxu0 %v1473
        %1770 = vmatprep.subr.mxu0 0.0
        %1771 = vmatpush1.msra.mxu0 %v1472
        %1772 = vmatprep.subr.mxu0 0.0
        %1773 = vmatpush1.msra.mxu0 %v1471
        %1774 = vmatprep.subr.mxu0 0.0
        %1775 = vmatpush1.msra.mxu0 %v1470
        %1776 = vmatprep.subr.mxu0 0.0
        %1777 = vmatpush1.msra.mxu0 %v1469
        %1778 = vmatprep.subr.mxu0 0.0
        %1779 = vmatpush1.msra.mxu0 %v1468
        %1780 = vmatprep.subr.mxu0 0.0
        %1781 = vmatpush1.msra.mxu0 %v1467
        %1782 = vmatprep.subr.mxu0 0.0
        %1783 = vmatpush1.msra.mxu0 %v1466
        %1784 = vmatprep.subr.mxu0 0.0
        %1785 = vmatpush1.msra.mxu0 %v1465
        %1786 = vmatprep.subr.mxu0 0.0
        %1787 = vmatpush1.msra.mxu0 %v1464
        %1788 = vmatprep.subr.mxu0 0.0
        %1789 = vmatpush1.msra.mxu0 %v1463
        %1790 = vmatprep.subr.mxu0 0.0
        %1791 = vmatpush1.msra.mxu0 %v1462
        %1792 = vmatprep.subr.mxu0 0.0
        %1793 = vmatpush1.msra.mxu0 %v1461
        %1794 = vmatprep.subr.mxu0 0.0
        %1795 = vmatpush1.msra.mxu0 %v1460
        %1796 = vmatprep.subr.mxu0 0.0
        %1797 = vmatpush1.msra.mxu0 %v1459
        %1798 = vmatprep.subr.mxu0 0.0
        %1799 = vmatpush2.msra.mxu0 %v1490
        %1800 = vmatprep.subr.mxu0 0.0
        %1801 = vmatpush2.msra.mxu0 %v1489
        %1802 = vmatprep.subr.mxu0 0.0
        %1803 = vmatpush2.msra.mxu0 %v1488
        %1804 = vmatprep.subr.mxu0 0.0
        %1805 = vmatpush2.msra.mxu0 %v1487
        %1806 = vmatprep.subr.mxu0 0.0
        %1807 = vmatpush2.msra.mxu0 %v1486
        %1808 = vmatprep.subr.mxu0 0.0
        %1809 = vmatpush2.msra.mxu0 %v1485
        %1810 = vmatprep.subr.mxu0 0.0
        %1811 = vmatpush2.msra.mxu0 %v1484
        %1812 = vmatprep.subr.mxu0 0.0
        %1813 = vmatpush2.msra.mxu0 %v1483
        %1814 = vmatprep.subr.mxu0 0.0
        %1815 = vmatpush2.msra.mxu0 %v1482
        %1816 = vmatprep.subr.mxu0 0.0
        %1817 = vmatpush2.msra.mxu0 %v1481
        %1818 = vmatprep.subr.mxu0 0.0
        %1819 = vmatpush2.msra.mxu0 %v1480
        %1820 = vmatprep.subr.mxu0 0.0
        %1821 = vmatpush2.msra.mxu0 %v1479
        %1822 = vmatprep.subr.mxu0 0.0
        %1823 = vmatpush2.msra.mxu0 %v1478
        %1824 = vmatprep.subr.mxu0 0.0
        %1825 = vmatpush2.msra.mxu0 %v1477
        %1826 = vmatprep.subr.mxu0 0.0
        %1827 = vmatpush2.msra.mxu0 %v1476
        %1828 = vmatprep.subr.mxu0 0.0
        %1829 = vmatpush2.msra.mxu0 %v1475
        %1830 = vmatprep.mubr.f32.mxu0 %v1762
        %1831 = vmatmul.mubr.f32.gmra.mxu0 %v1595
        %v1832 = vpop.f32.mrf.mxu0
        %v1833 = vadd.f32 0.0, %v1832
        %v1834 = vpop.f32.mrf.mxu0
        %1835 = vdwg.mxu0
        %1836 = vmatprep.subr.mxu0 0.0
        %1837 = vmatpush1.msra.mxu0 %v1506
        %1838 = vmatprep.subr.mxu0 0.0
        %1839 = vmatpush1.msra.mxu0 %v1505
        %1840 = vmatprep.subr.mxu0 0.0
        %1841 = vmatpush1.msra.mxu0 %v1504
        %1842 = vmatprep.subr.mxu0 0.0
        %1843 = vmatpush1.msra.mxu0 %v1503
        %1844 = vmatprep.subr.mxu0 0.0
        %1845 = vmatpush1.msra.mxu0 %v1502
        %1846 = vmatprep.subr.mxu0 0.0
        %1847 = vmatpush1.msra.mxu0 %v1501
        %1848 = vmatprep.subr.mxu0 0.0
        %1849 = vmatpush1.msra.mxu0 %v1500
        %1850 = vmatprep.subr.mxu0 0.0
        %1851 = vmatpush1.msra.mxu0 %v1499
        %1852 = vmatprep.subr.mxu0 0.0
        %1853 = vmatpush1.msra.mxu0 %v1498
        %1854 = vmatprep.subr.mxu0 0.0
        %1855 = vmatpush1.msra.mxu0 %v1497
        %1856 = vmatprep.subr.mxu0 0.0
        %1857 = vmatpush1.msra.mxu0 %v1496
        %1858 = vmatprep.subr.mxu0 0.0
        %1859 = vmatpush1.msra.mxu0 %v1495
        %1860 = vmatprep.subr.mxu0 0.0
        %1861 = vmatpush1.msra.mxu0 %v1494
        %1862 = vmatprep.subr.mxu0 0.0
        %1863 = vmatpush1.msra.mxu0 %v1493
        %1864 = vmatprep.subr.mxu0 0.0
        %1865 = vmatpush1.msra.mxu0 %v1492
        %1866 = vmatprep.subr.mxu0 0.0
        %1867 = vmatpush1.msra.mxu0 %v1491
        %1868 = vmatprep.subr.mxu0 0.0
        %1869 = vmatpush2.msra.mxu0 0.0
        %1870 = vmatprep.subr.mxu0 0.0
        %1871 = vmatpush2.msra.mxu0 0.0
        %1872 = vmatprep.subr.mxu0 0.0
        %1873 = vmatpush2.msra.mxu0 0.0
        %1874 = vmatprep.subr.mxu0 0.0
        %1875 = vmatpush2.msra.mxu0 0.0
        %1876 = vmatprep.subr.mxu0 0.0
        %1877 = vmatpush2.msra.mxu0 %v1518
        %1878 = vmatprep.subr.mxu0 0.0
        %1879 = vmatpush2.msra.mxu0 %v1517
        %1880 = vmatprep.subr.mxu0 0.0
        %1881 = vmatpush2.msra.mxu0 %v1516
        %1882 = vmatprep.subr.mxu0 0.0
        %1883 = vmatpush2.msra.mxu0 %v1515
        %1884 = vmatprep.subr.mxu0 0.0
        %1885 = vmatpush2.msra.mxu0 %v1514
        %1886 = vmatprep.subr.mxu0 0.0
        %1887 = vmatpush2.msra.mxu0 %v1513
        %1888 = vmatprep.subr.mxu0 0.0
        %1889 = vmatpush2.msra.mxu0 %v1512
        %1890 = vmatprep.subr.mxu0 0.0
        %1891 = vmatpush2.msra.mxu0 %v1511
        %1892 = vmatprep.subr.mxu0 0.0
        %1893 = vmatpush2.msra.mxu0 %v1510
        %1894 = vmatprep.subr.mxu0 0.0
        %1895 = vmatpush2.msra.mxu0 %v1509
        %1896 = vmatprep.subr.mxu0 0.0
        %1897 = vmatpush2.msra.mxu0 %v1508
        %1898 = vmatprep.subr.mxu0 0.0
        %1899 = vmatpush2.msra.mxu0 %v1507
        %1900 = vmatprep.mubr.f32.mxu0 %v1764
        %1901 = vmatmul.mubr.f32.gmra.mxu0 %v1763
        %v1902 = vpop.f32.mrf.mxu0
        %v1903 = vadd.f32 %v1833, %v1902
        %v1904 = vpop.f32.mrf.mxu0
        %1905 = vdwg.mxu0
        %v1906 = vld [vmem:[%s5] sm:$0x7]
        %v1907 = vsel %vm502, %v1903, 0.0
        %v1908 = vrot.slane %v1907, 4
        %v1909 = vadd.f32 %v1907, %v1908
        %v1910 = vrot.slane %v1909, 2
        %v1911 = vadd.f32 %v1909, %v1910
        %v1912 = vrot.slane %v1911, 1
        %v1913 = vadd.f32 %v1911, %v1912
        %1915 = vrot.lane.b32.xlu0 %v1913, 96
        %v1916 = vpop.permute.xlu0 %1915
        %v1918 = vadd.f32 %v1913, %v1916
        %1919 = vrot.lane.b32.xlu0 %v1913, 64
        %v1920 = vpop.permute.xlu0 %1919
        %v1922 = vadd.f32 %v1918, %v1920
        %1923 = vrot.lane.b32.xlu0 %v1913, 32
        %v1924 = vpop.permute.xlu0 %1923
        %v1926 = vadd.f32 %v1922, %v1924
        %v1927 = vrcp.pop 16.0
        %v1928 = vmul.f32 %v1926, %v1927
        %1930 = vrot.lane.b32.xlu0 %v1928, 32
        %v1931 = vpop.permute.xlu0 %1930
        %1933 = vrot.lane.b32.xlu0 %v1928, 64
        %v1934 = vpop.permute.xlu0 %1933
        %1936 = vrot.lane.b32.xlu0 %v1928, 96
        %v1937 = vpop.permute.xlu0 %1936
        %v1939 = vsel %vm1064, %v1928, %v1931
        %v1940 = vsel %vm1275, %v1939, %v1934
        %v1941 = vsel %vm1279, %v1940, %v1937
        %v1942 = vlaneseq
        %v1943 = vshrl.u32 %v1942, 7
        %v1944 = vsub.s32 0, %v1943
        %v1945 = vrot.slane %v1941, %v1944
        %v1946 = vsub.f32 %v1903, %v1945
        %v1947 = vmul.f32 %v1946, %v1946
        %v1948 = vsel %vm502, %v1947, 0.0
        %v1949 = vrot.slane %v1948, 4
        %v1950 = vadd.f32 %v1948, %v1949
        %v1951 = vrot.slane %v1950, 2
        %v1952 = vadd.f32 %v1950, %v1951
        %v1953 = vrot.slane %v1952, 1
        %v1954 = vadd.f32 %v1952, %v1953
        %1956 = vrot.lane.b32.xlu0 %v1954, 96
        %v1957 = vpop.permute.xlu0 %1956
        %v1959 = vadd.f32 %v1954, %v1957
        %1960 = vrot.lane.b32.xlu0 %v1954, 64
        %v1961 = vpop.permute.xlu0 %1960
        %v1963 = vadd.f32 %v1959, %v1961
        %1964 = vrot.lane.b32.xlu0 %v1954, 32
        %v1965 = vpop.permute.xlu0 %1964
        %v1967 = vadd.f32 %v1963, %v1965
        %v1968 = vrcp.pop 15.0
        %v1969 = vmul.f32 %v1967, %v1968
        %v1970 = vadd.f32 %v1969, 1e-05
        %v1971 = vrsqrt.pop %v1970
        %1973 = vrot.lane.b32.xlu0 %v1971, 32
        %v1974 = vpop.permute.xlu0 %1973
        %1976 = vrot.lane.b32.xlu0 %v1971, 64
        %v1977 = vpop.permute.xlu0 %1976
        %1979 = vrot.lane.b32.xlu0 %v1971, 96
        %v1980 = vpop.permute.xlu0 %1979
        %v1982 = vsel %vm1064, %v1971, %v1974
        %v1983 = vsel %vm1275, %v1982, %v1977
        %v1984 = vsel %vm1279, %v1983, %v1980
        %v1985 = vlaneseq
        %v1986 = vshrl.u32 %v1985, 7
        %v1987 = vsub.s32 0, %v1986
        %v1988 = vrot.slane %v1984, %v1987
        %v1989 = vmul.f32 %v1946, %v1988
        %1990 = vadd.xlane.f32.xlu0 %v1907
        %v1991 = vpop.xlane.xlu0 %1990
        %v1992 = vrot.slane %v1991, 4
        %v1993 = vadd.f32 %v1991, %v1992
        %v1994 = vrot.slane %v1993, 2
        %v1995 = vadd.f32 %v1993, %v1994
        %v1996 = vrot.slane %v1995, 1
        %v1997 = vadd.f32 %v1995, %v1996
        %s1998 = vtos %v1997
        %v1999 = vstv %s1998
        %v2000 = vrcp.pop 512.0
        %v2001 = vmul.f32 %v1999, %v2000
        %v2002 = vsub.f32 %v1903, %v2001
        %v2003 = vmul.f32 %v2002, %v2002
        %v2004 = vsel %vm502, %v2003, 0.0
        %2005 = vadd.xlane.f32.xlu0 %v2004
        %v2006 = vpop.xlane.xlu0 %2005
        %v2007 = vrot.slane %v2006, 4
        %v2008 = vadd.f32 %v2006, %v2007
        %v2009 = vrot.slane %v2008, 2
        %v2010 = vadd.f32 %v2008, %v2009
        %v2011 = vrot.slane %v2010, 1
        %v2012 = vadd.f32 %v2010, %v2011
        %s2013 = vtos %v2012
        %v2014 = vstv %s2013
        %v2015 = vrcp.pop 511.0
        %v2016 = vmul.f32 %v2014, %v2015
        %v2017 = vadd.f32 %v2016, 1e-05
        %v2018 = vrsqrt.pop %v2017
        %v2019 = vmul.f32 %v2002, %v2018
        %2021 = vrot.lane.b32.xlu0 %v1906, 32
        %v2022 = vpop.permute.xlu0 %2021
        %2024 = vrot.lane.b32.xlu0 %v1906, 64
        %v2025 = vpop.permute.xlu0 %2024
        %2027 = vrot.lane.b32.xlu0 %v1906, 96
        %v2028 = vpop.permute.xlu0 %2027
        %v2030 = vsel %vm1064, %v1906, %v2022
        %v2031 = vsel %vm1275, %v2030, %v2025
        %v2032 = vsel %vm1279, %v2031, %v2028
        %v2033 = vlaneseq
        %v2034 = vshrl.u32 %v2033, 7
        %v2035 = vsub.s32 0, %v2034
        %v2036 = vrot.slane %v2032, %v2035
        %v2037 = vmul.f32 %v2036, %v1989
        %v2038 = vsub.f32 1.0, %v2032
        %v2039 = vlaneseq
        %v2040 = vshrl.u32 %v2039, 7
        %v2041 = vsub.s32 0, %v2040
        %v2042 = vrot.slane %v2038, %v2041
        %v2043 = vmul.f32 %v2042, %v2019
        %v2044 = vadd.f32 %v2037, %v2043
        %v2045 = vlaneseq
        %v2046 = vshrl.u32 %v2045, 7
        %v2047 = vsub.s32 1, %v2046
        %v2048 = vrot.slane %v2032, %v2047
        %v2049 = vmul.f32 %v2044, %v2048
        %v2050 = vlaneseq
        %v2051 = vshrl.u32 %v2050, 7
        %v2052 = vsub.s32 2, %v2051
        %v2053 = vrot.slane %v2032, %v2052
        %v2054 = vadd.f32 %v2049, %v2053
        %v2055 = vmax.f32 %v2054, 0.0
        %v2056 = vld [vmem:[%s6] sm:$0xff]
        %v2057 = vld [vmem:[%s6 + $0x8] sm:$0xff]
        %v2058 = vld [vmem:[%s6 + $0x10] sm:$0xff]
        %v2059 = vld [vmem:[%s6 + $0x18] sm:$0xff]
        %v2060 = vld [vmem:[%s6 + $0x20] sm:$0xff]
        %v2061 = vld [vmem:[%s6 + $0x28] sm:$0xff]
        %v2062 = vld [vmem:[%s6 + $0x30] sm:$0xff]
        %v2063 = vld [vmem:[%s6 + $0x38] sm:$0xff]
        %v2064 = vld [vmem:[%s6 + $0x40] sm:$0xff]
        %v2065 = vld [vmem:[%s6 + $0x48] sm:$0xff]
        %v2066 = vld [vmem:[%s6 + $0x50] sm:$0xff]
        %v2067 = vld [vmem:[%s6 + $0x58] sm:$0xff]
        %v2068 = vld [vmem:[%s6 + $0x60] sm:$0xff]
        %v2069 = vld [vmem:[%s6 + $0x68] sm:$0xff]
        %v2070 = vld [vmem:[%s6 + $0x70] sm:$0xff]
        %v2071 = vld [vmem:[%s6 + $0x78] sm:$0xff]
        %v2072 = vld [vmem:[%s6 + $0x80] sm:$0xff]
        %v2073 = vld [vmem:[%s6 + $0x88] sm:$0xff]
        %v2074 = vld [vmem:[%s6 + $0x90] sm:$0xff]
        %v2075 = vld [vmem:[%s6 + $0x98] sm:$0xff]
        %v2076 = vld [vmem:[%s6 + $0xa0] sm:$0xff]
        %v2077 = vld [vmem:[%s6 + $0xa8] sm:$0xff]
        %v2078 = vld [vmem:[%s6 + $0xb0] sm:$0xff]
        %v2079 = vld [vmem:[%s6 + $0xb8] sm:$0xff]
        %v2080 = vld [vmem:[%s6 + $0xc0] sm:$0xff]
        %v2081 = vld [vmem:[%s6 + $0xc8] sm:$0xff]
        %v2082 = vld [vmem:[%s6 + $0xd0] sm:$0xff]
        %v2083 = vld [vmem:[%s6 + $0xd8] sm:$0xff]
        %v2084 = vld [vmem:[%s6 + $0xe0] sm:$0xff]
        %v2085 = vld [vmem:[%s6 + $0xe8] sm:$0xff]
        %v2086 = vld [vmem:[%s6 + $0xf0] sm:$0xff]
        %v2087 = vld [vmem:[%s6 + $0xf8] sm:$0xff]
        %v2088 = vld [vmem:[%s6 + $0x100] sm:$0xff]
        %v2089 = vld [vmem:[%s6 + $0x108] sm:$0xff]
        %v2090 = vld [vmem:[%s6 + $0x110] sm:$0xff]
        %v2091 = vld [vmem:[%s6 + $0x118] sm:$0xff]
        %v2092 = vld [vmem:[%s6 + $0x120] sm:$0xff]
        %v2093 = vld [vmem:[%s6 + $0x128] sm:$0xff]
        %v2094 = vld [vmem:[%s6 + $0x130] sm:$0xff]
        %v2095 = vld [vmem:[%s6 + $0x138] sm:$0xff]
        %v2096 = vld [vmem:[%s6 + $0x140] sm:$0xff]
        %v2097 = vld [vmem:[%s6 + $0x148] sm:$0xff]
        %v2098 = vld [vmem:[%s6 + $0x150] sm:$0xff]
        %v2099 = vld [vmem:[%s6 + $0x158] sm:$0xff]
        %v2100 = vld [vmem:[%s6 + $0x160] sm:$0xff]
        %v2101 = vld [vmem:[%s6 + $0x168] sm:$0xff]
        %v2102 = vld [vmem:[%s6 + $0x170] sm:$0xff]
        %v2103 = vld [vmem:[%s6 + $0x178] sm:$0xff]
        %v2104 = vld [vmem:[%s6 + $0x180] sm:$0xff]
        %v2105 = vld [vmem:[%s6 + $0x188] sm:$0xff]
        %v2106 = vld [vmem:[%s6 + $0x190] sm:$0xff]
        %v2107 = vld [vmem:[%s6 + $0x198] sm:$0xff]
        %v2108 = vld [vmem:[%s6 + $0x1a0] sm:$0xff]
        %v2109 = vld [vmem:[%s6 + $0x1a8] sm:$0xff]
        %v2110 = vld [vmem:[%s6 + $0x1b0] sm:$0xff]
        %v2111 = vld [vmem:[%s6 + $0x1b8] sm:$0xff]
        %v2112 = vld [vmem:[%s6 + $0x1c0] sm:$0xff]
        %v2113 = vld [vmem:[%s6 + $0x1c8] sm:$0xff]
        %v2114 = vld [vmem:[%s6 + $0x1d0] sm:$0xff]
        %v2115 = vld [vmem:[%s6 + $0x1d8] sm:$0xff]
        %v2116 = vld [vmem:[%s6 + $0x1e0] sm:$0xff]
        %v2117 = vld [vmem:[%s6 + $0x1e8] sm:$0xff]
        %v2118 = vld [vmem:[%s6 + $0x1f0] sm:$0xff]
        %v2119 = vld [vmem:[%s6 + $0x1f8] sm:$0xff]
        %v2120 = vld [vmem:[%s6 + $0x200] sm:$0xff]
        %v2121 = vld [vmem:[%s6 + $0x208] sm:$0xff]
        %v2122 = vld [vmem:[%s6 + $0x210] sm:$0xff]
        %v2123 = vld [vmem:[%s6 + $0x218] sm:$0xff]
        %v2124 = vld [vmem:[%s6 + $0x220] sm:$0xff]
        %v2125 = vld [vmem:[%s6 + $0x228] sm:$0xff]
        %v2126 = vld [vmem:[%s6 + $0x230] sm:$0xff]
        %v2127 = vld [vmem:[%s6 + $0x238] sm:$0xff]
        %v2128 = vld [vmem:[%s7] sm:$0xff]
        %v2129 = vld [vmem:[%s7 + $0x8] sm:$0xff]
        %v2130 = vld [vmem:[%s7 + $0x10] sm:$0xff]
        %v2131 = vld [vmem:[%s7 + $0x18] sm:$0xff]
        %v2132 = vld [vmem:[%s7 + $0x20] sm:$0xff]
        %v2133 = vld [vmem:[%s7 + $0x28] sm:$0xff]
        %v2134 = vld [vmem:[%s7 + $0x30] sm:$0xff]
        %v2135 = vld [vmem:[%s7 + $0x38] sm:$0xff]
        %v2136 = vld [vmem:[%s7 + $0x40] sm:$0xff]
        %v2137 = vld [vmem:[%s7 + $0x48] sm:$0xff]
        %v2138 = vld [vmem:[%s7 + $0x50] sm:$0xff]
        %v2139 = vld [vmem:[%s7 + $0x58] sm:$0xff]
        %v2140 = vld [vmem:[%s7 + $0x60] sm:$0xff]
        %v2141 = vld [vmem:[%s7 + $0x68] sm:$0xff]
        %v2142 = vld [vmem:[%s7 + $0x70] sm:$0xff]
        %v2143 = vld [vmem:[%s7 + $0x78] sm:$0xff]
        %v2144 = vld [vmem:[%s7 + $0x80] sm:$0xff]
        %v2145 = vld [vmem:[%s7 + $0x88] sm:$0xff]
        %v2146 = vld [vmem:[%s7 + $0x90] sm:$0xff]
        %v2147 = vld [vmem:[%s7 + $0x98] sm:$0xff]
        %v2148 = vld [vmem:[%s7 + $0xa0] sm:$0xff]
        %v2149 = vld [vmem:[%s7 + $0xa8] sm:$0xff]
        %v2150 = vld [vmem:[%s7 + $0xb0] sm:$0xff]
        %v2151 = vld [vmem:[%s7 + $0xb8] sm:$0xff]
        %v2152 = vld [vmem:[%s7 + $0xc0] sm:$0xff]
        %v2153 = vld [vmem:[%s7 + $0xc8] sm:$0xff]
        %v2154 = vld [vmem:[%s7 + $0xd0] sm:$0xff]
        %v2155 = vld [vmem:[%s7 + $0xd8] sm:$0xff]
        %v2156 = vld [vmem:[%s7 + $0xe0] sm:$0xff]
        %v2157 = vld [vmem:[%s7 + $0xe8] sm:$0xff]
        %v2158 = vld [vmem:[%s7 + $0xf0] sm:$0xff]
        %v2159 = vld [vmem:[%s7 + $0xf8] sm:$0xff]
        %v2160 = vld [vmem:[%s7 + $0x100] sm:$0xff]
        %v2161 = vld [vmem:[%s7 + $0x108] sm:$0xff]
        %v2162 = vld [vmem:[%s7 + $0x110] sm:$0xff]
        %v2163 = vld [vmem:[%s7 + $0x118] sm:$0xff]
        %v2164 = vld [vmem:[%s7 + $0x120] sm:$0xff]
        %v2165 = vld [vmem:[%s7 + $0x128] sm:$0xff]
        %v2166 = vld [vmem:[%s7 + $0x130] sm:$0xff]
        %v2167 = vld [vmem:[%s7 + $0x138] sm:$0xff]
        %v2168 = vld [vmem:[%s7 + $0x140] sm:$0xff]
        %v2169 = vld [vmem:[%s7 + $0x148] sm:$0xff]
        %v2170 = vld [vmem:[%s7 + $0x150] sm:$0xff]
        %v2171 = vld [vmem:[%s7 + $0x158] sm:$0xff]
        %v2172 = vld [vmem:[%s7 + $0x160] sm:$0xff]
        %v2173 = vld [vmem:[%s7 + $0x168] sm:$0xff]
        %v2174 = vld [vmem:[%s7 + $0x170] sm:$0xff]
        %v2175 = vld [vmem:[%s7 + $0x178] sm:$0xff]
        %v2176 = vld [vmem:[%s7 + $0x180] sm:$0xff]
        %v2177 = vld [vmem:[%s7 + $0x188] sm:$0xff]
        %v2178 = vld [vmem:[%s7 + $0x190] sm:$0xff]
        %v2179 = vld [vmem:[%s7 + $0x198] sm:$0xff]
        %v2180 = vld [vmem:[%s7 + $0x1a0] sm:$0xff]
        %v2181 = vld [vmem:[%s7 + $0x1a8] sm:$0xff]
        %v2182 = vld [vmem:[%s7 + $0x1b0] sm:$0xff]
        %v2183 = vld [vmem:[%s7 + $0x1b8] sm:$0xff]
        %v2184 = vld [vmem:[%s7 + $0x1c0] sm:$0xff]
        %v2185 = vld [vmem:[%s7 + $0x1c8] sm:$0xff]
        %v2186 = vld [vmem:[%s7 + $0x1d0] sm:$0xff]
        %v2187 = vld [vmem:[%s7 + $0x1d8] sm:$0xff]
        %v2188 = vld [vmem:[%s7 + $0x1e0] sm:$0xff]
        %v2189 = vld [vmem:[%s7 + $0x1e8] sm:$0xff]
        %v2190 = vld [vmem:[%s7 + $0x1f0] sm:$0xff]
        %v2191 = vld [vmem:[%s7 + $0x1f8] sm:$0xff]
        %v2192 = vld [vmem:[%s7 + $0x200] sm:$0xff]
        %v2193 = vld [vmem:[%s7 + $0x208] sm:$0xff]
        %v2194 = vld [vmem:[%s7 + $0x210] sm:$0xff]
        %v2195 = vld [vmem:[%s7 + $0x218] sm:$0xff]
        %v2196 = vld [vmem:[%s7 + $0x220] sm:$0xff]
        %v2197 = vld [vmem:[%s7 + $0x228] sm:$0xff]
        %v2198 = vld [vmem:[%s7 + $0x230] sm:$0xff]
        %v2199 = vld [vmem:[%s7 + $0x238] sm:$0xff]
        %2201 = vrot.lane.b32.xlu0 %v2055, 96
        %v2202 = vpop.permute.xlu0 %2201
        %2204 = vrot.lane.b32.xlu0 %v2055, 32
        %v2205 = vpop.permute.xlu0 %2204
        %v2207 = vsel %vm1064, %v2202, %v2205
        %v2208 = vsel %vm1064, %v2205, %v2202
        %v2211 = vrot.slane %v2207, 1
        %v2212 = vrot.slane %v2208, 1
        %v2215 = vrot.slane %v2207, 7
        %v2216 = vrot.slane %v2208, 7
        %v2219 = vrot.slane %v2207, 5
        %v2220 = vrot.slane %v2208, 5
        %v2223 = vsel %vm732, %v2211, %v2215
        %v2224 = vsel %vm732, %v2212, %v2216
        %v2225 = vsel %vm490, %v2223, %v2219
        %v2226 = vsel %vm490, %v2224, %v2220
        %v2229 = vrot.slane %v2225, 1
        %v2230 = vrot.slane %v2226, 1
        %2231 = vrot.lane.b32.xlu0 %v2229, 64
        %v2232 = vpop.permute.xlu0 %2231
        %2233 = vrot.lane.b32.xlu0 %v2230, 64
        %v2234 = vpop.permute.xlu0 %2233
        %v2235 = vsel %vm1275, %v2232, %v2234
        %v2238 = vrot.slane %v2225, 2
        %v2239 = vrot.slane %v2226, 2
        %v2241 = vsel %vm1275, %v2226, %v2232
        %v2242 = vsel %vm1275, %v2239, 0
        %2244 = vmatprep.subr.mxu0 0.0
        %2245 = vmatpush1.msra.mxu0 %v2071
        %2246 = vmatprep.subr.mxu0 0.0
        %2247 = vmatpush1.msra.mxu0 %v2070
        %2248 = vmatprep.subr.mxu0 0.0
        %2249 = vmatpush1.msra.mxu0 %v2069
        %2250 = vmatprep.subr.mxu0 0.0
        %2251 = vmatpush1.msra.mxu0 %v2068
        %2252 = vmatprep.subr.mxu0 0.0
        %2253 = vmatpush1.msra.mxu0 %v2067
        %2254 = vmatprep.subr.mxu0 0.0
        %2255 = vmatpush1.msra.mxu0 %v2066
        %2256 = vmatprep.subr.mxu0 0.0
        %2257 = vmatpush1.msra.mxu0 %v2065
        %2258 = vmatprep.subr.mxu0 0.0
        %2259 = vmatpush1.msra.mxu0 %v2064
        %2260 = vmatprep.subr.mxu0 0.0
        %2261 = vmatpush1.msra.mxu0 %v2063
        %2262 = vmatprep.subr.mxu0 0.0
        %2263 = vmatpush1.msra.mxu0 %v2062
        %2264 = vmatprep.subr.mxu0 0.0
        %2265 = vmatpush1.msra.mxu0 %v2061
        %2266 = vmatprep.subr.mxu0 0.0
        %2267 = vmatpush1.msra.mxu0 %v2060
        %2268 = vmatprep.subr.mxu0 0.0
        %2269 = vmatpush1.msra.mxu0 %v2059
        %2270 = vmatprep.subr.mxu0 0.0
        %2271 = vmatpush1.msra.mxu0 %v2058
        %2272 = vmatprep.subr.mxu0 0.0
        %2273 = vmatpush1.msra.mxu0 %v2057
        %2274 = vmatprep.subr.mxu0 0.0
        %2275 = vmatpush1.msra.mxu0 %v2056
        %2276 = vmatprep.subr.mxu0 0.0
        %2277 = vmatpush2.msra.mxu0 %v2087
        %2278 = vmatprep.subr.mxu0 0.0
        %2279 = vmatpush2.msra.mxu0 %v2086
        %2280 = vmatprep.subr.mxu0 0.0
        %2281 = vmatpush2.msra.mxu0 %v2085
        %2282 = vmatprep.subr.mxu0 0.0
        %2283 = vmatpush2.msra.mxu0 %v2084
        %2284 = vmatprep.subr.mxu0 0.0
        %2285 = vmatpush2.msra.mxu0 %v2083
        %2286 = vmatprep.subr.mxu0 0.0
        %2287 = vmatpush2.msra.mxu0 %v2082
        %2288 = vmatprep.subr.mxu0 0.0
        %2289 = vmatpush2.msra.mxu0 %v2081
        %2290 = vmatprep.subr.mxu0 0.0
        %2291 = vmatpush2.msra.mxu0 %v2080
        %2292 = vmatprep.subr.mxu0 0.0
        %2293 = vmatpush2.msra.mxu0 %v2079
        %2294 = vmatprep.subr.mxu0 0.0
        %2295 = vmatpush2.msra.mxu0 %v2078
        %2296 = vmatprep.subr.mxu0 0.0
        %2297 = vmatpush2.msra.mxu0 %v2077
        %2298 = vmatprep.subr.mxu0 0.0
        %2299 = vmatpush2.msra.mxu0 %v2076
        %2300 = vmatprep.subr.mxu0 0.0
        %2301 = vmatpush2.msra.mxu0 %v2075
        %2302 = vmatprep.subr.mxu0 0.0
        %2303 = vmatpush2.msra.mxu0 %v2074
        %2304 = vmatprep.subr.mxu0 0.0
        %2305 = vmatpush2.msra.mxu0 %v2073
        %2306 = vmatprep.subr.mxu0 0.0
        %2307 = vmatpush2.msra.mxu0 %v2072
        %2308 = vmatprep.mubr.f32.mxu0 %v2241
        %2309 = vmatmul.mubr.f32.gmra.mxu0 %v2225
        %v2310 = vpop.f32.mrf.mxu0
        %v2311 = vadd.f32 0.0, %v2310
        %v2312 = vpop.f32.mrf.mxu0
        %2313 = vdwg.mxu0
        %2314 = vmatprep.subr.mxu0 0.0
        %2315 = vmatpush1.msra.mxu0 %v2103
        %2316 = vmatprep.subr.mxu0 0.0
        %2317 = vmatpush1.msra.mxu0 %v2102
        %2318 = vmatprep.subr.mxu0 0.0
        %2319 = vmatpush1.msra.mxu0 %v2101
        %2320 = vmatprep.subr.mxu0 0.0
        %2321 = vmatpush1.msra.mxu0 %v2100
        %2322 = vmatprep.subr.mxu0 0.0
        %2323 = vmatpush1.msra.mxu0 %v2099
        %2324 = vmatprep.subr.mxu0 0.0
        %2325 = vmatpush1.msra.mxu0 %v2098
        %2326 = vmatprep.subr.mxu0 0.0
        %2327 = vmatpush1.msra.mxu0 %v2097
        %2328 = vmatprep.subr.mxu0 0.0
        %2329 = vmatpush1.msra.mxu0 %v2096
        %2330 = vmatprep.subr.mxu0 0.0
        %2331 = vmatpush1.msra.mxu0 %v2095
        %2332 = vmatprep.subr.mxu0 0.0
        %2333 = vmatpush1.msra.mxu0 %v2094
        %2334 = vmatprep.subr.mxu0 0.0
        %2335 = vmatpush1.msra.mxu0 %v2093
        %2336 = vmatprep.subr.mxu0 0.0
        %2337 = vmatpush1.msra.mxu0 %v2092
        %2338 = vmatprep.subr.mxu0 0.0
        %2339 = vmatpush1.msra.mxu0 %v2091
        %2340 = vmatprep.subr.mxu0 0.0
        %2341 = vmatpush1.msra.mxu0 %v2090
        %2342 = vmatprep.subr.mxu0 0.0
        %2343 = vmatpush1.msra.mxu0 %v2089
        %2344 = vmatprep.subr.mxu0 0.0
        %2345 = vmatpush1.msra.mxu0 %v2088
        %2346 = vmatprep.subr.mxu0 0.0
        %2347 = vmatpush2.msra.mxu0 %v2119
        %2348 = vmatprep.subr.mxu0 0.0
        %2349 = vmatpush2.msra.mxu0 %v2118
        %2350 = vmatprep.subr.mxu0 0.0
        %2351 = vmatpush2.msra.mxu0 %v2117
        %2352 = vmatprep.subr.mxu0 0.0
        %2353 = vmatpush2.msra.mxu0 %v2116
        %2354 = vmatprep.subr.mxu0 0.0
        %2355 = vmatpush2.msra.mxu0 %v2115
        %2356 = vmatprep.subr.mxu0 0.0
        %2357 = vmatpush2.msra.mxu0 %v2114
        %2358 = vmatprep.subr.mxu0 0.0
        %2359 = vmatpush2.msra.mxu0 %v2113
        %2360 = vmatprep.subr.mxu0 0.0
        %2361 = vmatpush2.msra.mxu0 %v2112
        %2362 = vmatprep.subr.mxu0 0.0
        %2363 = vmatpush2.msra.mxu0 %v2111
        %2364 = vmatprep.subr.mxu0 0.0
        %2365 = vmatpush2.msra.mxu0 %v2110
        %2366 = vmatprep.subr.mxu0 0.0
        %2367 = vmatpush2.msra.mxu0 %v2109
        %2368 = vmatprep.subr.mxu0 0.0
        %2369 = vmatpush2.msra.mxu0 %v2108
        %2370 = vmatprep.subr.mxu0 0.0
        %2371 = vmatpush2.msra.mxu0 %v2107
        %2372 = vmatprep.subr.mxu0 0.0
        %2373 = vmatpush2.msra.mxu0 %v2106
        %2374 = vmatprep.subr.mxu0 0.0
        %2375 = vmatpush2.msra.mxu0 %v2105
        %2376 = vmatprep.subr.mxu0 0.0
        %2377 = vmatpush2.msra.mxu0 %v2104
        %2378 = vmatprep.mubr.f32.mxu0 %v2238
        %2379 = vmatmul.mubr.f32.gmra.mxu0 %v2235
        %v2380 = vpop.f32.mrf.mxu0
        %v2381 = vadd.f32 %v2311, %v2380
        %v2382 = vpop.f32.mrf.mxu0
        %2383 = vdwg.mxu0
        %2384 = vmatprep.subr.mxu0 0.0
        %2385 = vmatpush1.msra.mxu0 0.0
        %2386 = vmatprep.subr.mxu0 0.0
        %2387 = vmatpush1.msra.mxu0 0.0
        %2388 = vmatprep.subr.mxu0 0.0
        %2389 = vmatpush1.msra.mxu0 0.0
        %2390 = vmatprep.subr.mxu0 0.0
        %2391 = vmatpush1.msra.mxu0 0.0
        %2392 = vmatprep.subr.mxu0 0.0
        %2393 = vmatpush1.msra.mxu0 0.0
        %2394 = vmatprep.subr.mxu0 0.0
        %2395 = vmatpush1.msra.mxu0 0.0
        %2396 = vmatprep.subr.mxu0 0.0
        %2397 = vmatpush1.msra.mxu0 0.0
        %2398 = vmatprep.subr.mxu0 0.0
        %2399 = vmatpush1.msra.mxu0 0.0
        %2400 = vmatprep.subr.mxu0 0.0
        %2401 = vmatpush1.msra.mxu0 %v2127
        %2402 = vmatprep.subr.mxu0 0.0
        %2403 = vmatpush1.msra.mxu0 %v2126
        %2404 = vmatprep.subr.mxu0 0.0
        %2405 = vmatpush1.msra.mxu0 %v2125
        %2406 = vmatprep.subr.mxu0 0.0
        %2407 = vmatpush1.msra.mxu0 %v2124
        %2408 = vmatprep.subr.mxu0 0.0
        %2409 = vmatpush1.msra.mxu0 %v2123
        %2410 = vmatprep.subr.mxu0 0.0
        %2411 = vmatpush1.msra.mxu0 %v2122
        %2412 = vmatprep.subr.mxu0 0.0
        %2413 = vmatpush1.msra.mxu0 %v2121
        %2414 = vmatprep.subr.mxu0 0.0
        %2415 = vmatpush1.msra.mxu0 %v2120
        %2416 = vmatprep.subr.mxu0 0.0
        %2417 = vmatpush2.msra.mxu0 0.0
        %2418 = vmatprep.subr.mxu0 0.0
        %2419 = vmatpush2.msra.mxu0 0.0
        %2420 = vmatprep.subr.mxu0 0.0
        %2421 = vmatpush2.msra.mxu0 0.0
        %2422 = vmatprep.subr.mxu0 0.0
        %2423 = vmatpush2.msra.mxu0 0.0
        %2424 = vmatprep.subr.mxu0 0.0
        %2425 = vmatpush2.msra.mxu0 0.0
        %2426 = vmatprep.subr.mxu0 0.0
        %2427 = vmatpush2.msra.mxu0 0.0
        %2428 = vmatprep.subr.mxu0 0.0
        %2429 = vmatpush2.msra.mxu0 0.0
        %2430 = vmatprep.subr.mxu0 0.0
        %2431 = vmatpush2.msra.mxu0 0.0
        %2432 = vmatprep.subr.mxu0 0.0
        %2433 = vmatpush2.msra.mxu0 0.0
        %2434 = vmatprep.subr.mxu0 0.0
        %2435 = vmatpush2.msra.mxu0 0.0
        %2436 = vmatprep.subr.mxu0 0.0
        %2437 = vmatpush2.msra.mxu0 0.0
        %2438 = vmatprep.subr.mxu0 0.0
        %2439 = vmatpush2.msra.mxu0 0.0
        %2440 = vmatprep.subr.mxu0 0.0
        %2441 = vmatpush2.msra.mxu0 0.0
        %2442 = vmatprep.subr.mxu0 0.0
        %2443 = vmatpush2.msra.mxu0 0.0
        %2444 = vmatprep.subr.mxu0 0.0
        %2445 = vmatpush2.msra.mxu0 0.0
        %2446 = vmatprep.subr.mxu0 0.0
        %2447 = vmatpush2.msra.mxu0 0.0
        %2448 = vmatprep.mubr.f32.mxu0 0.0
        %2449 = vmatmul.mubr.f32.gmra.mxu0 %v2242
        %v2450 = vpop.f32.mrf.mxu0
        %v2451 = vadd.f32 %v2381, %v2450
        %v2452 = vpop.f32.mrf.mxu0
        %2453 = vdwg.mxu0
        %v2454 = vsel %vm502, %v2451, 0.0
        %v2455 = vrot.slane %v2454, 4
        %v2456 = vadd.f32 %v2454, %v2455
        %v2457 = vrot.slane %v2456, 2
        %v2458 = vadd.f32 %v2456, %v2457
        %v2459 = vrot.slane %v2458, 1
        %v2460 = vadd.f32 %v2458, %v2459
        %2462 = vrot.lane.b32.xlu0 %v2460, 96
        %v2463 = vpop.permute.xlu0 %2462
        %v2465 = vadd.f32 %v2460, %v2463
        %2466 = vrot.lane.b32.xlu0 %v2460, 64
        %v2467 = vpop.permute.xlu0 %2466
        %v2469 = vadd.f32 %v2465, %v2467
        %2470 = vrot.lane.b32.xlu0 %v2460, 32
        %v2471 = vpop.permute.xlu0 %2470
        %v2473 = vadd.f32 %v2469, %v2471
        %v2474 = vmul.f32 %v2473, %v1927
        %2476 = vrot.lane.b32.xlu0 %v2474, 32
        %v2477 = vpop.permute.xlu0 %2476
        %2479 = vrot.lane.b32.xlu0 %v2474, 64
        %v2480 = vpop.permute.xlu0 %2479
        %2482 = vrot.lane.b32.xlu0 %v2474, 96
        %v2483 = vpop.permute.xlu0 %2482
        %v2485 = vsel %vm1064, %v2474, %v2477
        %v2486 = vsel %vm1275, %v2485, %v2480
        %v2487 = vsel %vm1279, %v2486, %v2483
        %v2488 = vlaneseq
        %v2489 = vshrl.u32 %v2488, 7
        %v2490 = vsub.s32 0, %v2489
        %v2491 = vrot.slane %v2487, %v2490
        %v2492 = vsub.f32 %v2451, %v2491
        %v2493 = vmul.f32 %v2492, %v2492
        %v2494 = vsel %vm502, %v2493, 0.0
        %v2495 = vrot.slane %v2494, 4
        %v2496 = vadd.f32 %v2494, %v2495
        %v2497 = vrot.slane %v2496, 2
        %v2498 = vadd.f32 %v2496, %v2497
        %v2499 = vrot.slane %v2498, 1
        %v2500 = vadd.f32 %v2498, %v2499
        %2502 = vrot.lane.b32.xlu0 %v2500, 96
        %v2503 = vpop.permute.xlu0 %2502
        %v2505 = vadd.f32 %v2500, %v2503
        %2506 = vrot.lane.b32.xlu0 %v2500, 64
        %v2507 = vpop.permute.xlu0 %2506
        %v2509 = vadd.f32 %v2505, %v2507
        %2510 = vrot.lane.b32.xlu0 %v2500, 32
        %v2511 = vpop.permute.xlu0 %2510
        %v2513 = vadd.f32 %v2509, %v2511
        %v2514 = vmul.f32 %v2513, %v1927
        %v2515 = vadd.f32 %v2514, 1e-05
        %v2516 = vrsqrt.pop %v2515
        %2518 = vrot.lane.b32.xlu0 %v2516, 32
        %v2519 = vpop.permute.xlu0 %2518
        %2521 = vrot.lane.b32.xlu0 %v2516, 64
        %v2522 = vpop.permute.xlu0 %2521
        %2524 = vrot.lane.b32.xlu0 %v2516, 96
        %v2525 = vpop.permute.xlu0 %2524
        %v2527 = vsel %vm1064, %v2516, %v2519
        %v2528 = vsel %vm1275, %v2527, %v2522
        %v2529 = vsel %vm1279, %v2528, %v2525
        %v2530 = vlaneseq
        %v2531 = vshrl.u32 %v2530, 7
        %v2532 = vsub.s32 0, %v2531
        %v2533 = vrot.slane %v2529, %v2532
        %v2534 = vmul.f32 %v2492, %v2533
        %v2535 = vmax.f32 %v2534, 0.0
        %2537 = vrot.lane.b32.xlu0 %v2535, 96
        %v2538 = vpop.permute.xlu0 %2537
        %2540 = vrot.lane.b32.xlu0 %v2535, 32
        %v2541 = vpop.permute.xlu0 %2540
        %v2543 = vsel %vm1064, %v2538, %v2541
        %v2544 = vsel %vm1064, %v2541, %v2538
        %v2547 = vrot.slane %v2543, 1
        %v2548 = vrot.slane %v2544, 1
        %v2551 = vrot.slane %v2543, 7
        %v2552 = vrot.slane %v2544, 7
        %v2555 = vrot.slane %v2543, 5
        %v2556 = vrot.slane %v2544, 5
        %v2559 = vsel %vm732, %v2547, %v2551
        %v2560 = vsel %vm732, %v2548, %v2552
        %v2561 = vsel %vm490, %v2559, %v2555
        %v2562 = vsel %vm490, %v2560, %v2556
        %v2565 = vrot.slane %v2561, 1
        %v2566 = vrot.slane %v2562, 1
        %2567 = vrot.lane.b32.xlu0 %v2565, 64
        %v2568 = vpop.permute.xlu0 %2567
        %2569 = vrot.lane.b32.xlu0 %v2566, 64
        %v2570 = vpop.permute.xlu0 %2569
        %v2571 = vsel %vm1275, %v2568, %v2570
        %v2574 = vrot.slane %v2561, 2
        %v2575 = vrot.slane %v2562, 2
        %v2577 = vsel %vm1275, %v2562, %v2568
        %v2578 = vsel %vm1275, %v2575, 0
        %2580 = vmatprep.subr.mxu0 0.0
        %2581 = vmatpush1.msra.mxu0 %v2143
        %2582 = vmatprep.subr.mxu0 0.0
        %2583 = vmatpush1.msra.mxu0 %v2142
        %2584 = vmatprep.subr.mxu0 0.0
        %2585 = vmatpush1.msra.mxu0 %v2141
        %2586 = vmatprep.subr.mxu0 0.0
        %2587 = vmatpush1.msra.mxu0 %v2140
        %2588 = vmatprep.subr.mxu0 0.0
        %2589 = vmatpush1.msra.mxu0 %v2139
        %2590 = vmatprep.subr.mxu0 0.0
        %2591 = vmatpush1.msra.mxu0 %v2138
        %2592 = vmatprep.subr.mxu0 0.0
        %2593 = vmatpush1.msra.mxu0 %v2137
        %2594 = vmatprep.subr.mxu0 0.0
        %2595 = vmatpush1.msra.mxu0 %v2136
        %2596 = vmatprep.subr.mxu0 0.0
        %2597 = vmatpush1.msra.mxu0 %v2135
        %2598 = vmatprep.subr.mxu0 0.0
        %2599 = vmatpush1.msra.mxu0 %v2134
        %2600 = vmatprep.subr.mxu0 0.0
        %2601 = vmatpush1.msra.mxu0 %v2133
        %2602 = vmatprep.subr.mxu0 0.0
        %2603 = vmatpush1.msra.mxu0 %v2132
        %2604 = vmatprep.subr.mxu0 0.0
        %2605 = vmatpush1.msra.mxu0 %v2131
        %2606 = vmatprep.subr.mxu0 0.0
        %2607 = vmatpush1.msra.mxu0 %v2130
        %2608 = vmatprep.subr.mxu0 0.0
        %2609 = vmatpush1.msra.mxu0 %v2129
        %2610 = vmatprep.subr.mxu0 0.0
        %2611 = vmatpush1.msra.mxu0 %v2128
        %2612 = vmatprep.subr.mxu0 0.0
        %2613 = vmatpush2.msra.mxu0 %v2159
        %2614 = vmatprep.subr.mxu0 0.0
        %2615 = vmatpush2.msra.mxu0 %v2158
        %2616 = vmatprep.subr.mxu0 0.0
        %2617 = vmatpush2.msra.mxu0 %v2157
        %2618 = vmatprep.subr.mxu0 0.0
        %2619 = vmatpush2.msra.mxu0 %v2156
        %2620 = vmatprep.subr.mxu0 0.0
        %2621 = vmatpush2.msra.mxu0 %v2155
        %2622 = vmatprep.subr.mxu0 0.0
        %2623 = vmatpush2.msra.mxu0 %v2154
        %2624 = vmatprep.subr.mxu0 0.0
        %2625 = vmatpush2.msra.mxu0 %v2153
        %2626 = vmatprep.subr.mxu0 0.0
        %2627 = vmatpush2.msra.mxu0 %v2152
        %2628 = vmatprep.subr.mxu0 0.0
        %2629 = vmatpush2.msra.mxu0 %v2151
        %2630 = vmatprep.subr.mxu0 0.0
        %2631 = vmatpush2.msra.mxu0 %v2150
        %2632 = vmatprep.subr.mxu0 0.0
        %2633 = vmatpush2.msra.mxu0 %v2149
        %2634 = vmatprep.subr.mxu0 0.0
        %2635 = vmatpush2.msra.mxu0 %v2148
        %2636 = vmatprep.subr.mxu0 0.0
        %2637 = vmatpush2.msra.mxu0 %v2147
        %2638 = vmatprep.subr.mxu0 0.0
        %2639 = vmatpush2.msra.mxu0 %v2146
        %2640 = vmatprep.subr.mxu0 0.0
        %2641 = vmatpush2.msra.mxu0 %v2145
        %2642 = vmatprep.subr.mxu0 0.0
        %2643 = vmatpush2.msra.mxu0 %v2144
        %2644 = vmatprep.mubr.f32.mxu0 %v2577
        %2645 = vmatmul.mubr.f32.gmra.mxu0 %v2561
        %v2646 = vpop.f32.mrf.mxu0
        %v2647 = vadd.f32 0.0, %v2646
        %v2648 = vpop.f32.mrf.mxu0
        %2649 = vdwg.mxu0
        %2650 = vmatprep.subr.mxu0 0.0
        %2651 = vmatpush1.msra.mxu0 %v2175
        %2652 = vmatprep.subr.mxu0 0.0
        %2653 = vmatpush1.msra.mxu0 %v2174
        %2654 = vmatprep.subr.mxu0 0.0
        %2655 = vmatpush1.msra.mxu0 %v2173
        %2656 = vmatprep.subr.mxu0 0.0
        %2657 = vmatpush1.msra.mxu0 %v2172
        %2658 = vmatprep.subr.mxu0 0.0
        %2659 = vmatpush1.msra.mxu0 %v2171
        %2660 = vmatprep.subr.mxu0 0.0
        %2661 = vmatpush1.msra.mxu0 %v2170
        %2662 = vmatprep.subr.mxu0 0.0
        %2663 = vmatpush1.msra.mxu0 %v2169
        %2664 = vmatprep.subr.mxu0 0.0
        %2665 = vmatpush1.msra.mxu0 %v2168
        %2666 = vmatprep.subr.mxu0 0.0
        %2667 = vmatpush1.msra.mxu0 %v2167
        %2668 = vmatprep.subr.mxu0 0.0
        %2669 = vmatpush1.msra.mxu0 %v2166
        %2670 = vmatprep.subr.mxu0 0.0
        %2671 = vmatpush1.msra.mxu0 %v2165
        %2672 = vmatprep.subr.mxu0 0.0
        %2673 = vmatpush1.msra.mxu0 %v2164
        %2674 = vmatprep.subr.mxu0 0.0
        %2675 = vmatpush1.msra.mxu0 %v2163
        %2676 = vmatprep.subr.mxu0 0.0
        %2677 = vmatpush1.msra.mxu0 %v2162
        %2678 = vmatprep.subr.mxu0 0.0
        %2679 = vmatpush1.msra.mxu0 %v2161
        %2680 = vmatprep.subr.mxu0 0.0
        %2681 = vmatpush1.msra.mxu0 %v2160
        %2682 = vmatprep.subr.mxu0 0.0
        %2683 = vmatpush2.msra.mxu0 %v2191
        %2684 = vmatprep.subr.mxu0 0.0
        %2685 = vmatpush2.msra.mxu0 %v2190
        %2686 = vmatprep.subr.mxu0 0.0
        %2687 = vmatpush2.msra.mxu0 %v2189
        %2688 = vmatprep.subr.mxu0 0.0
        %2689 = vmatpush2.msra.mxu0 %v2188
        %2690 = vmatprep.subr.mxu0 0.0
        %2691 = vmatpush2.msra.mxu0 %v2187
        %2692 = vmatprep.subr.mxu0 0.0
        %2693 = vmatpush2.msra.mxu0 %v2186
        %2694 = vmatprep.subr.mxu0 0.0
        %2695 = vmatpush2.msra.mxu0 %v2185
        %2696 = vmatprep.subr.mxu0 0.0
        %2697 = vmatpush2.msra.mxu0 %v2184
        %2698 = vmatprep.subr.mxu0 0.0
        %2699 = vmatpush2.msra.mxu0 %v2183
        %2700 = vmatprep.subr.mxu0 0.0
        %2701 = vmatpush2.msra.mxu0 %v2182
        %2702 = vmatprep.subr.mxu0 0.0
        %2703 = vmatpush2.msra.mxu0 %v2181
        %2704 = vmatprep.subr.mxu0 0.0
        %2705 = vmatpush2.msra.mxu0 %v2180
        %2706 = vmatprep.subr.mxu0 0.0
        %2707 = vmatpush2.msra.mxu0 %v2179
        %2708 = vmatprep.subr.mxu0 0.0
        %2709 = vmatpush2.msra.mxu0 %v2178
        %2710 = vmatprep.subr.mxu0 0.0
        %2711 = vmatpush2.msra.mxu0 %v2177
        %2712 = vmatprep.subr.mxu0 0.0
        %2713 = vmatpush2.msra.mxu0 %v2176
        %2714 = vmatprep.mubr.f32.mxu0 %v2574
        %2715 = vmatmul.mubr.f32.gmra.mxu0 %v2571
        %v2716 = vpop.f32.mrf.mxu0
        %v2717 = vadd.f32 %v2647, %v2716
        %v2718 = vpop.f32.mrf.mxu0
        %2719 = vdwg.mxu0
        %2720 = vmatprep.subr.mxu0 0.0
        %2721 = vmatpush1.msra.mxu0 0.0
        %2722 = vmatprep.subr.mxu0 0.0
        %2723 = vmatpush1.msra.mxu0 0.0
        %2724 = vmatprep.subr.mxu0 0.0
        %2725 = vmatpush1.msra.mxu0 0.0
        %2726 = vmatprep.subr.mxu0 0.0
        %2727 = vmatpush1.msra.mxu0 0.0
        %2728 = vmatprep.subr.mxu0 0.0
        %2729 = vmatpush1.msra.mxu0 0.0
        %2730 = vmatprep.subr.mxu0 0.0
        %2731 = vmatpush1.msra.mxu0 0.0
        %2732 = vmatprep.subr.mxu0 0.0
        %2733 = vmatpush1.msra.mxu0 0.0
        %2734 = vmatprep.subr.mxu0 0.0
        %2735 = vmatpush1.msra.mxu0 0.0
        %2736 = vmatprep.subr.mxu0 0.0
        %2737 = vmatpush1.msra.mxu0 %v2199
        %2738 = vmatprep.subr.mxu0 0.0
        %2739 = vmatpush1.msra.mxu0 %v2198
        %2740 = vmatprep.subr.mxu0 0.0
        %2741 = vmatpush1.msra.mxu0 %v2197
        %2742 = vmatprep.subr.mxu0 0.0
        %2743 = vmatpush1.msra.mxu0 %v2196
        %2744 = vmatprep.subr.mxu0 0.0
        %2745 = vmatpush1.msra.mxu0 %v2195
        %2746 = vmatprep.subr.mxu0 0.0
        %2747 = vmatpush1.msra.mxu0 %v2194
        %2748 = vmatprep.subr.mxu0 0.0
        %2749 = vmatpush1.msra.mxu0 %v2193
        %2750 = vmatprep.subr.mxu0 0.0
        %2751 = vmatpush1.msra.mxu0 %v2192
        %2752 = vmatprep.subr.mxu0 0.0
        %2753 = vmatpush2.msra.mxu0 0.0
        %2754 = vmatprep.subr.mxu0 0.0
        %2755 = vmatpush2.msra.mxu0 0.0
        %2756 = vmatprep.subr.mxu0 0.0
        %2757 = vmatpush2.msra.mxu0 0.0
        %2758 = vmatprep.subr.mxu0 0.0
        %2759 = vmatpush2.msra.mxu0 0.0
        %2760 = vmatprep.subr.mxu0 0.0
        %2761 = vmatpush2.msra.mxu0 0.0
        %2762 = vmatprep.subr.mxu0 0.0
        %2763 = vmatpush2.msra.mxu0 0.0
        %2764 = vmatprep.subr.mxu0 0.0
        %2765 = vmatpush2.msra.mxu0 0.0
        %2766 = vmatprep.subr.mxu0 0.0
        %2767 = vmatpush2.msra.mxu0 0.0
        %2768 = vmatprep.subr.mxu0 0.0
        %2769 = vmatpush2.msra.mxu0 0.0
        %2770 = vmatprep.subr.mxu0 0.0
        %2771 = vmatpush2.msra.mxu0 0.0
        %2772 = vmatprep.subr.mxu0 0.0
        %2773 = vmatpush2.msra.mxu0 0.0
        %2774 = vmatprep.subr.mxu0 0.0
        %2775 = vmatpush2.msra.mxu0 0.0
        %2776 = vmatprep.subr.mxu0 0.0
        %2777 = vmatpush2.msra.mxu0 0.0
        %2778 = vmatprep.subr.mxu0 0.0
        %2779 = vmatpush2.msra.mxu0 0.0
        %2780 = vmatprep.subr.mxu0 0.0
        %2781 = vmatpush2.msra.mxu0 0.0
        %2782 = vmatprep.subr.mxu0 0.0
        %2783 = vmatpush2.msra.mxu0 0.0
        %2784 = vmatprep.mubr.f32.mxu0 0.0
        %2785 = vmatmul.mubr.f32.gmra.mxu0 %v2578
        %v2786 = vpop.f32.mrf.mxu0
        %v2787 = vadd.f32 %v2717, %v2786
        %v2788 = vpop.f32.mrf.mxu0
        %2789 = vdwg.mxu0
        %v2790 = vsel %vm502, %v2787, 0.0
        %v2791 = vrot.slane %v2790, 4
        %v2792 = vadd.f32 %v2790, %v2791
        %v2793 = vrot.slane %v2792, 2
        %v2794 = vadd.f32 %v2792, %v2793
        %v2795 = vrot.slane %v2794, 1
        %v2796 = vadd.f32 %v2794, %v2795
        %2798 = vrot.lane.b32.xlu0 %v2796, 96
        %v2799 = vpop.permute.xlu0 %2798
        %v2801 = vadd.f32 %v2796, %v2799
        %2802 = vrot.lane.b32.xlu0 %v2796, 64
        %v2803 = vpop.permute.xlu0 %2802
        %v2805 = vadd.f32 %v2801, %v2803
        %2806 = vrot.lane.b32.xlu0 %v2796, 32
        %v2807 = vpop.permute.xlu0 %2806
        %v2809 = vadd.f32 %v2805, %v2807
        %v2810 = vmul.f32 %v2809, %v1927
        %2812 = vrot.lane.b32.xlu0 %v2810, 32
        %v2813 = vpop.permute.xlu0 %2812
        %2815 = vrot.lane.b32.xlu0 %v2810, 64
        %v2816 = vpop.permute.xlu0 %2815
        %2818 = vrot.lane.b32.xlu0 %v2810, 96
        %v2819 = vpop.permute.xlu0 %2818
        %v2821 = vsel %vm1064, %v2810, %v2813
        %v2822 = vsel %vm1275, %v2821, %v2816
        %v2823 = vsel %vm1279, %v2822, %v2819
        %v2824 = vlaneseq
        %v2825 = vshrl.u32 %v2824, 7
        %v2826 = vsub.s32 0, %v2825
        %v2827 = vrot.slane %v2823, %v2826
        %v2828 = vsub.f32 %v2787, %v2827
        %v2829 = vmul.f32 %v2828, %v2828
        %v2830 = vsel %vm502, %v2829, 0.0
        %v2831 = vrot.slane %v2830, 4
        %v2832 = vadd.f32 %v2830, %v2831
        %v2833 = vrot.slane %v2832, 2
        %v2834 = vadd.f32 %v2832, %v2833
        %v2835 = vrot.slane %v2834, 1
        %v2836 = vadd.f32 %v2834, %v2835
        %2838 = vrot.lane.b32.xlu0 %v2836, 96
        %v2839 = vpop.permute.xlu0 %2838
        %v2841 = vadd.f32 %v2836, %v2839
        %2842 = vrot.lane.b32.xlu0 %v2836, 64
        %v2843 = vpop.permute.xlu0 %2842
        %v2845 = vadd.f32 %v2841, %v2843
        %2846 = vrot.lane.b32.xlu0 %v2836, 32
        %v2847 = vpop.permute.xlu0 %2846
        %v2849 = vadd.f32 %v2845, %v2847
        %v2850 = vmul.f32 %v2849, %v1927
        %v2851 = vadd.f32 %v2850, 1e-05
        %v2852 = vrsqrt.pop %v2851
        %2854 = vrot.lane.b32.xlu0 %v2852, 32
        %v2855 = vpop.permute.xlu0 %2854
        %2857 = vrot.lane.b32.xlu0 %v2852, 64
        %v2858 = vpop.permute.xlu0 %2857
        %2860 = vrot.lane.b32.xlu0 %v2852, 96
        %v2861 = vpop.permute.xlu0 %2860
        %v2863 = vsel %vm1064, %v2852, %v2855
        %v2864 = vsel %vm1275, %v2863, %v2858
        %v2865 = vsel %vm1279, %v2864, %v2861
        %v2866 = vlaneseq
        %v2867 = vshrl.u32 %v2866, 7
        %v2868 = vsub.s32 0, %v2867
        %v2869 = vrot.slane %v2865, %v2868
        %v2870 = vmul.f32 %v2828, %v2869
        %v2871 = vadd.f32 %v2055, %v2870
        %v2872 = vld [vmem:[%s8] sm:$0xff]
        %v2873 = vld [vmem:[%s8 + $0x8] sm:$0xff]
        %v2874 = vld [vmem:[%s8 + $0x10] sm:$0xff]
        %v2875 = vld [vmem:[%s8 + $0x18] sm:$0xff]
        %v2876 = vld [vmem:[%s8 + $0x20] sm:$0xff]
        %v2877 = vld [vmem:[%s8 + $0x28] sm:$0xff]
        %v2878 = vld [vmem:[%s8 + $0x30] sm:$0xff]
        %v2879 = vld [vmem:[%s8 + $0x38] sm:$0xff]
        %v2880 = vld [vmem:[%s8 + $0x40] sm:$0xff]
        %v2881 = vld [vmem:[%s8 + $0x48] sm:$0xff]
        %v2882 = vld [vmem:[%s8 + $0x50] sm:$0xff]
        %v2883 = vld [vmem:[%s8 + $0x58] sm:$0xff]
        %v2884 = vld [vmem:[%s8 + $0x60] sm:$0xff]
        %v2885 = vld [vmem:[%s8 + $0x68] sm:$0xff]
        %v2886 = vld [vmem:[%s8 + $0x70] sm:$0xff]
        %v2887 = vld [vmem:[%s8 + $0x78] sm:$0xff]
        %v2888 = vld [vmem:[%s8 + $0x80] sm:$0xff]
        %v2889 = vld [vmem:[%s8 + $0x88] sm:$0xff]
        %v2890 = vld [vmem:[%s8 + $0x90] sm:$0xff]
        %v2891 = vld [vmem:[%s8 + $0x98] sm:$0xff]
        %v2892 = vld [vmem:[%s8 + $0xa0] sm:$0xff]
        %v2893 = vld [vmem:[%s8 + $0xa8] sm:$0xff]
        %v2894 = vld [vmem:[%s8 + $0xb0] sm:$0xff]
        %v2895 = vld [vmem:[%s8 + $0xb8] sm:$0xff]
        %v2896 = vld [vmem:[%s8 + $0xc0] sm:$0xff]
        %v2897 = vld [vmem:[%s8 + $0xc8] sm:$0xff]
        %v2898 = vld [vmem:[%s8 + $0xd0] sm:$0xff]
        %v2899 = vld [vmem:[%s8 + $0xd8] sm:$0xff]
        %v2900 = vld [vmem:[%s8 + $0xe0] sm:$0xff]
        %v2901 = vld [vmem:[%s8 + $0xe8] sm:$0xff]
        %v2902 = vld [vmem:[%s8 + $0xf0] sm:$0xff]
        %v2903 = vld [vmem:[%s8 + $0xf8] sm:$0xff]
        %v2904 = vld [vmem:[%s8 + $0x100] sm:$0xff]
        %v2905 = vld [vmem:[%s8 + $0x108] sm:$0xff]
        %v2906 = vld [vmem:[%s8 + $0x110] sm:$0xff]
        %v2907 = vld [vmem:[%s8 + $0x118] sm:$0xff]
        %v2908 = vld [vmem:[%s8 + $0x120] sm:$0xff]
        %v2909 = vld [vmem:[%s8 + $0x128] sm:$0xff]
        %v2910 = vld [vmem:[%s8 + $0x130] sm:$0xff]
        %v2911 = vld [vmem:[%s8 + $0x138] sm:$0xff]
        %v2912 = vld [vmem:[%s8 + $0x140] sm:$0xff]
        %v2913 = vld [vmem:[%s8 + $0x148] sm:$0xff]
        %v2914 = vld [vmem:[%s8 + $0x150] sm:$0xff]
        %v2915 = vld [vmem:[%s8 + $0x158] sm:$0xff]
        %v2916 = vld [vmem:[%s8 + $0x160] sm:$0xff]
        %v2917 = vld [vmem:[%s8 + $0x168] sm:$0xff]
        %v2918 = vld [vmem:[%s8 + $0x170] sm:$0xff]
        %v2919 = vld [vmem:[%s8 + $0x178] sm:$0xff]
        %v2920 = vld [vmem:[%s8 + $0x180] sm:$0xff]
        %v2921 = vld [vmem:[%s8 + $0x188] sm:$0xff]
        %v2922 = vld [vmem:[%s8 + $0x190] sm:$0xff]
        %v2923 = vld [vmem:[%s8 + $0x198] sm:$0xff]
        %v2924 = vld [vmem:[%s8 + $0x1a0] sm:$0xff]
        %v2925 = vld [vmem:[%s8 + $0x1a8] sm:$0xff]
        %v2926 = vld [vmem:[%s8 + $0x1b0] sm:$0xff]
        %v2927 = vld [vmem:[%s8 + $0x1b8] sm:$0xff]
        %v2928 = vld [vmem:[%s8 + $0x1c0] sm:$0xff]
        %v2929 = vld [vmem:[%s8 + $0x1c8] sm:$0xff]
        %v2930 = vld [vmem:[%s8 + $0x1d0] sm:$0xff]
        %v2931 = vld [vmem:[%s8 + $0x1d8] sm:$0xff]
        %v2932 = vld [vmem:[%s8 + $0x1e0] sm:$0xff]
        %v2933 = vld [vmem:[%s8 + $0x1e8] sm:$0xff]
        %v2934 = vld [vmem:[%s8 + $0x1f0] sm:$0xff]
        %v2935 = vld [vmem:[%s8 + $0x1f8] sm:$0xff]
        %v2936 = vld [vmem:[%s8 + $0x200] sm:$0xff]
        %v2937 = vld [vmem:[%s8 + $0x208] sm:$0xff]
        %v2938 = vld [vmem:[%s8 + $0x210] sm:$0xff]
        %v2939 = vld [vmem:[%s8 + $0x218] sm:$0xff]
        %v2940 = vld [vmem:[%s8 + $0x220] sm:$0xff]
        %v2941 = vld [vmem:[%s8 + $0x228] sm:$0xff]
        %v2942 = vld [vmem:[%s8 + $0x230] sm:$0xff]
        %v2943 = vld [vmem:[%s8 + $0x238] sm:$0xff]
        %v2944 = vld [vmem:[%s9] sm:$0xff]
        %v2945 = vld [vmem:[%s9 + $0x8] sm:$0xff]
        %v2946 = vld [vmem:[%s9 + $0x10] sm:$0xff]
        %v2947 = vld [vmem:[%s9 + $0x18] sm:$0xff]
        %v2948 = vld [vmem:[%s9 + $0x20] sm:$0xff]
        %v2949 = vld [vmem:[%s9 + $0x28] sm:$0xff]
        %v2950 = vld [vmem:[%s9 + $0x30] sm:$0xff]
        %v2951 = vld [vmem:[%s9 + $0x38] sm:$0xff]
        %v2952 = vld [vmem:[%s9 + $0x40] sm:$0xff]
        %v2953 = vld [vmem:[%s9 + $0x48] sm:$0xff]
        %v2954 = vld [vmem:[%s9 + $0x50] sm:$0xff]
        %v2955 = vld [vmem:[%s9 + $0x58] sm:$0xff]
        %v2956 = vld [vmem:[%s9 + $0x60] sm:$0xff]
        %v2957 = vld [vmem:[%s9 + $0x68] sm:$0xff]
        %v2958 = vld [vmem:[%s9 + $0x70] sm:$0xff]
        %v2959 = vld [vmem:[%s9 + $0x78] sm:$0xff]
        %v2960 = vld [vmem:[%s9 + $0x80] sm:$0xff]
        %v2961 = vld [vmem:[%s9 + $0x88] sm:$0xff]
        %v2962 = vld [vmem:[%s9 + $0x90] sm:$0xff]
        %v2963 = vld [vmem:[%s9 + $0x98] sm:$0xff]
        %v2964 = vld [vmem:[%s9 + $0xa0] sm:$0xff]
        %v2965 = vld [vmem:[%s9 + $0xa8] sm:$0xff]
        %v2966 = vld [vmem:[%s9 + $0xb0] sm:$0xff]
        %v2967 = vld [vmem:[%s9 + $0xb8] sm:$0xff]
        %v2968 = vld [vmem:[%s9 + $0xc0] sm:$0xff]
        %v2969 = vld [vmem:[%s9 + $0xc8] sm:$0xff]
        %v2970 = vld [vmem:[%s9 + $0xd0] sm:$0xff]
        %v2971 = vld [vmem:[%s9 + $0xd8] sm:$0xff]
        %v2972 = vld [vmem:[%s9 + $0xe0] sm:$0xff]
        %v2973 = vld [vmem:[%s9 + $0xe8] sm:$0xff]
        %v2974 = vld [vmem:[%s9 + $0xf0] sm:$0xff]
        %v2975 = vld [vmem:[%s9 + $0xf8] sm:$0xff]
        %v2976 = vld [vmem:[%s9 + $0x100] sm:$0xff]
        %v2977 = vld [vmem:[%s9 + $0x108] sm:$0xff]
        %v2978 = vld [vmem:[%s9 + $0x110] sm:$0xff]
        %v2979 = vld [vmem:[%s9 + $0x118] sm:$0xff]
        %v2980 = vld [vmem:[%s9 + $0x120] sm:$0xff]
        %v2981 = vld [vmem:[%s9 + $0x128] sm:$0xff]
        %v2982 = vld [vmem:[%s9 + $0x130] sm:$0xff]
        %v2983 = vld [vmem:[%s9 + $0x138] sm:$0xff]
        %v2984 = vld [vmem:[%s9 + $0x140] sm:$0xff]
        %v2985 = vld [vmem:[%s9 + $0x148] sm:$0xff]
        %v2986 = vld [vmem:[%s9 + $0x150] sm:$0xff]
        %v2987 = vld [vmem:[%s9 + $0x158] sm:$0xff]
        %v2988 = vld [vmem:[%s9 + $0x160] sm:$0xff]
        %v2989 = vld [vmem:[%s9 + $0x168] sm:$0xff]
        %v2990 = vld [vmem:[%s9 + $0x170] sm:$0xff]
        %v2991 = vld [vmem:[%s9 + $0x178] sm:$0xff]
        %v2992 = vld [vmem:[%s9 + $0x180] sm:$0xff]
        %v2993 = vld [vmem:[%s9 + $0x188] sm:$0xff]
        %v2994 = vld [vmem:[%s9 + $0x190] sm:$0xff]
        %v2995 = vld [vmem:[%s9 + $0x198] sm:$0xff]
        %v2996 = vld [vmem:[%s9 + $0x1a0] sm:$0xff]
        %v2997 = vld [vmem:[%s9 + $0x1a8] sm:$0xff]
        %v2998 = vld [vmem:[%s9 + $0x1b0] sm:$0xff]
        %v2999 = vld [vmem:[%s9 + $0x1b8] sm:$0xff]
        %v3000 = vld [vmem:[%s9 + $0x1c0] sm:$0xff]
        %v3001 = vld [vmem:[%s9 + $0x1c8] sm:$0xff]
        %v3002 = vld [vmem:[%s9 + $0x1d0] sm:$0xff]
        %v3003 = vld [vmem:[%s9 + $0x1d8] sm:$0xff]
        %v3004 = vld [vmem:[%s9 + $0x1e0] sm:$0xff]
        %v3005 = vld [vmem:[%s9 + $0x1e8] sm:$0xff]
        %v3006 = vld [vmem:[%s9 + $0x1f0] sm:$0xff]
        %v3007 = vld [vmem:[%s9 + $0x1f8] sm:$0xff]
        %v3008 = vld [vmem:[%s9 + $0x200] sm:$0xff]
        %v3009 = vld [vmem:[%s9 + $0x208] sm:$0xff]
        %v3010 = vld [vmem:[%s9 + $0x210] sm:$0xff]
        %v3011 = vld [vmem:[%s9 + $0x218] sm:$0xff]
        %v3012 = vld [vmem:[%s9 + $0x220] sm:$0xff]
        %v3013 = vld [vmem:[%s9 + $0x228] sm:$0xff]
        %v3014 = vld [vmem:[%s9 + $0x230] sm:$0xff]
        %v3015 = vld [vmem:[%s9 + $0x238] sm:$0xff]
        %3017 = vrot.lane.b32.xlu0 %v2871, 96
        %v3018 = vpop.permute.xlu0 %3017
        %3020 = vrot.lane.b32.xlu0 %v2871, 32
        %v3021 = vpop.permute.xlu0 %3020
        %v3023 = vsel %vm1064, %v3018, %v3021
        %v3024 = vsel %vm1064, %v3021, %v3018
        %v3027 = vrot.slane %v3023, 1
        %v3028 = vrot.slane %v3024, 1
        %v3031 = vrot.slane %v3023, 7
        %v3032 = vrot.slane %v3024, 7
        %v3035 = vrot.slane %v3023, 5
        %v3036 = vrot.slane %v3024, 5
        %v3039 = vsel %vm732, %v3027, %v3031
        %v3040 = vsel %vm732, %v3028, %v3032
        %v3041 = vsel %vm490, %v3039, %v3035
        %v3042 = vsel %vm490, %v3040, %v3036
        %v3045 = vrot.slane %v3041, 1
        %v3046 = vrot.slane %v3042, 1
        %3047 = vrot.lane.b32.xlu0 %v3045, 64
        %v3048 = vpop.permute.xlu0 %3047
        %3049 = vrot.lane.b32.xlu0 %v3046, 64
        %v3050 = vpop.permute.xlu0 %3049
        %v3051 = vsel %vm1275, %v3048, %v3050
        %v3054 = vrot.slane %v3041, 2
        %v3055 = vrot.slane %v3042, 2
        %v3057 = vsel %vm1275, %v3042, %v3048
        %v3058 = vsel %vm1275, %v3055, 0
        %3060 = vmatprep.subr.mxu0 0.0
        %3061 = vmatpush1.msra.mxu0 %v2887
        %3062 = vmatprep.subr.mxu0 0.0
        %3063 = vmatpush1.msra.mxu0 %v2886
        %3064 = vmatprep.subr.mxu0 0.0
        %3065 = vmatpush1.msra.mxu0 %v2885
        %3066 = vmatprep.subr.mxu0 0.0
        %3067 = vmatpush1.msra.mxu0 %v2884
        %3068 = vmatprep.subr.mxu0 0.0
        %3069 = vmatpush1.msra.mxu0 %v2883
        %3070 = vmatprep.subr.mxu0 0.0
        %3071 = vmatpush1.msra.mxu0 %v2882
        %3072 = vmatprep.subr.mxu0 0.0
        %3073 = vmatpush1.msra.mxu0 %v2881
        %3074 = vmatprep.subr.mxu0 0.0
        %3075 = vmatpush1.msra.mxu0 %v2880
        %3076 = vmatprep.subr.mxu0 0.0
        %3077 = vmatpush1.msra.mxu0 %v2879
        %3078 = vmatprep.subr.mxu0 0.0
        %3079 = vmatpush1.msra.mxu0 %v2878
        %3080 = vmatprep.subr.mxu0 0.0
        %3081 = vmatpush1.msra.mxu0 %v2877
        %3082 = vmatprep.subr.mxu0 0.0
        %3083 = vmatpush1.msra.mxu0 %v2876
        %3084 = vmatprep.subr.mxu0 0.0
        %3085 = vmatpush1.msra.mxu0 %v2875
        %3086 = vmatprep.subr.mxu0 0.0
        %3087 = vmatpush1.msra.mxu0 %v2874
        %3088 = vmatprep.subr.mxu0 0.0
        %3089 = vmatpush1.msra.mxu0 %v2873
        %3090 = vmatprep.subr.mxu0 0.0
        %3091 = vmatpush1.msra.mxu0 %v2872
        %3092 = vmatprep.subr.mxu0 0.0
        %3093 = vmatpush2.msra.mxu0 %v2903
        %3094 = vmatprep.subr.mxu0 0.0
        %3095 = vmatpush2.msra.mxu0 %v2902
        %3096 = vmatprep.subr.mxu0 0.0
        %3097 = vmatpush2.msra.mxu0 %v2901
        %3098 = vmatprep.subr.mxu0 0.0
        %3099 = vmatpush2.msra.mxu0 %v2900
        %3100 = vmatprep.subr.mxu0 0.0
        %3101 = vmatpush2.msra.mxu0 %v2899
        %3102 = vmatprep.subr.mxu0 0.0
        %3103 = vmatpush2.msra.mxu0 %v2898
        %3104 = vmatprep.subr.mxu0 0.0
        %3105 = vmatpush2.msra.mxu0 %v2897
        %3106 = vmatprep.subr.mxu0 0.0
        %3107 = vmatpush2.msra.mxu0 %v2896
        %3108 = vmatprep.subr.mxu0 0.0
        %3109 = vmatpush2.msra.mxu0 %v2895
        %3110 = vmatprep.subr.mxu0 0.0
        %3111 = vmatpush2.msra.mxu0 %v2894
        %3112 = vmatprep.subr.mxu0 0.0
        %3113 = vmatpush2.msra.mxu0 %v2893
        %3114 = vmatprep.subr.mxu0 0.0
        %3115 = vmatpush2.msra.mxu0 %v2892
        %3116 = vmatprep.subr.mxu0 0.0
        %3117 = vmatpush2.msra.mxu0 %v2891
        %3118 = vmatprep.subr.mxu0 0.0
        %3119 = vmatpush2.msra.mxu0 %v2890
        %3120 = vmatprep.subr.mxu0 0.0
        %3121 = vmatpush2.msra.mxu0 %v2889
        %3122 = vmatprep.subr.mxu0 0.0
        %3123 = vmatpush2.msra.mxu0 %v2888
        %3124 = vmatprep.mubr.f32.mxu0 %v3057
        %3125 = vmatmul.mubr.f32.gmra.mxu0 %v3041
        %v3126 = vpop.f32.mrf.mxu0
        %v3127 = vadd.f32 0.0, %v3126
        %v3128 = vpop.f32.mrf.mxu0
        %3129 = vdwg.mxu0
        %3130 = vmatprep.subr.mxu0 0.0
        %3131 = vmatpush1.msra.mxu0 %v2919
        %3132 = vmatprep.subr.mxu0 0.0
        %3133 = vmatpush1.msra.mxu0 %v2918
        %3134 = vmatprep.subr.mxu0 0.0
        %3135 = vmatpush1.msra.mxu0 %v2917
        %3136 = vmatprep.subr.mxu0 0.0
        %3137 = vmatpush1.msra.mxu0 %v2916
        %3138 = vmatprep.subr.mxu0 0.0
        %3139 = vmatpush1.msra.mxu0 %v2915
        %3140 = vmatprep.subr.mxu0 0.0
        %3141 = vmatpush1.msra.mxu0 %v2914
        %3142 = vmatprep.subr.mxu0 0.0
        %3143 = vmatpush1.msra.mxu0 %v2913
        %3144 = vmatprep.subr.mxu0 0.0
        %3145 = vmatpush1.msra.mxu0 %v2912
        %3146 = vmatprep.subr.mxu0 0.0
        %3147 = vmatpush1.msra.mxu0 %v2911
        %3148 = vmatprep.subr.mxu0 0.0
        %3149 = vmatpush1.msra.mxu0 %v2910
        %3150 = vmatprep.subr.mxu0 0.0
        %3151 = vmatpush1.msra.mxu0 %v2909
        %3152 = vmatprep.subr.mxu0 0.0
        %3153 = vmatpush1.msra.mxu0 %v2908
        %3154 = vmatprep.subr.mxu0 0.0
        %3155 = vmatpush1.msra.mxu0 %v2907
        %3156 = vmatprep.subr.mxu0 0.0
        %3157 = vmatpush1.msra.mxu0 %v2906
        %3158 = vmatprep.subr.mxu0 0.0
        %3159 = vmatpush1.msra.mxu0 %v2905
        %3160 = vmatprep.subr.mxu0 0.0
        %3161 = vmatpush1.msra.mxu0 %v2904
        %3162 = vmatprep.subr.mxu0 0.0
        %3163 = vmatpush2.msra.mxu0 %v2935
        %3164 = vmatprep.subr.mxu0 0.0
        %3165 = vmatpush2.msra.mxu0 %v2934
        %3166 = vmatprep.subr.mxu0 0.0
        %3167 = vmatpush2.msra.mxu0 %v2933
        %3168 = vmatprep.subr.mxu0 0.0
        %3169 = vmatpush2.msra.mxu0 %v2932
        %3170 = vmatprep.subr.mxu0 0.0
        %3171 = vmatpush2.msra.mxu0 %v2931
        %3172 = vmatprep.subr.mxu0 0.0
        %3173 = vmatpush2.msra.mxu0 %v2930
        %3174 = vmatprep.subr.mxu0 0.0
        %3175 = vmatpush2.msra.mxu0 %v2929
        %3176 = vmatprep.subr.mxu0 0.0
        %3177 = vmatpush2.msra.mxu0 %v2928
        %3178 = vmatprep.subr.mxu0 0.0
        %3179 = vmatpush2.msra.mxu0 %v2927
        %3180 = vmatprep.subr.mxu0 0.0
        %3181 = vmatpush2.msra.mxu0 %v2926
        %3182 = vmatprep.subr.mxu0 0.0
        %3183 = vmatpush2.msra.mxu0 %v2925
        %3184 = vmatprep.subr.mxu0 0.0
        %3185 = vmatpush2.msra.mxu0 %v2924
        %3186 = vmatprep.subr.mxu0 0.0
        %3187 = vmatpush2.msra.mxu0 %v2923
        %3188 = vmatprep.subr.mxu0 0.0
        %3189 = vmatpush2.msra.mxu0 %v2922
        %3190 = vmatprep.subr.mxu0 0.0
        %3191 = vmatpush2.msra.mxu0 %v2921
        %3192 = vmatprep.subr.mxu0 0.0
        %3193 = vmatpush2.msra.mxu0 %v2920
        %3194 = vmatprep.mubr.f32.mxu0 %v3054
        %3195 = vmatmul.mubr.f32.gmra.mxu0 %v3051
        %v3196 = vpop.f32.mrf.mxu0
        %v3197 = vadd.f32 %v3127, %v3196
        %v3198 = vpop.f32.mrf.mxu0
        %3199 = vdwg.mxu0
        %3200 = vmatprep.subr.mxu0 0.0
        %3201 = vmatpush1.msra.mxu0 0.0
        %3202 = vmatprep.subr.mxu0 0.0
        %3203 = vmatpush1.msra.mxu0 0.0
        %3204 = vmatprep.subr.mxu0 0.0
        %3205 = vmatpush1.msra.mxu0 0.0
        %3206 = vmatprep.subr.mxu0 0.0
        %3207 = vmatpush1.msra.mxu0 0.0
        %3208 = vmatprep.subr.mxu0 0.0
        %3209 = vmatpush1.msra.mxu0 0.0
        %3210 = vmatprep.subr.mxu0 0.0
        %3211 = vmatpush1.msra.mxu0 0.0
        %3212 = vmatprep.subr.mxu0 0.0
        %3213 = vmatpush1.msra.mxu0 0.0
        %3214 = vmatprep.subr.mxu0 0.0
        %3215 = vmatpush1.msra.mxu0 0.0
        %3216 = vmatprep.subr.mxu0 0.0
        %3217 = vmatpush1.msra.mxu0 %v2943
        %3218 = vmatprep.subr.mxu0 0.0
        %3219 = vmatpush1.msra.mxu0 %v2942
        %3220 = vmatprep.subr.mxu0 0.0
        %3221 = vmatpush1.msra.mxu0 %v2941
        %3222 = vmatprep.subr.mxu0 0.0
        %3223 = vmatpush1.msra.mxu0 %v2940
        %3224 = vmatprep.subr.mxu0 0.0
        %3225 = vmatpush1.msra.mxu0 %v2939
        %3226 = vmatprep.subr.mxu0 0.0
        %3227 = vmatpush1.msra.mxu0 %v2938
        %3228 = vmatprep.subr.mxu0 0.0
        %3229 = vmatpush1.msra.mxu0 %v2937
        %3230 = vmatprep.subr.mxu0 0.0
        %3231 = vmatpush1.msra.mxu0 %v2936
        %3232 = vmatprep.subr.mxu0 0.0
        %3233 = vmatpush2.msra.mxu0 0.0
        %3234 = vmatprep.subr.mxu0 0.0
        %3235 = vmatpush2.msra.mxu0 0.0
        %3236 = vmatprep.subr.mxu0 0.0
        %3237 = vmatpush2.msra.mxu0 0.0
        %3238 = vmatprep.subr.mxu0 0.0
        %3239 = vmatpush2.msra.mxu0 0.0
        %3240 = vmatprep.subr.mxu0 0.0
        %3241 = vmatpush2.msra.mxu0 0.0
        %3242 = vmatprep.subr.mxu0 0.0
        %3243 = vmatpush2.msra.mxu0 0.0
        %3244 = vmatprep.subr.mxu0 0.0
        %3245 = vmatpush2.msra.mxu0 0.0
        %3246 = vmatprep.subr.mxu0 0.0
        %3247 = vmatpush2.msra.mxu0 0.0
        %3248 = vmatprep.subr.mxu0 0.0
        %3249 = vmatpush2.msra.mxu0 0.0
        %3250 = vmatprep.subr.mxu0 0.0
        %3251 = vmatpush2.msra.mxu0 0.0
        %3252 = vmatprep.subr.mxu0 0.0
        %3253 = vmatpush2.msra.mxu0 0.0
        %3254 = vmatprep.subr.mxu0 0.0
        %3255 = vmatpush2.msra.mxu0 0.0
        %3256 = vmatprep.subr.mxu0 0.0
        %3257 = vmatpush2.msra.mxu0 0.0
        %3258 = vmatprep.subr.mxu0 0.0
        %3259 = vmatpush2.msra.mxu0 0.0
        %3260 = vmatprep.subr.mxu0 0.0
        %3261 = vmatpush2.msra.mxu0 0.0
        %3262 = vmatprep.subr.mxu0 0.0
        %3263 = vmatpush2.msra.mxu0 0.0
        %3264 = vmatprep.mubr.f32.mxu0 0.0
        %3265 = vmatmul.mubr.f32.gmra.mxu0 %v3058
        %v3266 = vpop.f32.mrf.mxu0
        %v3267 = vadd.f32 %v3197, %v3266
        %v3268 = vpop.f32.mrf.mxu0
        %3269 = vdwg.mxu0
        %v3270 = vsel %vm502, %v3267, 0.0
        %v3271 = vrot.slane %v3270, 4
        %v3272 = vadd.f32 %v3270, %v3271
        %v3273 = vrot.slane %v3272, 2
        %v3274 = vadd.f32 %v3272, %v3273
        %v3275 = vrot.slane %v3274, 1
        %v3276 = vadd.f32 %v3274, %v3275
        %3278 = vrot.lane.b32.xlu0 %v3276, 96
        %v3279 = vpop.permute.xlu0 %3278
        %v3281 = vadd.f32 %v3276, %v3279
        %3282 = vrot.lane.b32.xlu0 %v3276, 64
        %v3283 = vpop.permute.xlu0 %3282
        %v3285 = vadd.f32 %v3281, %v3283
        %3286 = vrot.lane.b32.xlu0 %v3276, 32
        %v3287 = vpop.permute.xlu0 %3286
        %v3289 = vadd.f32 %v3285, %v3287
        %v3290 = vmul.f32 %v3289, %v1927
        %3292 = vrot.lane.b32.xlu0 %v3290, 32
        %v3293 = vpop.permute.xlu0 %3292
        %3295 = vrot.lane.b32.xlu0 %v3290, 64
        %v3296 = vpop.permute.xlu0 %3295
        %3298 = vrot.lane.b32.xlu0 %v3290, 96
        %v3299 = vpop.permute.xlu0 %3298
        %v3301 = vsel %vm1064, %v3290, %v3293
        %v3302 = vsel %vm1275, %v3301, %v3296
        %v3303 = vsel %vm1279, %v3302, %v3299
        %v3304 = vlaneseq
        %v3305 = vshrl.u32 %v3304, 7
        %v3306 = vsub.s32 0, %v3305
        %v3307 = vrot.slane %v3303, %v3306
        %v3308 = vsub.f32 %v3267, %v3307
        %v3309 = vmul.f32 %v3308, %v3308
        %v3310 = vsel %vm502, %v3309, 0.0
        %v3311 = vrot.slane %v3310, 4
        %v3312 = vadd.f32 %v3310, %v3311
        %v3313 = vrot.slane %v3312, 2
        %v3314 = vadd.f32 %v3312, %v3313
        %v3315 = vrot.slane %v3314, 1
        %v3316 = vadd.f32 %v3314, %v3315
        %3318 = vrot.lane.b32.xlu0 %v3316, 96
        %v3319 = vpop.permute.xlu0 %3318
        %v3321 = vadd.f32 %v3316, %v3319
        %3322 = vrot.lane.b32.xlu0 %v3316, 64
        %v3323 = vpop.permute.xlu0 %3322
        %v3325 = vadd.f32 %v3321, %v3323
        %3326 = vrot.lane.b32.xlu0 %v3316, 32
        %v3327 = vpop.permute.xlu0 %3326
        %v3329 = vadd.f32 %v3325, %v3327
        %v3330 = vmul.f32 %v3329, %v1927
        %v3331 = vadd.f32 %v3330, 1e-05
        %v3332 = vrsqrt.pop %v3331
        %3334 = vrot.lane.b32.xlu0 %v3332, 32
        %v3335 = vpop.permute.xlu0 %3334
        %3337 = vrot.lane.b32.xlu0 %v3332, 64
        %v3338 = vpop.permute.xlu0 %3337
        %3340 = vrot.lane.b32.xlu0 %v3332, 96
        %v3341 = vpop.permute.xlu0 %3340
        %v3343 = vsel %vm1064, %v3332, %v3335
        %v3344 = vsel %vm1275, %v3343, %v3338
        %v3345 = vsel %vm1279, %v3344, %v3341
        %v3346 = vlaneseq
        %v3347 = vshrl.u32 %v3346, 7
        %v3348 = vsub.s32 0, %v3347
        %v3349 = vrot.slane %v3345, %v3348
        %v3350 = vmul.f32 %v3308, %v3349
        %v3351 = vmax.f32 %v3350, 0.0
        %3353 = vrot.lane.b32.xlu0 %v3351, 96
        %v3354 = vpop.permute.xlu0 %3353
        %3356 = vrot.lane.b32.xlu0 %v3351, 32
        %v3357 = vpop.permute.xlu0 %3356
        %v3359 = vsel %vm1064, %v3354, %v3357
        %v3360 = vsel %vm1064, %v3357, %v3354
        %v3363 = vrot.slane %v3359, 1
        %v3364 = vrot.slane %v3360, 1
        %v3367 = vrot.slane %v3359, 7
        %v3368 = vrot.slane %v3360, 7
        %v3371 = vrot.slane %v3359, 5
        %v3372 = vrot.slane %v3360, 5
        %v3375 = vsel %vm732, %v3363, %v3367
        %v3376 = vsel %vm732, %v3364, %v3368
        %v3377 = vsel %vm490, %v3375, %v3371
        %v3378 = vsel %vm490, %v3376, %v3372
        %v3381 = vrot.slane %v3377, 1
        %v3382 = vrot.slane %v3378, 1
        %3383 = vrot.lane.b32.xlu0 %v3381, 64
        %v3384 = vpop.permute.xlu0 %3383
        %3385 = vrot.lane.b32.xlu0 %v3382, 64
        %v3386 = vpop.permute.xlu0 %3385
        %v3387 = vsel %vm1275, %v3384, %v3386
        %v3390 = vrot.slane %v3377, 2
        %v3391 = vrot.slane %v3378, 2
        %v3393 = vsel %vm1275, %v3378, %v3384
        %v3394 = vsel %vm1275, %v3391, 0
        %3396 = vmatprep.subr.mxu0 0.0
        %3397 = vmatpush1.msra.mxu0 %v2959
        %3398 = vmatprep.subr.mxu0 0.0
        %3399 = vmatpush1.msra.mxu0 %v2958
        %3400 = vmatprep.subr.mxu0 0.0
        %3401 = vmatpush1.msra.mxu0 %v2957
        %3402 = vmatprep.subr.mxu0 0.0
        %3403 = vmatpush1.msra.mxu0 %v2956
        %3404 = vmatprep.subr.mxu0 0.0
        %3405 = vmatpush1.msra.mxu0 %v2955
        %3406 = vmatprep.subr.mxu0 0.0
        %3407 = vmatpush1.msra.mxu0 %v2954
        %3408 = vmatprep.subr.mxu0 0.0
        %3409 = vmatpush1.msra.mxu0 %v2953
        %3410 = vmatprep.subr.mxu0 0.0
        %3411 = vmatpush1.msra.mxu0 %v2952
        %3412 = vmatprep.subr.mxu0 0.0
        %3413 = vmatpush1.msra.mxu0 %v2951
        %3414 = vmatprep.subr.mxu0 0.0
        %3415 = vmatpush1.msra.mxu0 %v2950
        %3416 = vmatprep.subr.mxu0 0.0
        %3417 = vmatpush1.msra.mxu0 %v2949
        %3418 = vmatprep.subr.mxu0 0.0
        %3419 = vmatpush1.msra.mxu0 %v2948
        %3420 = vmatprep.subr.mxu0 0.0
        %3421 = vmatpush1.msra.mxu0 %v2947
        %3422 = vmatprep.subr.mxu0 0.0
        %3423 = vmatpush1.msra.mxu0 %v2946
        %3424 = vmatprep.subr.mxu0 0.0
        %3425 = vmatpush1.msra.mxu0 %v2945
        %3426 = vmatprep.subr.mxu0 0.0
        %3427 = vmatpush1.msra.mxu0 %v2944
        %3428 = vmatprep.subr.mxu0 0.0
        %3429 = vmatpush2.msra.mxu0 %v2975
        %3430 = vmatprep.subr.mxu0 0.0
        %3431 = vmatpush2.msra.mxu0 %v2974
        %3432 = vmatprep.subr.mxu0 0.0
        %3433 = vmatpush2.msra.mxu0 %v2973
        %3434 = vmatprep.subr.mxu0 0.0
        %3435 = vmatpush2.msra.mxu0 %v2972
        %3436 = vmatprep.subr.mxu0 0.0
        %3437 = vmatpush2.msra.mxu0 %v2971
        %3438 = vmatprep.subr.mxu0 0.0
        %3439 = vmatpush2.msra.mxu0 %v2970
        %3440 = vmatprep.subr.mxu0 0.0
        %3441 = vmatpush2.msra.mxu0 %v2969
        %3442 = vmatprep.subr.mxu0 0.0
        %3443 = vmatpush2.msra.mxu0 %v2968
        %3444 = vmatprep.subr.mxu0 0.0
        %3445 = vmatpush2.msra.mxu0 %v2967
        %3446 = vmatprep.subr.mxu0 0.0
        %3447 = vmatpush2.msra.mxu0 %v2966
        %3448 = vmatprep.subr.mxu0 0.0
        %3449 = vmatpush2.msra.mxu0 %v2965
        %3450 = vmatprep.subr.mxu0 0.0
        %3451 = vmatpush2.msra.mxu0 %v2964
        %3452 = vmatprep.subr.mxu0 0.0
        %3453 = vmatpush2.msra.mxu0 %v2963
        %3454 = vmatprep.subr.mxu0 0.0
        %3455 = vmatpush2.msra.mxu0 %v2962
        %3456 = vmatprep.subr.mxu0 0.0
        %3457 = vmatpush2.msra.mxu0 %v2961
        %3458 = vmatprep.subr.mxu0 0.0
        %3459 = vmatpush2.msra.mxu0 %v2960
        %3460 = vmatprep.mubr.f32.mxu0 %v3393
        %3461 = vmatmul.mubr.f32.gmra.mxu0 %v3377
        %v3462 = vpop.f32.mrf.mxu0
        %v3463 = vadd.f32 0.0, %v3462
        %v3464 = vpop.f32.mrf.mxu0
        %3465 = vdwg.mxu0
        %3466 = vmatprep.subr.mxu0 0.0
        %3467 = vmatpush1.msra.mxu0 %v2991
        %3468 = vmatprep.subr.mxu0 0.0
        %3469 = vmatpush1.msra.mxu0 %v2990
        %3470 = vmatprep.subr.mxu0 0.0
        %3471 = vmatpush1.msra.mxu0 %v2989
        %3472 = vmatprep.subr.mxu0 0.0
        %3473 = vmatpush1.msra.mxu0 %v2988
        %3474 = vmatprep.subr.mxu0 0.0
        %3475 = vmatpush1.msra.mxu0 %v2987
        %3476 = vmatprep.subr.mxu0 0.0
        %3477 = vmatpush1.msra.mxu0 %v2986
        %3478 = vmatprep.subr.mxu0 0.0
        %3479 = vmatpush1.msra.mxu0 %v2985
        %3480 = vmatprep.subr.mxu0 0.0
        %3481 = vmatpush1.msra.mxu0 %v2984
        %3482 = vmatprep.subr.mxu0 0.0
        %3483 = vmatpush1.msra.mxu0 %v2983
        %3484 = vmatprep.subr.mxu0 0.0
        %3485 = vmatpush1.msra.mxu0 %v2982
        %3486 = vmatprep.subr.mxu0 0.0
        %3487 = vmatpush1.msra.mxu0 %v2981
        %3488 = vmatprep.subr.mxu0 0.0
        %3489 = vmatpush1.msra.mxu0 %v2980
        %3490 = vmatprep.subr.mxu0 0.0
        %3491 = vmatpush1.msra.mxu0 %v2979
        %3492 = vmatprep.subr.mxu0 0.0
        %3493 = vmatpush1.msra.mxu0 %v2978
        %3494 = vmatprep.subr.mxu0 0.0
        %3495 = vmatpush1.msra.mxu0 %v2977
        %3496 = vmatprep.subr.mxu0 0.0
        %3497 = vmatpush1.msra.mxu0 %v2976
        %3498 = vmatprep.subr.mxu0 0.0
        %3499 = vmatpush2.msra.mxu0 %v3007
        %3500 = vmatprep.subr.mxu0 0.0
        %3501 = vmatpush2.msra.mxu0 %v3006
        %3502 = vmatprep.subr.mxu0 0.0
        %3503 = vmatpush2.msra.mxu0 %v3005
        %3504 = vmatprep.subr.mxu0 0.0
        %3505 = vmatpush2.msra.mxu0 %v3004
        %3506 = vmatprep.subr.mxu0 0.0
        %3507 = vmatpush2.msra.mxu0 %v3003
        %3508 = vmatprep.subr.mxu0 0.0
        %3509 = vmatpush2.msra.mxu0 %v3002
        %3510 = vmatprep.subr.mxu0 0.0
        %3511 = vmatpush2.msra.mxu0 %v3001
        %3512 = vmatprep.subr.mxu0 0.0
        %3513 = vmatpush2.msra.mxu0 %v3000
        %3514 = vmatprep.subr.mxu0 0.0
        %3515 = vmatpush2.msra.mxu0 %v2999
        %3516 = vmatprep.subr.mxu0 0.0
        %3517 = vmatpush2.msra.mxu0 %v2998
        %3518 = vmatprep.subr.mxu0 0.0
        %3519 = vmatpush2.msra.mxu0 %v2997
        %3520 = vmatprep.subr.mxu0 0.0
        %3521 = vmatpush2.msra.mxu0 %v2996
        %3522 = vmatprep.subr.mxu0 0.0
        %3523 = vmatpush2.msra.mxu0 %v2995
        %3524 = vmatprep.subr.mxu0 0.0
        %3525 = vmatpush2.msra.mxu0 %v2994
        %3526 = vmatprep.subr.mxu0 0.0
        %3527 = vmatpush2.msra.mxu0 %v2993
        %3528 = vmatprep.subr.mxu0 0.0
        %3529 = vmatpush2.msra.mxu0 %v2992
        %3530 = vmatprep.mubr.f32.mxu0 %v3390
        %3531 = vmatmul.mubr.f32.gmra.mxu0 %v3387
        %v3532 = vpop.f32.mrf.mxu0
        %v3533 = vadd.f32 %v3463, %v3532
        %v3534 = vpop.f32.mrf.mxu0
        %3535 = vdwg.mxu0
        %3536 = vmatprep.subr.mxu0 0.0
        %3537 = vmatpush1.msra.mxu0 0.0
        %3538 = vmatprep.subr.mxu0 0.0
        %3539 = vmatpush1.msra.mxu0 0.0
        %3540 = vmatprep.subr.mxu0 0.0
        %3541 = vmatpush1.msra.mxu0 0.0
        %3542 = vmatprep.subr.mxu0 0.0
        %3543 = vmatpush1.msra.mxu0 0.0
        %3544 = vmatprep.subr.mxu0 0.0
        %3545 = vmatpush1.msra.mxu0 0.0
        %3546 = vmatprep.subr.mxu0 0.0
        %3547 = vmatpush1.msra.mxu0 0.0
        %3548 = vmatprep.subr.mxu0 0.0
        %3549 = vmatpush1.msra.mxu0 0.0
        %3550 = vmatprep.subr.mxu0 0.0
        %3551 = vmatpush1.msra.mxu0 0.0
        %3552 = vmatprep.subr.mxu0 0.0
        %3553 = vmatpush1.msra.mxu0 %v3015
        %3554 = vmatprep.subr.mxu0 0.0
        %3555 = vmatpush1.msra.mxu0 %v3014
        %3556 = vmatprep.subr.mxu0 0.0
        %3557 = vmatpush1.msra.mxu0 %v3013
        %3558 = vmatprep.subr.mxu0 0.0
        %3559 = vmatpush1.msra.mxu0 %v3012
        %3560 = vmatprep.subr.mxu0 0.0
        %3561 = vmatpush1.msra.mxu0 %v3011
        %3562 = vmatprep.subr.mxu0 0.0
        %3563 = vmatpush1.msra.mxu0 %v3010
        %3564 = vmatprep.subr.mxu0 0.0
        %3565 = vmatpush1.msra.mxu0 %v3009
        %3566 = vmatprep.subr.mxu0 0.0
        %3567 = vmatpush1.msra.mxu0 %v3008
        %3568 = vmatprep.subr.mxu0 0.0
        %3569 = vmatpush2.msra.mxu0 0.0
        %3570 = vmatprep.subr.mxu0 0.0
        %3571 = vmatpush2.msra.mxu0 0.0
        %3572 = vmatprep.subr.mxu0 0.0
        %3573 = vmatpush2.msra.mxu0 0.0
        %3574 = vmatprep.subr.mxu0 0.0
        %3575 = vmatpush2.msra.mxu0 0.0
        %3576 = vmatprep.subr.mxu0 0.0
        %3577 = vmatpush2.msra.mxu0 0.0
        %3578 = vmatprep.subr.mxu0 0.0
        %3579 = vmatpush2.msra.mxu0 0.0
        %3580 = vmatprep.subr.mxu0 0.0
        %3581 = vmatpush2.msra.mxu0 0.0
        %3582 = vmatprep.subr.mxu0 0.0
        %3583 = vmatpush2.msra.mxu0 0.0
        %3584 = vmatprep.subr.mxu0 0.0
        %3585 = vmatpush2.msra.mxu0 0.0
        %3586 = vmatprep.subr.mxu0 0.0
        %3587 = vmatpush2.msra.mxu0 0.0
        %3588 = vmatprep.subr.mxu0 0.0
        %3589 = vmatpush2.msra.mxu0 0.0
        %3590 = vmatprep.subr.mxu0 0.0
        %3591 = vmatpush2.msra.mxu0 0.0
        %3592 = vmatprep.subr.mxu0 0.0
        %3593 = vmatpush2.msra.mxu0 0.0
        %3594 = vmatprep.subr.mxu0 0.0
        %3595 = vmatpush2.msra.mxu0 0.0
        %3596 = vmatprep.subr.mxu0 0.0
        %3597 = vmatpush2.msra.mxu0 0.0
        %3598 = vmatprep.subr.mxu0 0.0
        %3599 = vmatpush2.msra.mxu0 0.0
        %3600 = vmatprep.mubr.f32.mxu0 0.0
        %3601 = vmatmul.mubr.f32.gmra.mxu0 %v3394
        %v3602 = vpop.f32.mrf.mxu0
        %v3603 = vadd.f32 %v3533, %v3602
        %v3604 = vpop.f32.mrf.mxu0
        %3605 = vdwg.mxu0
        %v3606 = vsel %vm502, %v3603, 0.0
        %v3607 = vrot.slane %v3606, 4
        %v3608 = vadd.f32 %v3606, %v3607
        %v3609 = vrot.slane %v3608, 2
        %v3610 = vadd.f32 %v3608, %v3609
        %v3611 = vrot.slane %v3610, 1
        %v3612 = vadd.f32 %v3610, %v3611
        %3614 = vrot.lane.b32.xlu0 %v3612, 96
        %v3615 = vpop.permute.xlu0 %3614
        %v3617 = vadd.f32 %v3612, %v3615
        %3618 = vrot.lane.b32.xlu0 %v3612, 64
        %v3619 = vpop.permute.xlu0 %3618
        %v3621 = vadd.f32 %v3617, %v3619
        %3622 = vrot.lane.b32.xlu0 %v3612, 32
        %v3623 = vpop.permute.xlu0 %3622
        %v3625 = vadd.f32 %v3621, %v3623
        %v3626 = vmul.f32 %v3625, %v1927
        %3628 = vrot.lane.b32.xlu0 %v3626, 32
        %v3629 = vpop.permute.xlu0 %3628
        %3631 = vrot.lane.b32.xlu0 %v3626, 64
        %v3632 = vpop.permute.xlu0 %3631
        %3634 = vrot.lane.b32.xlu0 %v3626, 96
        %v3635 = vpop.permute.xlu0 %3634
        %v3637 = vsel %vm1064, %v3626, %v3629
        %v3638 = vsel %vm1275, %v3637, %v3632
        %v3639 = vsel %vm1279, %v3638, %v3635
        %v3640 = vlaneseq
        %v3641 = vshrl.u32 %v3640, 7
        %v3642 = vsub.s32 0, %v3641
        %v3643 = vrot.slane %v3639, %v3642
        %v3644 = vsub.f32 %v3603, %v3643
        %v3645 = vmul.f32 %v3644, %v3644
        %v3646 = vsel %vm502, %v3645, 0.0
        %v3647 = vrot.slane %v3646, 4
        %v3648 = vadd.f32 %v3646, %v3647
        %v3649 = vrot.slane %v3648, 2
        %v3650 = vadd.f32 %v3648, %v3649
        %v3651 = vrot.slane %v3650, 1
        %v3652 = vadd.f32 %v3650, %v3651
        %3654 = vrot.lane.b32.xlu0 %v3652, 96
        %v3655 = vpop.permute.xlu0 %3654
        %v3657 = vadd.f32 %v3652, %v3655
        %3658 = vrot.lane.b32.xlu0 %v3652, 64
        %v3659 = vpop.permute.xlu0 %3658
        %v3661 = vadd.f32 %v3657, %v3659
        %3662 = vrot.lane.b32.xlu0 %v3652, 32
        %v3663 = vpop.permute.xlu0 %3662
        %v3665 = vadd.f32 %v3661, %v3663
        %v3666 = vmul.f32 %v3665, %v1927
        %v3667 = vadd.f32 %v3666, 1e-05
        %v3668 = vrsqrt.pop %v3667
        %3670 = vrot.lane.b32.xlu0 %v3668, 32
        %v3671 = vpop.permute.xlu0 %3670
        %3673 = vrot.lane.b32.xlu0 %v3668, 64
        %v3674 = vpop.permute.xlu0 %3673
        %3676 = vrot.lane.b32.xlu0 %v3668, 96
        %v3677 = vpop.permute.xlu0 %3676
        %v3679 = vsel %vm1064, %v3668, %v3671
        %v3680 = vsel %vm1275, %v3679, %v3674
        %v3681 = vsel %vm1279, %v3680, %v3677
        %v3682 = vlaneseq
        %v3683 = vshrl.u32 %v3682, 7
        %v3684 = vsub.s32 0, %v3683
        %v3685 = vrot.slane %v3681, %v3684
        %v3686 = vmul.f32 %v3644, %v3685
        %v3687 = vadd.f32 %v2871, %v3686
        %3688 = vst [vmem:[%s401] sm:$0xf] %v3687
        %p3689 = scmp.lt.s32.totalorder %s23, 1
        %s3690 = scalar_select %p3689, %s23, 1
        %s3691 = smul.addr %s3690, 4
        %s3692 = scalar_lea.vmem %s10, %s3691
        // Predicated region
        $region73: #{gen_encoder_pallas.1} parent=59 // pred_check
          %p3693 = pneg %p256
        $region74: #{gen_encoder_pallas.1} parent=59 // pred_check_branch
          %3695 = sbr.rel (%p3693) target = $region76
        $region75: #{gen_encoder_pallas.1} parent=59 // pred_region
          _
        $region76: #{gen_encoder_pallas.1} parent=59 // pred_fallthru
          _
      $region60: #{gen_encoder_pallas.1} parent=5 // pred_fallthru
        _
      %p3696 = scmp.le.s32.totalorder 2, %s18
      // Predicated region
      $region77: #{gen_encoder_pallas.1} parent=5 // pred_check
        %p3697 = pneg %p3696
      $region78: #{gen_encoder_pallas.1} parent=5 // pred_check_branch
        %3699 = sbr.rel (%p3697) target = $region80
      $region79: #{gen_encoder_pallas.1} parent=5 // pred_region
        %s3700 = ssub.s32 %s18, 2
        // Predicated region
        $region81: #{gen_encoder_pallas.1} parent=79 // pred_check
          %p3701 = pneg %p262
        $region82: #{gen_encoder_pallas.1} parent=79 // pred_check_branch
          %3703 = sbr.rel (%p3701) target = $region84
        $region83: #{gen_encoder_pallas.1} parent=79 // pred_region
          %p3704 = scmp.lt.s32.totalorder %s24, 1
          %s3705 = scalar_select %p3704, %s24, 1
          %s3706 = smul.addr %s3705, 4
          %s3707 = scalar_lea.vmem %s10, %s3706
        $region84: #{gen_encoder_pallas.1} parent=79 // pred_fallthru
          _
      $region80: #{gen_encoder_pallas.1} parent=5 // pred_fallthru
        _
    $region6: #{gen_encoder_pallas.1} parent=1 // loop_footer
      %s22 = sadd.s32 1, %s18
    $region7: #{gen_encoder_pallas.1} parent=1 // loop_footer_branch
      %17 = sbr.rel target = $region3
    $region8: #{gen_encoder_pallas.1} parent=1 // loop_exit
      _
    %3708 = vsyncpa [#allocation3], 1
    %s3709 = scalar_lea.sflag [#allocation3], 1
    %3710 = vsyncpa %s3709, 1
    %3711 = vsyncpa [#allocation5], 1

</llo_original>
